<compile_context>
chip_gen: v6e
topology: v6e:2x2x1
jax: 0.10.0
libtpu: 0.0.40
codegen_flags: <defaults>
</compile_context>

<pallas_src>
import math

import jax
import jax.numpy as jnp
from jax.experimental import pallas as pl
from jax.experimental.pallas import tpu as pltpu


# -----------------------------------------------------------------------------
# In-kernel helpers (pure functions on values / refs inside the fused kernel)
# -----------------------------------------------------------------------------
def _layernorm(y, gamma, beta, eps=1e-5):
    mean = jnp.mean(y, axis=-1, keepdims=True)
    var = jnp.mean((y - mean) ** 2, axis=-1, keepdims=True)
    return (y - mean) * jax.lax.rsqrt(var + eps) * gamma + beta


def _mha_sublayer(x, kv, mask_add, keep, p_refs, *, n_heads):
    """Head-batched MHA + residual + post-LayerNorm, all in vregs/VMEM.

    x:  [T, D] f32 residual stream.   kv: [S, D] f32 key/value source.
    mask_add: additive mask broadcastable to [H, T, S] (or None).
    keep:     boolean keep-mask broadcastable to [H, T, S] (or None).
    Weights are head-major: wq/wk/wv [H, D, hd], wo [H, hd, D].
    """
    wq, wk, wv, wo, bq, bk, bv, bo, gamma, beta = p_refs
    T, D = x.shape
    S = kv.shape[0]
    H = n_heads
    hd = D // H
    scale = 1.0 / float(hd) ** 0.5

    # Cast activations to bf16 once and replicate along the head (batch) axis,
    # so every matmul below is a plain leading-batch-dim dot_general
    # (no transposes, no per-head lane slicing).
    xb = jnp.broadcast_to(x.astype(jnp.bfloat16)[None], (H, T, D))
    kvb = jnp.broadcast_to(kv.astype(jnp.bfloat16)[None], (H, S, D))

    q = jnp.einsum("htd,hdf->htf", xb, wq[...],
                   preferred_element_type=jnp.float32) + bq[...]
    k = jnp.einsum("hsd,hdf->hsf", kvb, wk[...],
                   preferred_element_type=jnp.float32) + bk[...]
    v = jnp.einsum("hsd,hdf->hsf", kvb, wv[...],
                   preferred_element_type=jnp.float32) + bv[...]
    q16 = q.astype(jnp.bfloat16)          # one cast per tensor (not per head)
    k16 = k.astype(jnp.bfloat16)
    v16 = v.astype(jnp.bfloat16)

    # [H, T, S] attention scores in f32.
    s = jnp.einsum("htf,hsf->hts", q16, k16,
                   preferred_element_type=jnp.float32) * scale
    if keep is not None:
        s = jnp.where(keep, s, -1e9)
    if mask_add is not None:
        s = s + mask_add
    s = s - jnp.max(s, axis=-1, keepdims=True)
    p = jnp.exp(s)
    p = p * pl.reciprocal(jnp.sum(p, axis=-1, keepdims=True), approx=True)

    # [H, T, hd] per-head context, then the output projection fused per head:
    #   proj = sum_h  o_h @ wo[h]   -- accumulated in vregs, no [T, D] scratch.
    o = jnp.einsum("hts,hsf->htf", p.astype(jnp.bfloat16), v16,
                   preferred_element_type=jnp.float32)
    per_head = jnp.einsum("htf,hfd->htd", o.astype(jnp.bfloat16), wo[...],
                          preferred_element_type=jnp.float32)
    proj = jnp.sum(per_head, axis=0) + bo[...]

    y = x + proj                          # dropout is identity in eval mode
    return _layernorm(y, gamma[...], beta[...])


def _ffn_sublayer(x, p_refs):
    # TODO(synk): at realistic D/Dff, tile Dff as a trailing "arbitrary" grid
    # axis with an f32 VMEM accumulator instead of keeping w1/w2 resident.
    w1, b1, w2, b2, gamma, beta = p_refs
    h = jnp.dot(x.astype(jnp.bfloat16), w1[...],
                preferred_element_type=jnp.float32) + b1[...]
    h = jnp.maximum(h, 0.0)
    ff = jnp.dot(h.astype(jnp.bfloat16), w2[...],
                 preferred_element_type=jnp.float32) + b2[...]
    y = x + ff                            # dropout is identity in eval mode
    return _layernorm(y, gamma[...], beta[...])


# -----------------------------------------------------------------------------
# Fused decoder-layer kernel (one batch element per grid step)
# -----------------------------------------------------------------------------
def _make_decoder_kernel(n_heads, self_mask_mode, enc_mask_mode):
    # self_mask_mode in {"causal","array","none"}; enc_mask_mode in {"array","none"}
    def kernel(*refs):
        refs = list(refs)
        o_ref = refs.pop()
        it = iter(refs)
        x_ref = next(it)
        st_ref = next(it)
        self_mask_ref = next(it) if self_mask_mode == "array" else None
        enc_mask_ref = next(it) if enc_mask_mode == "array" else None
        sa = [next(it) for _ in range(10)]
        ea = [next(it) for _ in range(10)]
        ff = [next(it) for _ in range(6)]

        x = x_ref[0]        # [T, D] residual stream -- stays on-chip all layer
        states = st_ref[0]  # [S, D]
        T = x.shape[0]

        if self_mask_mode == "causal":
            row = jax.lax.broadcasted_iota(jnp.int32, (T, T), 0)
            col = jax.lax.broadcasted_iota(jnp.int32, (T, T), 1)
            keep = row >= col               # generated on-chip; no mask DMA
            self_add = None
        else:
            keep = None
            self_add = (self_mask_ref[...].astype(jnp.float32)   # [1, T, T]
                        if self_mask_mode == "array" else None)
        enc_add = (enc_mask_ref[...].astype(jnp.float32)          # [1, T, S]
                   if enc_mask_mode == "array" else None)

        x = _mha_sublayer(x, x, self_add, keep, sa, n_heads=n_heads)
        x = _mha_sublayer(x, states, enc_add, None, ea, n_heads=n_heads)
        x = _ffn_sublayer(x, ff)
        o_ref[0] = x

    return kernel


# -----------------------------------------------------------------------------
# Wrapper
# -----------------------------------------------------------------------------
def _zero_map(nd):
    return lambda b, _nd=nd: (0,) * _nd


def _attn_kernel_params(p, n_heads):
    """PyTorch-layout attention params -> head-major kernel layout."""
    D = p["wq"].shape[0]
    hd = D // n_heads

    def wh(w):   # [D, D] -> [H, D, hd]  (output dim split head-major)
        return w.reshape(D, n_heads, hd).transpose(1, 0, 2)

    def bh(b):   # [1, D] -> [H, 1, hd]
        return b.reshape(n_heads, hd)[:, None, :]

    return [wh(p["wq"]), wh(p["wk"]), wh(p["wv"]),
            p["wo"].reshape(n_heads, hd, D),        # [H, hd, D]
            bh(p["bq"]), bh(p["bk"]), bh(p["bv"]),
            p["bo"], p["gamma"], p["beta"]]


def decoder_layer(x, states, self_mask, enc_mask, params, n_heads,
                  *, self_mask_is_causal=False):
    """Fused decoder layer.

    Masks are additive f32 arrays ([B,T,T] / [B,T,S]) or None.  If
    self_mask_is_causal=True the causal self-attention mask is generated
    in-kernel and self_mask MUST be None.  enc_mask=None skips the
    encoder-attention mask entirely.
    """
    if self_mask_is_causal and self_mask is not None:
        raise ValueError("pass self_mask=None when self_mask_is_causal=True")

    B, T, D = x.shape
    S = states.shape[1]
    self_mode = ("causal" if self_mask_is_causal
                 else "array" if self_mask is not None else "none")
    enc_mode = "array" if enc_mask is not None else "none"

    args, in_specs, blk_shapes = [], [], []

    def add(a, block_shape, index_map):
        args.append(a)
        in_specs.append(pl.BlockSpec(block_shape, index_map))
        blk_shapes.append((block_shape, a.dtype))

    add(x, (1, T, D), lambda b: (b, 0, 0))
    add(states, (1, S, D), lambda b: (b, 0, 0))
    if self_mode == "array":
        # bf16 additive mask blocks: half the DMA bytes of f32.
        add(self_mask.astype(jnp.bfloat16), (1, T, T), lambda b: (b, 0, 0))
    if enc_mode == "array":
        add(enc_mask.astype(jnp.bfloat16), (1, T, S), lambda b: (b, 0, 0))

    # Weights / biases / LN params: whole array per grid step.
    # TODO(synk): single-buffer these (pipeline_mode=pl.Buffered(1)) and block
    # w1/w2 along Dff once realistic sizes make VMEM residency tight (v7x 64MiB).
    for sub in ("self_attn", "enc_attn"):
        for a in _attn_kernel_params(params[sub], n_heads):
            add(a, a.shape, _zero_map(a.ndim))
    ffp = params["ff"]
    for a in (ffp["w1"], ffp["b1"], ffp["w2"], ffp["b2"],
              ffp["gamma"], ffp["beta"]):
        add(a, a.shape, _zero_map(a.ndim))

    # Explicit VMEM budget: double-buffered resident blocks + headroom.
    block_bytes = sum(math.prod(bs) * jnp.dtype(dt).itemsize
                      for bs, dt in blk_shapes)
    block_bytes += math.prod((1, T, D)) * 4           # output block (f32)
    vmem_limit = int(max(2 * block_bytes + (8 << 20), 32 << 20))

    kernel = _make_decoder_kernel(n_heads, self_mode, enc_mode)
    return pl.pallas_call(
        kernel,
        out_shape=jax.ShapeDtypeStruct((B, T, D), jnp.float32),
        grid=(B,),
        in_specs=in_specs,
        out_specs=pl.BlockSpec((1, T, D), lambda b: (b, 0, 0)),
        compiler_params=pltpu.CompilerParams(
            dimension_semantics=("parallel",),   # v7x: 2 TCs split the batch
            vmem_limit_bytes=vmem_limit),
    )(*args)


# -----------------------------------------------------------------------------
# Pure-JAX reference (f32 math, same bf16-rounded weights)
# -----------------------------------------------------------------------------
def _as_f32(p):
    return {k: v.astype(jnp.float32) for k, v in p.items()}


def _ref_attn(x, kv, mask, p, n_heads):
    p = _as_f32(p)
    B, T, D = x.shape
    hd = D // n_heads
    q = x @ p["wq"] + p["bq"]
    k = kv @ p["wk"] + p["bk"]
    v = kv @ p["wv"] + p["bv"]
    q = q.reshape(B, T, n_heads, hd).transpose(0, 2, 1, 3)
    k = k.reshape(B, -1, n_heads, hd).transpose(0, 2, 1, 3)
    v = v.reshape(B, -1, n_heads, hd).transpose(0, 2, 1, 3)
    s = jnp.einsum("bhtd,bhsd->bhts", q, k) / jnp.sqrt(jnp.float32(hd)) + mask[:, None]
    a = jax.nn.softmax(s, axis=-1)
    o = jnp.einsum("bhts,bhsd->bhtd", a, v).transpose(0, 2, 1, 3).reshape(B, T, D)
    y = x + (o @ p["wo"] + p["bo"])
    return _layernorm(y, p["gamma"], p["beta"])


def _ref_ff(x, p):
    p = _as_f32(p)
    h = jnp.maximum(x @ p["w1"] + p["b1"], 0.0)
    y = x + (h @ p["w2"] + p["b2"])
    return _layernorm(y, p["gamma"], p["beta"])


def _ref_decoder(inp, states, sm, em, params, n_heads):
    x = _ref_attn(inp, inp, sm, params["self_attn"], n_heads)
    x = _ref_attn(x, states, em, params["enc_attn"], n_heads)
    return _ref_ff(x, params["ff"])


# -----------------------------------------------------------------------------
# Param init (weights stored in bf16, biases / LN params in f32)
# -----------------------------------------------------------------------------
def _init_attn_params(key, D):
    ks = jax.random.split(key, 4)
    scale = 0.05
    w = lambda k: (scale * jax.random.normal(k, (D, D), jnp.float32)).astype(jnp.bfloat16)
    return {
        "wq": w(ks[0]), "wk": w(ks[1]), "wv": w(ks[2]), "wo": w(ks[3]),
        "bq": jnp.zeros((1, D), jnp.float32),
        "bk": jnp.zeros((1, D), jnp.float32),
        "bv": jnp.zeros((1, D), jnp.float32),
        "bo": jnp.zeros((1, D), jnp.float32),
        "gamma": jnp.ones((1, D), jnp.float32),
        "beta": jnp.zeros((1, D), jnp.float32),
    }


def _init_ff_params(key, D, Dff):
    k1, k2 = jax.random.split(key)
    scale = 0.05
    return {
        "w1": (scale * jax.random.normal(k1, (D, Dff), jnp.float32)).astype(jnp.bfloat16),
        "b1": jnp.zeros((1, Dff), jnp.float32),
        "w2": (scale * jax.random.normal(k2, (Dff, D), jnp.float32)).astype(jnp.bfloat16),
        "b2": jnp.zeros((1, D), jnp.float32),
        "gamma": jnp.ones((1, D), jnp.float32),
        "beta": jnp.zeros((1, D), jnp.float32),
    }


# -----------------------------------------------------------------------------
# Main
# -----------------------------------------------------------------------------
if __name__ == "__main__":
    B, T, S, H = 2, 8, 8, 4     # batch, tgt seq, src seq, heads
    D = 128                     # model size: lane-dense (128-lane) residual/writeback
    Dff = 4 * D

    root = jax.random.PRNGKey(0)
    k_in, k_st, k_sa, k_ea, k_ff = jax.random.split(root, 5)

    x = jax.random.normal(k_in, (B, T, D), jnp.float32)        # decoder input
    states = jax.random.normal(k_st, (B, S, D), jnp.float32)   # encoder states

    # causal additive self-attention mask, zero encoder mask (reference path)
    causal = jnp.where(
        jnp.arange(T)[:, None] >= jnp.arange(T)[None, :], 0.0, -1e9
    ).astype(jnp.float32)
    self_mask = jnp.broadcast_to(causal, (B, T, T))
    enc_mask = jnp.zeros((B, T, S), jnp.float32)

    params = {
        "self_attn": _init_attn_params(k_sa, D),
        "enc_attn": _init_attn_params(k_ea, D),
        "ff": _init_ff_params(k_ff, D, Dff),
    }

    # Optimized path: causal mask generated in-kernel, zero enc mask skipped.
    out_fast = decoder_layer(x, states, None, None, params, H,
                             self_mask_is_causal=True)
    out_fast = jax.block_until_ready(out_fast)

    # General path: arbitrary additive mask arrays (full module semantics).
    out_general = decoder_layer(x, states, self_mask, enc_mask, params, H)
    out_general = jax.block_until_ready(out_general)

    ref = _ref_decoder(x, states, self_mask, enc_mask, params, H)

    assert out_fast.shape == (B, T, D)
    assert out_general.shape == (B, T, D)
    # bf16 matmul operands (f32 accumulation) + approx reciprocal -> loosened tol.
    assert jnp.allclose(out_fast, ref, rtol=3e-2, atol=3e-2), \
        "fused kernel (in-kernel causal mask) mismatch vs. pure-JAX reference"
    assert jnp.allclose(out_general, ref, rtol=3e-2, atol=3e-2), \
        "fused kernel (array masks) mismatch vs. pure-JAX reference"

    print("KERNEL_OK")
</pallas_src>

<mosaic_0001>
module attributes {stable_mosaic.version = 11 : i64} {
  func.func @kernel(%arg0: i32, %arg1: memref<1x8x128xf32, #tpu.memory_space<vmem>>, %arg2: memref<1x8x128xf32, #tpu.memory_space<vmem>>, %arg3: memref<4x128x32xbf16, #tpu.memory_space<vmem>>, %arg4: memref<4x128x32xbf16, #tpu.memory_space<vmem>>, %arg5: memref<4x128x32xbf16, #tpu.memory_space<vmem>>, %arg6: memref<4x32x128xbf16, #tpu.memory_space<vmem>>, %arg7: memref<4x1x32xf32, #tpu.memory_space<vmem>>, %arg8: memref<4x1x32xf32, #tpu.memory_space<vmem>>, %arg9: memref<4x1x32xf32, #tpu.memory_space<vmem>>, %arg10: memref<1x128xf32, #tpu.memory_space<vmem>>, %arg11: memref<1x128xf32, #tpu.memory_space<vmem>>, %arg12: memref<1x128xf32, #tpu.memory_space<vmem>>, %arg13: memref<4x128x32xbf16, #tpu.memory_space<vmem>>, %arg14: memref<4x128x32xbf16, #tpu.memory_space<vmem>>, %arg15: memref<4x128x32xbf16, #tpu.memory_space<vmem>>, %arg16: memref<4x32x128xbf16, #tpu.memory_space<vmem>>, %arg17: memref<4x1x32xf32, #tpu.memory_space<vmem>>, %arg18: memref<4x1x32xf32, #tpu.memory_space<vmem>>, %arg19: memref<4x1x32xf32, #tpu.memory_space<vmem>>, %arg20: memref<1x128xf32, #tpu.memory_space<vmem>>, %arg21: memref<1x128xf32, #tpu.memory_space<vmem>>, %arg22: memref<1x128xf32, #tpu.memory_space<vmem>>, %arg23: memref<128x512xbf16, #tpu.memory_space<vmem>>, %arg24: memref<1x512xf32, #tpu.memory_space<vmem>>, %arg25: memref<512x128xbf16, #tpu.memory_space<vmem>>, %arg26: memref<1x128xf32, #tpu.memory_space<vmem>>, %arg27: memref<1x128xf32, #tpu.memory_space<vmem>>, %arg28: memref<1x128xf32, #tpu.memory_space<vmem>>, %arg29: memref<1x8x128xf32, #tpu.memory_space<vmem>>) attributes {dimension_semantics = [#tpu.dimension_semantics<parallel>], iteration_bounds = array<i64: 2>, scalar_prefetch = 0 : i64, scratch_operands = 0 : i64, tpu.core_type = #tpu.core_type<tc>, window_params = [{transform_indices = @transform_0, window_bounds = array<i64: 1, 8, 128>}, {transform_indices = @transform_1, window_bounds = array<i64: 1, 8, 128>}, {pipeline_mode = #tpu.pipeline_mode<synchronous>, transform_indices = @transform_2, window_bounds = array<i64: 4, 128, 32>}, {pipeline_mode = #tpu.pipeline_mode<synchronous>, transform_indices = @transform_3, window_bounds = array<i64: 4, 128, 32>}, {pipeline_mode = #tpu.pipeline_mode<synchronous>, transform_indices = @transform_4, window_bounds = array<i64: 4, 128, 32>}, {pipeline_mode = #tpu.pipeline_mode<synchronous>, transform_indices = @transform_5, window_bounds = array<i64: 4, 32, 128>}, {pipeline_mode = #tpu.pipeline_mode<synchronous>, transform_indices = @transform_6, window_bounds = array<i64: 4, 1, 32>}, {pipeline_mode = #tpu.pipeline_mode<synchronous>, transform_indices = @transform_7, window_bounds = array<i64: 4, 1, 32>}, {pipeline_mode = #tpu.pipeline_mode<synchronous>, transform_indices = @transform_8, window_bounds = array<i64: 4, 1, 32>}, {pipeline_mode = #tpu.pipeline_mode<synchronous>, transform_indices = @transform_9, window_bounds = array<i64: 1, 128>}, {pipeline_mode = #tpu.pipeline_mode<synchronous>, transform_indices = @transform_10, window_bounds = array<i64: 1, 128>}, {pipeline_mode = #tpu.pipeline_mode<synchronous>, transform_indices = @transform_11, window_bounds = array<i64: 1, 128>}, {pipeline_mode = #tpu.pipeline_mode<synchronous>, transform_indices = @transform_12, window_bounds = array<i64: 4, 128, 32>}, {pipeline_mode = #tpu.pipeline_mode<synchronous>, transform_indices = @transform_13, window_bounds = array<i64: 4, 128, 32>}, {pipeline_mode = #tpu.pipeline_mode<synchronous>, transform_indices = @transform_14, window_bounds = array<i64: 4, 128, 32>}, {pipeline_mode = #tpu.pipeline_mode<synchronous>, transform_indices = @transform_15, window_bounds = array<i64: 4, 32, 128>}, {pipeline_mode = #tpu.pipeline_mode<synchronous>, transform_indices = @transform_16, window_bounds = array<i64: 4, 1, 32>}, {pipeline_mode = #tpu.pipeline_mode<synchronous>, transform_indices = @transform_17, window_bounds = array<i64: 4, 1, 32>}, {pipeline_mode = #tpu.pipeline_mode<synchronous>, transform_indices = @transform_18, window_bounds = array<i64: 4, 1, 32>}, {pipeline_mode = #tpu.pipeline_mode<synchronous>, transform_indices = @transform_19, window_bounds = array<i64: 1, 128>}, {pipeline_mode = #tpu.pipeline_mode<synchronous>, transform_indices = @transform_20, window_bounds = array<i64: 1, 128>}, {pipeline_mode = #tpu.pipeline_mode<synchronous>, transform_indices = @transform_21, window_bounds = array<i64: 1, 128>}, {pipeline_mode = #tpu.pipeline_mode<synchronous>, transform_indices = @transform_22, window_bounds = array<i64: 128, 512>}, {pipeline_mode = #tpu.pipeline_mode<synchronous>, transform_indices = @transform_23, window_bounds = array<i64: 1, 512>}, {pipeline_mode = #tpu.pipeline_mode<synchronous>, transform_indices = @transform_24, window_bounds = array<i64: 512, 128>}, {pipeline_mode = #tpu.pipeline_mode<synchronous>, transform_indices = @transform_25, window_bounds = array<i64: 1, 128>}, {pipeline_mode = #tpu.pipeline_mode<synchronous>, transform_indices = @transform_26, window_bounds = array<i64: 1, 128>}, {pipeline_mode = #tpu.pipeline_mode<synchronous>, transform_indices = @transform_27, window_bounds = array<i64: 1, 128>}, {transform_indices = @transform_28, window_bounds = array<i64: 1, 8, 128>}]} {
    %c0 = arith.constant 0 : index
    %c0_0 = arith.constant 0 : index
    %c0_1 = arith.constant 0 : index
    %0 = vector.load %arg1[%c0, %c0_0, %c0_1] : memref<1x8x128xf32, #tpu.memory_space<vmem>>, vector<1x8x128xf32>
    %1 = vector.shape_cast %0 : vector<1x8x128xf32> to vector<8x128xf32>
    %c0_2 = arith.constant 0 : index
    %c0_3 = arith.constant 0 : index
    %c0_4 = arith.constant 0 : index
    %2 = vector.load %arg2[%c0_2, %c0_3, %c0_4] : memref<1x8x128xf32, #tpu.memory_space<vmem>>, vector<1x8x128xf32>
    %3 = vector.shape_cast %2 : vector<1x8x128xf32> to vector<8x128xf32>
    %4 = tpu.iota {dimensions = array<i32: 0>} : vector<8x8xi32>
    %5 = tpu.iota {dimensions = array<i32: 1>} : vector<8x8xi32>
    %6 = arith.cmpi sge, %4, %5 : vector<8x8xi32>
    %7 = arith.truncf %1 : vector<8x128xf32> to vector<8x128xbf16>
    %8 = vector.shape_cast %7 : vector<8x128xbf16> to vector<1x8x128xbf16>
    %9 = vector.shape_cast %8 : vector<1x8x128xbf16> to vector<1x8x128xbf16>
    %10 = vector.broadcast %9 : vector<1x8x128xbf16> to vector<4x8x128xbf16>
    %11 = arith.truncf %1 : vector<8x128xf32> to vector<8x128xbf16>
    %12 = vector.shape_cast %11 : vector<8x128xbf16> to vector<1x8x128xbf16>
    %13 = vector.shape_cast %12 : vector<1x8x128xbf16> to vector<1x8x128xbf16>
    %14 = vector.broadcast %13 : vector<1x8x128xbf16> to vector<4x8x128xbf16>
    %c0_5 = arith.constant 0 : index
    %c0_6 = arith.constant 0 : index
    %c0_7 = arith.constant 0 : index
    %15 = vector.load %arg3[%c0_5, %c0_6, %c0_7] : memref<4x128x32xbf16, #tpu.memory_space<vmem>>, vector<4x128x32xbf16>
    "tpu.trace_start"() <{level = 10 : i32, message = "htd,hdf->htf"}> : () -> ()
    %cst = arith.constant dense<0.000000e+00> : vector<4x8x32xf32>
    %16 = tpu.matmul %10, %15, %cst {dimension_numbers = #tpu.dot_dimension_numbers<[2], [1], [1], [2], [0, 0, 0, 1, 1, 2], [0], [0]>} : vector<4x8x128xbf16>, vector<4x128x32xbf16>, vector<4x8x32xf32> -> vector<4x8x32xf32>
    "tpu.trace_stop"() : () -> ()
    %c0_8 = arith.constant 0 : index
    %c0_9 = arith.constant 0 : index
    %c0_10 = arith.constant 0 : index
    %17 = vector.load %arg7[%c0_8, %c0_9, %c0_10] : memref<4x1x32xf32, #tpu.memory_space<vmem>>, vector<4x1x32xf32>
    %18 = vector.broadcast %17 : vector<4x1x32xf32> to vector<4x8x32xf32>
    %19 = arith.addf %16, %18 : vector<4x8x32xf32>
    %c0_11 = arith.constant 0 : index
    %c0_12 = arith.constant 0 : index
    %c0_13 = arith.constant 0 : index
    %20 = vector.load %arg4[%c0_11, %c0_12, %c0_13] : memref<4x128x32xbf16, #tpu.memory_space<vmem>>, vector<4x128x32xbf16>
    "tpu.trace_start"() <{level = 10 : i32, message = "hsd,hdf->hsf"}> : () -> ()
    %cst_14 = arith.constant dense<0.000000e+00> : vector<4x8x32xf32>
    %21 = tpu.matmul %14, %20, %cst_14 {dimension_numbers = #tpu.dot_dimension_numbers<[2], [1], [1], [2], [0, 0, 0, 1, 1, 2], [0], [0]>} : vector<4x8x128xbf16>, vector<4x128x32xbf16>, vector<4x8x32xf32> -> vector<4x8x32xf32>
    "tpu.trace_stop"() : () -> ()
    %c0_15 = arith.constant 0 : index
    %c0_16 = arith.constant 0 : index
    %c0_17 = arith.constant 0 : index
    %22 = vector.load %arg8[%c0_15, %c0_16, %c0_17] : memref<4x1x32xf32, #tpu.memory_space<vmem>>, vector<4x1x32xf32>
    %23 = vector.broadcast %22 : vector<4x1x32xf32> to vector<4x8x32xf32>
    %24 = arith.addf %21, %23 : vector<4x8x32xf32>
    %c0_18 = arith.constant 0 : index
    %c0_19 = arith.constant 0 : index
    %c0_20 = arith.constant 0 : index
    %25 = vector.load %arg5[%c0_18, %c0_19, %c0_20] : memref<4x128x32xbf16, #tpu.memory_space<vmem>>, vector<4x128x32xbf16>
    "tpu.trace_start"() <{level = 10 : i32, message = "hsd,hdf->hsf"}> : () -> ()
    %cst_21 = arith.constant dense<0.000000e+00> : vector<4x8x32xf32>
    %26 = tpu.matmul %14, %25, %cst_21 {dimension_numbers = #tpu.dot_dimension_numbers<[2], [1], [1], [2], [0, 0, 0, 1, 1, 2], [0], [0]>} : vector<4x8x128xbf16>, vector<4x128x32xbf16>, vector<4x8x32xf32> -> vector<4x8x32xf32>
    "tpu.trace_stop"() : () -> ()
    %c0_22 = arith.constant 0 : index
    %c0_23 = arith.constant 0 : index
    %c0_24 = arith.constant 0 : index
    %27 = vector.load %arg9[%c0_22, %c0_23, %c0_24] : memref<4x1x32xf32, #tpu.memory_space<vmem>>, vector<4x1x32xf32>
    %28 = vector.broadcast %27 : vector<4x1x32xf32> to vector<4x8x32xf32>
    %29 = arith.addf %26, %28 : vector<4x8x32xf32>
    %30 = arith.truncf %19 : vector<4x8x32xf32> to vector<4x8x32xbf16>
    %31 = arith.truncf %24 : vector<4x8x32xf32> to vector<4x8x32xbf16>
    %32 = arith.truncf %29 : vector<4x8x32xf32> to vector<4x8x32xbf16>
    "tpu.trace_start"() <{level = 10 : i32, message = "htf,hsf->hts"}> : () -> ()
    %cst_25 = arith.constant dense<0.000000e+00> : vector<4x8x8xf32>
    %33 = tpu.matmul %30, %31, %cst_25 {dimension_numbers = #tpu.dot_dimension_numbers<[2], [2], [1], [1], [0, 0, 0, 1, 1, 1], [0], [0]>} : vector<4x8x32xbf16>, vector<4x8x32xbf16>, vector<4x8x8xf32> -> vector<4x8x8xf32>
    "tpu.trace_stop"() : () -> ()
    %cst_26 = arith.constant 0.176776692 : f32
    %34 = vector.broadcast %cst_26 : f32 to vector<4x8x8xf32>
    %35 = arith.mulf %33, %34 : vector<4x8x8xf32>
    %cst_27 = arith.constant -1.000000e+09 : f32
    %36 = vector.shape_cast %6 : vector<8x8xi1> to vector<1x8x8xi1>
    %37 = vector.broadcast %36 : vector<1x8x8xi1> to vector<4x8x8xi1>
    %38 = vector.broadcast %cst_27 : f32 to vector<4x8x8xf32>
    %39 = arith.select %37, %35, %38 : vector<4x8x8xi1>, vector<4x8x8xf32>
    %cst_28 = arith.constant dense<0xFF800000> : vector<4x8xf32>
    %40 = vector.multi_reduction <maximumf>, %39, %cst_28 [2] : vector<4x8x8xf32> to vector<4x8xf32>
    %41 = vector.shape_cast %40 : vector<4x8xf32> to vector<4x8x1xf32>
    %42 = vector.broadcast %41 : vector<4x8x1xf32> to vector<4x8x8xf32>
    %43 = arith.subf %39, %42 : vector<4x8x8xf32>
    %44 = math.exp %43 : vector<4x8x8xf32>
    %cst_29 = arith.constant dense<0.000000e+00> : vector<4x8xf32>
    %45 = vector.multi_reduction <add>, %44, %cst_29 [2] : vector<4x8x8xf32> to vector<4x8xf32>
    %46 = vector.shape_cast %45 : vector<4x8xf32> to vector<4x8x1xf32>
    %47 = tpu.reciprocal %46 {approx = true} : vector<4x8x1xf32> -> vector<4x8x1xf32>
    %48 = vector.broadcast %47 : vector<4x8x1xf32> to vector<4x8x8xf32>
    %49 = arith.mulf %44, %48 : vector<4x8x8xf32>
    %50 = arith.truncf %49 : vector<4x8x8xf32> to vector<4x8x8xbf16>
    "tpu.trace_start"() <{level = 10 : i32, message = "hts,hsf->htf"}> : () -> ()
    %cst_30 = arith.constant dense<0.000000e+00> : vector<4x8x32xf32>
    %51 = tpu.matmul %50, %32, %cst_30 {dimension_numbers = #tpu.dot_dimension_numbers<[2], [1], [1], [2], [0, 0, 0, 1, 1, 2], [0], [0]>} : vector<4x8x8xbf16>, vector<4x8x32xbf16>, vector<4x8x32xf32> -> vector<4x8x32xf32>
    "tpu.trace_stop"() : () -> ()
    %52 = arith.truncf %51 : vector<4x8x32xf32> to vector<4x8x32xbf16>
    %c0_31 = arith.constant 0 : index
    %c0_32 = arith.constant 0 : index
    %c0_33 = arith.constant 0 : index
    %53 = vector.load %arg6[%c0_31, %c0_32, %c0_33] : memref<4x32x128xbf16, #tpu.memory_space<vmem>>, vector<4x32x128xbf16>
    "tpu.trace_start"() <{level = 10 : i32, message = "htf,hfd->htd"}> : () -> ()
    %cst_34 = arith.constant dense<0.000000e+00> : vector<4x8x128xf32>
    %54 = tpu.matmul %52, %53, %cst_34 {dimension_numbers = #tpu.dot_dimension_numbers<[2], [1], [1], [2], [0, 0, 0, 1, 1, 2], [0], [0]>} : vector<4x8x32xbf16>, vector<4x32x128xbf16>, vector<4x8x128xf32> -> vector<4x8x128xf32>
    "tpu.trace_stop"() : () -> ()
    %cst_35 = arith.constant dense<0.000000e+00> : vector<8x128xf32>
    %55 = vector.multi_reduction <add>, %54, %cst_35 [0] : vector<4x8x128xf32> to vector<8x128xf32>
    %c0_36 = arith.constant 0 : index
    %c0_37 = arith.constant 0 : index
    %56 = vector.load %arg10[%c0_36, %c0_37] : memref<1x128xf32, #tpu.memory_space<vmem>>, vector<1x128xf32>
    %57 = vector.broadcast %56 : vector<1x128xf32> to vector<8x128xf32>
    %58 = arith.addf %55, %57 : vector<8x128xf32>
    %59 = arith.addf %1, %58 : vector<8x128xf32>
    %c0_38 = arith.constant 0 : index
    %c0_39 = arith.constant 0 : index
    %60 = vector.load %arg11[%c0_38, %c0_39] : memref<1x128xf32, #tpu.memory_space<vmem>>, vector<1x128xf32>
    %c0_40 = arith.constant 0 : index
    %c0_41 = arith.constant 0 : index
    %61 = vector.load %arg12[%c0_40, %c0_41] : memref<1x128xf32, #tpu.memory_space<vmem>>, vector<1x128xf32>
    %cst_42 = arith.constant dense<0.000000e+00> : vector<8xf32>
    %62 = vector.multi_reduction <add>, %59, %cst_42 [1] : vector<8x128xf32> to vector<8xf32>
    %63 = vector.shape_cast %62 : vector<8xf32> to vector<8x1xf32>
    %cst_43 = arith.constant 1.280000e+02 : f32
    %64 = vector.broadcast %cst_43 : f32 to vector<8x1xf32>
    %65 = arith.divf %63, %64 : vector<8x1xf32>
    %66 = vector.broadcast %65 : vector<8x1xf32> to vector<8x128xf32>
    %67 = arith.subf %59, %66 : vector<8x128xf32>
    %68 = arith.mulf %67, %67 : vector<8x128xf32>
    %cst_44 = arith.constant dense<0.000000e+00> : vector<8xf32>
    %69 = vector.multi_reduction <add>, %68, %cst_44 [1] : vector<8x128xf32> to vector<8xf32>
    %70 = vector.shape_cast %69 : vector<8xf32> to vector<8x1xf32>
    %cst_45 = arith.constant 1.280000e+02 : f32
    %71 = vector.broadcast %cst_45 : f32 to vector<8x1xf32>
    %72 = arith.divf %70, %71 : vector<8x1xf32>
    %73 = vector.broadcast %65 : vector<8x1xf32> to vector<8x128xf32>
    %74 = arith.subf %59, %73 : vector<8x128xf32>
    %cst_46 = arith.constant 9.99999974E-6 : f32
    %75 = vector.broadcast %cst_46 : f32 to vector<8x1xf32>
    %76 = arith.addf %72, %75 : vector<8x1xf32>
    %77 = math.rsqrt %76 : vector<8x1xf32>
    %78 = vector.broadcast %77 : vector<8x1xf32> to vector<8x128xf32>
    %79 = arith.mulf %74, %78 : vector<8x128xf32>
    %80 = vector.broadcast %60 : vector<1x128xf32> to vector<8x128xf32>
    %81 = arith.mulf %79, %80 : vector<8x128xf32>
    %82 = vector.broadcast %61 : vector<1x128xf32> to vector<8x128xf32>
    %83 = arith.addf %81, %82 : vector<8x128xf32>
    %84 = arith.truncf %83 : vector<8x128xf32> to vector<8x128xbf16>
    %85 = vector.shape_cast %84 : vector<8x128xbf16> to vector<1x8x128xbf16>
    %86 = vector.shape_cast %85 : vector<1x8x128xbf16> to vector<1x8x128xbf16>
    %87 = vector.broadcast %86 : vector<1x8x128xbf16> to vector<4x8x128xbf16>
    %88 = arith.truncf %3 : vector<8x128xf32> to vector<8x128xbf16>
    %89 = vector.shape_cast %88 : vector<8x128xbf16> to vector<1x8x128xbf16>
    %90 = vector.shape_cast %89 : vector<1x8x128xbf16> to vector<1x8x128xbf16>
    %91 = vector.broadcast %90 : vector<1x8x128xbf16> to vector<4x8x128xbf16>
    %c0_47 = arith.constant 0 : index
    %c0_48 = arith.constant 0 : index
    %c0_49 = arith.constant 0 : index
    %92 = vector.load %arg13[%c0_47, %c0_48, %c0_49] : memref<4x128x32xbf16, #tpu.memory_space<vmem>>, vector<4x128x32xbf16>
    "tpu.trace_start"() <{level = 10 : i32, message = "htd,hdf->htf"}> : () -> ()
    %cst_50 = arith.constant dense<0.000000e+00> : vector<4x8x32xf32>
    %93 = tpu.matmul %87, %92, %cst_50 {dimension_numbers = #tpu.dot_dimension_numbers<[2], [1], [1], [2], [0, 0, 0, 1, 1, 2], [0], [0]>} : vector<4x8x128xbf16>, vector<4x128x32xbf16>, vector<4x8x32xf32> -> vector<4x8x32xf32>
    "tpu.trace_stop"() : () -> ()
    %c0_51 = arith.constant 0 : index
    %c0_52 = arith.constant 0 : index
    %c0_53 = arith.constant 0 : index
    %94 = vector.load %arg17[%c0_51, %c0_52, %c0_53] : memref<4x1x32xf32, #tpu.memory_space<vmem>>, vector<4x1x32xf32>
    %95 = vector.broadcast %94 : vector<4x1x32xf32> to vector<4x8x32xf32>
    %96 = arith.addf %93, %95 : vector<4x8x32xf32>
    %c0_54 = arith.constant 0 : index
    %c0_55 = arith.constant 0 : index
    %c0_56 = arith.constant 0 : index
    %97 = vector.load %arg14[%c0_54, %c0_55, %c0_56] : memref<4x128x32xbf16, #tpu.memory_space<vmem>>, vector<4x128x32xbf16>
    "tpu.trace_start"() <{level = 10 : i32, message = "hsd,hdf->hsf"}> : () -> ()
    %cst_57 = arith.constant dense<0.000000e+00> : vector<4x8x32xf32>
    %98 = tpu.matmul %91, %97, %cst_57 {dimension_numbers = #tpu.dot_dimension_numbers<[2], [1], [1], [2], [0, 0, 0, 1, 1, 2], [0], [0]>} : vector<4x8x128xbf16>, vector<4x128x32xbf16>, vector<4x8x32xf32> -> vector<4x8x32xf32>
    "tpu.trace_stop"() : () -> ()
    %c0_58 = arith.constant 0 : index
    %c0_59 = arith.constant 0 : index
    %c0_60 = arith.constant 0 : index
    %99 = vector.load %arg18[%c0_58, %c0_59, %c0_60] : memref<4x1x32xf32, #tpu.memory_space<vmem>>, vector<4x1x32xf32>
    %100 = vector.broadcast %99 : vector<4x1x32xf32> to vector<4x8x32xf32>
    %101 = arith.addf %98, %100 : vector<4x8x32xf32>
    %c0_61 = arith.constant 0 : index
    %c0_62 = arith.constant 0 : index
    %c0_63 = arith.constant 0 : index
    %102 = vector.load %arg15[%c0_61, %c0_62, %c0_63] : memref<4x128x32xbf16, #tpu.memory_space<vmem>>, vector<4x128x32xbf16>
    "tpu.trace_start"() <{level = 10 : i32, message = "hsd,hdf->hsf"}> : () -> ()
    %cst_64 = arith.constant dense<0.000000e+00> : vector<4x8x32xf32>
    %103 = tpu.matmul %91, %102, %cst_64 {dimension_numbers = #tpu.dot_dimension_numbers<[2], [1], [1], [2], [0, 0, 0, 1, 1, 2], [0], [0]>} : vector<4x8x128xbf16>, vector<4x128x32xbf16>, vector<4x8x32xf32> -> vector<4x8x32xf32>
    "tpu.trace_stop"() : () -> ()
    %c0_65 = arith.constant 0 : index
    %c0_66 = arith.constant 0 : index
    %c0_67 = arith.constant 0 : index
    %104 = vector.load %arg19[%c0_65, %c0_66, %c0_67] : memref<4x1x32xf32, #tpu.memory_space<vmem>>, vector<4x1x32xf32>
    %105 = vector.broadcast %104 : vector<4x1x32xf32> to vector<4x8x32xf32>
    %106 = arith.addf %103, %105 : vector<4x8x32xf32>
    %107 = arith.truncf %96 : vector<4x8x32xf32> to vector<4x8x32xbf16>
    %108 = arith.truncf %101 : vector<4x8x32xf32> to vector<4x8x32xbf16>
    %109 = arith.truncf %106 : vector<4x8x32xf32> to vector<4x8x32xbf16>
    "tpu.trace_start"() <{level = 10 : i32, message = "htf,hsf->hts"}> : () -> ()
    %cst_68 = arith.constant dense<0.000000e+00> : vector<4x8x8xf32>
    %110 = tpu.matmul %107, %108, %cst_68 {dimension_numbers = #tpu.dot_dimension_numbers<[2], [2], [1], [1], [0, 0, 0, 1, 1, 1], [0], [0]>} : vector<4x8x32xbf16>, vector<4x8x32xbf16>, vector<4x8x8xf32> -> vector<4x8x8xf32>
    "tpu.trace_stop"() : () -> ()
    %cst_69 = arith.constant 0.176776692 : f32
    %111 = vector.broadcast %cst_69 : f32 to vector<4x8x8xf32>
    %112 = arith.mulf %110, %111 : vector<4x8x8xf32>
    %cst_70 = arith.constant dense<0xFF800000> : vector<4x8xf32>
    %113 = vector.multi_reduction <maximumf>, %112, %cst_70 [2] : vector<4x8x8xf32> to vector<4x8xf32>
    %114 = vector.shape_cast %113 : vector<4x8xf32> to vector<4x8x1xf32>
    %115 = vector.broadcast %114 : vector<4x8x1xf32> to vector<4x8x8xf32>
    %116 = arith.subf %112, %115 : vector<4x8x8xf32>
    %117 = math.exp %116 : vector<4x8x8xf32>
    %cst_71 = arith.constant dense<0.000000e+00> : vector<4x8xf32>
    %118 = vector.multi_reduction <add>, %117, %cst_71 [2] : vector<4x8x8xf32> to vector<4x8xf32>
    %119 = vector.shape_cast %118 : vector<4x8xf32> to vector<4x8x1xf32>
    %120 = tpu.reciprocal %119 {approx = true} : vector<4x8x1xf32> -> vector<4x8x1xf32>
    %121 = vector.broadcast %120 : vector<4x8x1xf32> to vector<4x8x8xf32>
    %122 = arith.mulf %117, %121 : vector<4x8x8xf32>
    %123 = arith.truncf %122 : vector<4x8x8xf32> to vector<4x8x8xbf16>
    "tpu.trace_start"() <{level = 10 : i32, message = "hts,hsf->htf"}> : () -> ()
    %cst_72 = arith.constant dense<0.000000e+00> : vector<4x8x32xf32>
    %124 = tpu.matmul %123, %109, %cst_72 {dimension_numbers = #tpu.dot_dimension_numbers<[2], [1], [1], [2], [0, 0, 0, 1, 1, 2], [0], [0]>} : vector<4x8x8xbf16>, vector<4x8x32xbf16>, vector<4x8x32xf32> -> vector<4x8x32xf32>
    "tpu.trace_stop"() : () -> ()
    %125 = arith.truncf %124 : vector<4x8x32xf32> to vector<4x8x32xbf16>
    %c0_73 = arith.constant 0 : index
    %c0_74 = arith.constant 0 : index
    %c0_75 = arith.constant 0 : index
    %126 = vector.load %arg16[%c0_73, %c0_74, %c0_75] : memref<4x32x128xbf16, #tpu.memory_space<vmem>>, vector<4x32x128xbf16>
    "tpu.trace_start"() <{level = 10 : i32, message = "htf,hfd->htd"}> : () -> ()
    %cst_76 = arith.constant dense<0.000000e+00> : vector<4x8x128xf32>
    %127 = tpu.matmul %125, %126, %cst_76 {dimension_numbers = #tpu.dot_dimension_numbers<[2], [1], [1], [2], [0, 0, 0, 1, 1, 2], [0], [0]>} : vector<4x8x32xbf16>, vector<4x32x128xbf16>, vector<4x8x128xf32> -> vector<4x8x128xf32>
    "tpu.trace_stop"() : () -> ()
    %cst_77 = arith.constant dense<0.000000e+00> : vector<8x128xf32>
    %128 = vector.multi_reduction <add>, %127, %cst_77 [0] : vector<4x8x128xf32> to vector<8x128xf32>
    %c0_78 = arith.constant 0 : index
    %c0_79 = arith.constant 0 : index
    %129 = vector.load %arg20[%c0_78, %c0_79] : memref<1x128xf32, #tpu.memory_space<vmem>>, vector<1x128xf32>
    %130 = vector.broadcast %129 : vector<1x128xf32> to vector<8x128xf32>
    %131 = arith.addf %128, %130 : vector<8x128xf32>
    %132 = arith.addf %83, %131 : vector<8x128xf32>
    %c0_80 = arith.constant 0 : index
    %c0_81 = arith.constant 0 : index
    %133 = vector.load %arg21[%c0_80, %c0_81] : memref<1x128xf32, #tpu.memory_space<vmem>>, vector<1x128xf32>
    %c0_82 = arith.constant 0 : index
    %c0_83 = arith.constant 0 : index
    %134 = vector.load %arg22[%c0_82, %c0_83] : memref<1x128xf32, #tpu.memory_space<vmem>>, vector<1x128xf32>
    %cst_84 = arith.constant dense<0.000000e+00> : vector<8xf32>
    %135 = vector.multi_reduction <add>, %132, %cst_84 [1] : vector<8x128xf32> to vector<8xf32>
    %136 = vector.shape_cast %135 : vector<8xf32> to vector<8x1xf32>
    %cst_85 = arith.constant 1.280000e+02 : f32
    %137 = vector.broadcast %cst_85 : f32 to vector<8x1xf32>
    %138 = arith.divf %136, %137 : vector<8x1xf32>
    %139 = vector.broadcast %138 : vector<8x1xf32> to vector<8x128xf32>
    %140 = arith.subf %132, %139 : vector<8x128xf32>
    %141 = arith.mulf %140, %140 : vector<8x128xf32>
    %cst_86 = arith.constant dense<0.000000e+00> : vector<8xf32>
    %142 = vector.multi_reduction <add>, %141, %cst_86 [1] : vector<8x128xf32> to vector<8xf32>
    %143 = vector.shape_cast %142 : vector<8xf32> to vector<8x1xf32>
    %cst_87 = arith.constant 1.280000e+02 : f32
    %144 = vector.broadcast %cst_87 : f32 to vector<8x1xf32>
    %145 = arith.divf %143, %144 : vector<8x1xf32>
    %146 = vector.broadcast %138 : vector<8x1xf32> to vector<8x128xf32>
    %147 = arith.subf %132, %146 : vector<8x128xf32>
    %cst_88 = arith.constant 9.99999974E-6 : f32
    %148 = vector.broadcast %cst_88 : f32 to vector<8x1xf32>
    %149 = arith.addf %145, %148 : vector<8x1xf32>
    %150 = math.rsqrt %149 : vector<8x1xf32>
    %151 = vector.broadcast %150 : vector<8x1xf32> to vector<8x128xf32>
    %152 = arith.mulf %147, %151 : vector<8x128xf32>
    %153 = vector.broadcast %133 : vector<1x128xf32> to vector<8x128xf32>
    %154 = arith.mulf %152, %153 : vector<8x128xf32>
    %155 = vector.broadcast %134 : vector<1x128xf32> to vector<8x128xf32>
    %156 = arith.addf %154, %155 : vector<8x128xf32>
    %157 = arith.truncf %156 : vector<8x128xf32> to vector<8x128xbf16>
    %c0_89 = arith.constant 0 : index
    %c0_90 = arith.constant 0 : index
    %158 = vector.load %arg23[%c0_89, %c0_90] : memref<128x512xbf16, #tpu.memory_space<vmem>>, vector<128x512xbf16>
    %cst_91 = arith.constant dense<0.000000e+00> : vector<8x512xf32>
    %159 = tpu.matmul %157, %158, %cst_91 {dimension_numbers = #tpu.dot_dimension_numbers<[1], [0], [0], [1], [0, 0, 1, 1], [], []>} : vector<8x128xbf16>, vector<128x512xbf16>, vector<8x512xf32> -> vector<8x512xf32>
    %c0_92 = arith.constant 0 : index
    %c0_93 = arith.constant 0 : index
    %160 = vector.load %arg24[%c0_92, %c0_93] : memref<1x512xf32, #tpu.memory_space<vmem>>, vector<1x512xf32>
    %161 = vector.broadcast %160 : vector<1x512xf32> to vector<8x512xf32>
    %162 = arith.addf %159, %161 : vector<8x512xf32>
    %cst_94 = arith.constant 0.000000e+00 : f32
    %163 = vector.broadcast %cst_94 : f32 to vector<8x512xf32>
    %164 = arith.maximumf %162, %163 : vector<8x512xf32>
    %165 = arith.truncf %164 : vector<8x512xf32> to vector<8x512xbf16>
    %c0_95 = arith.constant 0 : index
    %c0_96 = arith.constant 0 : index
    %166 = vector.load %arg25[%c0_95, %c0_96] : memref<512x128xbf16, #tpu.memory_space<vmem>>, vector<512x128xbf16>
    %cst_97 = arith.constant dense<0.000000e+00> : vector<8x128xf32>
    %167 = tpu.matmul %165, %166, %cst_97 {dimension_numbers = #tpu.dot_dimension_numbers<[1], [0], [0], [1], [0, 0, 1, 1], [], []>} : vector<8x512xbf16>, vector<512x128xbf16>, vector<8x128xf32> -> vector<8x128xf32>
    %c0_98 = arith.constant 0 : index
    %c0_99 = arith.constant 0 : index
    %168 = vector.load %arg26[%c0_98, %c0_99] : memref<1x128xf32, #tpu.memory_space<vmem>>, vector<1x128xf32>
    %169 = vector.broadcast %168 : vector<1x128xf32> to vector<8x128xf32>
    %170 = arith.addf %167, %169 : vector<8x128xf32>
    %171 = arith.addf %156, %170 : vector<8x128xf32>
    %c0_100 = arith.constant 0 : index
    %c0_101 = arith.constant 0 : index
    %172 = vector.load %arg27[%c0_100, %c0_101] : memref<1x128xf32, #tpu.memory_space<vmem>>, vector<1x128xf32>
    %c0_102 = arith.constant 0 : index
    %c0_103 = arith.constant 0 : index
    %173 = vector.load %arg28[%c0_102, %c0_103] : memref<1x128xf32, #tpu.memory_space<vmem>>, vector<1x128xf32>
    %cst_104 = arith.constant dense<0.000000e+00> : vector<8xf32>
    %174 = vector.multi_reduction <add>, %171, %cst_104 [1] : vector<8x128xf32> to vector<8xf32>
    %175 = vector.shape_cast %174 : vector<8xf32> to vector<8x1xf32>
    %cst_105 = arith.constant 1.280000e+02 : f32
    %176 = vector.broadcast %cst_105 : f32 to vector<8x1xf32>
    %177 = arith.divf %175, %176 : vector<8x1xf32>
    %178 = vector.broadcast %177 : vector<8x1xf32> to vector<8x128xf32>
    %179 = arith.subf %171, %178 : vector<8x128xf32>
    %180 = arith.mulf %179, %179 : vector<8x128xf32>
    %cst_106 = arith.constant dense<0.000000e+00> : vector<8xf32>
    %181 = vector.multi_reduction <add>, %180, %cst_106 [1] : vector<8x128xf32> to vector<8xf32>
    %182 = vector.shape_cast %181 : vector<8xf32> to vector<8x1xf32>
    %cst_107 = arith.constant 1.280000e+02 : f32
    %183 = vector.broadcast %cst_107 : f32 to vector<8x1xf32>
    %184 = arith.divf %182, %183 : vector<8x1xf32>
    %185 = vector.broadcast %177 : vector<8x1xf32> to vector<8x128xf32>
    %186 = arith.subf %171, %185 : vector<8x128xf32>
    %cst_108 = arith.constant 9.99999974E-6 : f32
    %187 = vector.broadcast %cst_108 : f32 to vector<8x1xf32>
    %188 = arith.addf %184, %187 : vector<8x1xf32>
    %189 = math.rsqrt %188 : vector<8x1xf32>
    %190 = vector.broadcast %189 : vector<8x1xf32> to vector<8x128xf32>
    %191 = arith.mulf %186, %190 : vector<8x128xf32>
    %192 = vector.broadcast %172 : vector<1x128xf32> to vector<8x128xf32>
    %193 = arith.mulf %191, %192 : vector<8x128xf32>
    %194 = vector.broadcast %173 : vector<1x128xf32> to vector<8x128xf32>
    %195 = arith.addf %193, %194 : vector<8x128xf32>
    %c0_109 = arith.constant 0 : index
    %c0_110 = arith.constant 0 : index
    %c0_111 = arith.constant 0 : index
    %196 = vector.load %arg29[%c0_109, %c0_110, %c0_111] : memref<1x8x128xf32, #tpu.memory_space<vmem>>, vector<1x8x128xf32>
    %197 = vector.shape_cast %196 : vector<1x8x128xf32> to vector<8x128xf32>
    %198 = vector.shape_cast %195 : vector<8x128xf32> to vector<1x8x128xf32>
    tpu.vector_store %arg29[%c0_109, %c0_110, %c0_111], %198 {strides = array<i32>} : memref<1x8x128xf32, #tpu.memory_space<vmem>>, vector<1x8x128xf32>,
    return
  }
  func.func @transform_0(%arg0: i32) -> (i32, i32, i32) {
    %c0_i32 = arith.constant 0 : i32
    %c0_i32_0 = arith.constant 0 : i32
    %c0_i32_1 = arith.constant 0 : i32
    return %arg0, %c0_i32, %c0_i32_0 : i32, i32, i32
  }
  func.func @transform_1(%arg0: i32) -> (i32, i32, i32) {
    %c0_i32 = arith.constant 0 : i32
    %c0_i32_0 = arith.constant 0 : i32
    %c0_i32_1 = arith.constant 0 : i32
    return %arg0, %c0_i32, %c0_i32_0 : i32, i32, i32
  }
  func.func @transform_2(%arg0: i32) -> (i32, i32, i32) {
    %c0_i32 = arith.constant 0 : i32
    %c0_i32_0 = arith.constant 0 : i32
    %c0_i32_1 = arith.constant 0 : i32
    %c0_i32_2 = arith.constant 0 : i32
    return %c0_i32, %c0_i32_0, %c0_i32_1 : i32, i32, i32
  }
  func.func @transform_3(%arg0: i32) -> (i32, i32, i32) {
    %c0_i32 = arith.constant 0 : i32
    %c0_i32_0 = arith.constant 0 : i32
    %c0_i32_1 = arith.constant 0 : i32
    %c0_i32_2 = arith.constant 0 : i32
    return %c0_i32, %c0_i32_0, %c0_i32_1 : i32, i32, i32
  }
  func.func @transform_4(%arg0: i32) -> (i32, i32, i32) {
    %c0_i32 = arith.constant 0 : i32
    %c0_i32_0 = arith.constant 0 : i32
    %c0_i32_1 = arith.constant 0 : i32
    %c0_i32_2 = arith.constant 0 : i32
    return %c0_i32, %c0_i32_0, %c0_i32_1 : i32, i32, i32
  }
  func.func @transform_5(%arg0: i32) -> (i32, i32, i32) {
    %c0_i32 = arith.constant 0 : i32
    %c0_i32_0 = arith.constant 0 : i32
    %c0_i32_1 = arith.constant 0 : i32
    %c0_i32_2 = arith.constant 0 : i32
    return %c0_i32, %c0_i32_0, %c0_i32_1 : i32, i32, i32
  }
  func.func @transform_6(%arg0: i32) -> (i32, i32, i32) {
    %c0_i32 = arith.constant 0 : i32
    %c0_i32_0 = arith.constant 0 : i32
    %c0_i32_1 = arith.constant 0 : i32
    %c0_i32_2 = arith.constant 0 : i32
    return %c0_i32, %c0_i32_0, %c0_i32_1 : i32, i32, i32
  }
  func.func @transform_7(%arg0: i32) -> (i32, i32, i32) {
    %c0_i32 = arith.constant 0 : i32
    %c0_i32_0 = arith.constant 0 : i32
    %c0_i32_1 = arith.constant 0 : i32
    %c0_i32_2 = arith.constant 0 : i32
    return %c0_i32, %c0_i32_0, %c0_i32_1 : i32, i32, i32
  }
  func.func @transform_8(%arg0: i32) -> (i32, i32, i32) {
    %c0_i32 = arith.constant 0 : i32
    %c0_i32_0 = arith.constant 0 : i32
    %c0_i32_1 = arith.constant 0 : i32
    %c0_i32_2 = arith.constant 0 : i32
    return %c0_i32, %c0_i32_0, %c0_i32_1 : i32, i32, i32
  }
  func.func @transform_9(%arg0: i32) -> (i32, i32) {
    %c0_i32 = arith.constant 0 : i32
    %c0_i32_0 = arith.constant 0 : i32
    %c0_i32_1 = arith.constant 0 : i32
    return %c0_i32, %c0_i32_0 : i32, i32
  }
  func.func @transform_10(%arg0: i32) -> (i32, i32) {
    %c0_i32 = arith.constant 0 : i32
    %c0_i32_0 = arith.constant 0 : i32
    %c0_i32_1 = arith.constant 0 : i32
    return %c0_i32, %c0_i32_0 : i32, i32
  }
  func.func @transform_11(%arg0: i32) -> (i32, i32) {
    %c0_i32 = arith.constant 0 : i32
    %c0_i32_0 = arith.constant 0 : i32
    %c0_i32_1 = arith.constant 0 : i32
    return %c0_i32, %c0_i32_0 : i32, i32
  }
  func.func @transform_12(%arg0: i32) -> (i32, i32, i32) {
    %c0_i32 = arith.constant 0 : i32
    %c0_i32_0 = arith.constant 0 : i32
    %c0_i32_1 = arith.constant 0 : i32
    %c0_i32_2 = arith.constant 0 : i32
    return %c0_i32, %c0_i32_0, %c0_i32_1 : i32, i32, i32
  }
  func.func @transform_13(%arg0: i32) -> (i32, i32, i32) {
    %c0_i32 = arith.constant 0 : i32
    %c0_i32_0 = arith.constant 0 : i32
    %c0_i32_1 = arith.constant 0 : i32
    %c0_i32_2 = arith.constant 0 : i32
    return %c0_i32, %c0_i32_0, %c0_i32_1 : i32, i32, i32
  }
  func.func @transform_14(%arg0: i32) -> (i32, i32, i32) {
    %c0_i32 = arith.constant 0 : i32
    %c0_i32_0 = arith.constant 0 : i32
    %c0_i32_1 = arith.constant 0 : i32
    %c0_i32_2 = arith.constant 0 : i32
    return %c0_i32, %c0_i32_0, %c0_i32_1 : i32, i32, i32
  }
  func.func @transform_15(%arg0: i32) -> (i32, i32, i32) {
    %c0_i32 = arith.constant 0 : i32
    %c0_i32_0 = arith.constant 0 : i32
    %c0_i32_1 = arith.constant 0 : i32
    %c0_i32_2 = arith.constant 0 : i32
    return %c0_i32, %c0_i32_0, %c0_i32_1 : i32, i32, i32
  }
  func.func @transform_16(%arg0: i32) -> (i32, i32, i32) {
    %c0_i32 = arith.constant 0 : i32
    %c0_i32_0 = arith.constant 0 : i32
    %c0_i32_1 = arith.constant 0 : i32
    %c0_i32_2 = arith.constant 0 : i32
    return %c0_i32, %c0_i32_0, %c0_i32_1 : i32, i32, i32
  }
  func.func @transform_17(%arg0: i32) -> (i32, i32, i32) {
    %c0_i32 = arith.constant 0 : i32
    %c0_i32_0 = arith.constant 0 : i32
    %c0_i32_1 = arith.constant 0 : i32
    %c0_i32_2 = arith.constant 0 : i32
    return %c0_i32, %c0_i32_0, %c0_i32_1 : i32, i32, i32
  }
  func.func @transform_18(%arg0: i32) -> (i32, i32, i32) {
    %c0_i32 = arith.constant 0 : i32
    %c0_i32_0 = arith.constant 0 : i32
    %c0_i32_1 = arith.constant 0 : i32
    %c0_i32_2 = arith.constant 0 : i32
    return %c0_i32, %c0_i32_0, %c0_i32_1 : i32, i32, i32
  }
  func.func @transform_19(%arg0: i32) -> (i32, i32) {
    %c0_i32 = arith.constant 0 : i32
    %c0_i32_0 = arith.constant 0 : i32
    %c0_i32_1 = arith.constant 0 : i32
    return %c0_i32, %c0_i32_0 : i32, i32
  }
  func.func @transform_20(%arg0: i32) -> (i32, i32) {
    %c0_i32 = arith.constant 0 : i32
    %c0_i32_0 = arith.constant 0 : i32
    %c0_i32_1 = arith.constant 0 : i32
    return %c0_i32, %c0_i32_0 : i32, i32
  }
  func.func @transform_21(%arg0: i32) -> (i32, i32) {
    %c0_i32 = arith.constant 0 : i32
    %c0_i32_0 = arith.constant 0 : i32
    %c0_i32_1 = arith.constant 0 : i32
    return %c0_i32, %c0_i32_0 : i32, i32
  }
  func.func @transform_22(%arg0: i32) -> (i32, i32) {
    %c0_i32 = arith.constant 0 : i32
    %c0_i32_0 = arith.constant 0 : i32
    %c0_i32_1 = arith.constant 0 : i32
    return %c0_i32, %c0_i32_0 : i32, i32
  }
  func.func @transform_23(%arg0: i32) -> (i32, i32) {
    %c0_i32 = arith.constant 0 : i32
    %c0_i32_0 = arith.constant 0 : i32
    %c0_i32_1 = arith.constant 0 : i32
    return %c0_i32, %c0_i32_0 : i32, i32
  }
  func.func @transform_24(%arg0: i32) -> (i32, i32) {
    %c0_i32 = arith.constant 0 : i32
    %c0_i32_0 = arith.constant 0 : i32
    %c0_i32_1 = arith.constant 0 : i32
    return %c0_i32, %c0_i32_0 : i32, i32
  }
  func.func @transform_25(%arg0: i32) -> (i32, i32) {
    %c0_i32 = arith.constant 0 : i32
    %c0_i32_0 = arith.constant 0 : i32
    %c0_i32_1 = arith.constant 0 : i32
    return %c0_i32, %c0_i32_0 : i32, i32
  }
  func.func @transform_26(%arg0: i32) -> (i32, i32) {
    %c0_i32 = arith.constant 0 : i32
    %c0_i32_0 = arith.constant 0 : i32
    %c0_i32_1 = arith.constant 0 : i32
    return %c0_i32, %c0_i32_0 : i32, i32
  }
  func.func @transform_27(%arg0: i32) -> (i32, i32) {
    %c0_i32 = arith.constant 0 : i32
    %c0_i32_0 = arith.constant 0 : i32
    %c0_i32_1 = arith.constant 0 : i32
    return %c0_i32, %c0_i32_0 : i32, i32
  }
  func.func @transform_28(%arg0: i32) -> (i32, i32, i32) {
    %c0_i32 = arith.constant 0 : i32
    %c0_i32_0 = arith.constant 0 : i32
    %c0_i32_1 = arith.constant 0 : i32
    return %arg0, %c0_i32, %c0_i32_0 : i32, i32, i32
  }
}

</mosaic_0001>

<llo_original>
// kernel: tpu_custom_call.1
$region0: #{tpu_custom_call.1}
  #allocation0 [shape = 'u32[]', space=smem, size = 0x4, offset = 0x4, fixed_abs, tag = 'smem constant byte address 0x4 - core index']
  #allocation1 [shape = 'u32[144,128]{1,0:T(1,128)}', space=vmem, size = 0x12000, scoped, tag = 'internal scratch']
  %s0 = inlined_call_operand.vmem [shape: f32[2,8,128], index: 0, kind: input, shape index: {}]
  %s1 = inlined_call_operand.vmem [shape: f32[2,8,128], index: 1, kind: input, shape index: {}]
  %s2 = inlined_call_operand.vmem [shape: bf16[4,128,32], index: 2, kind: input, shape index: {}]
  %s3 = inlined_call_operand.vmem [shape: bf16[4,128,32], index: 3, kind: input, shape index: {}]
  %s4 = inlined_call_operand.vmem [shape: bf16[4,128,32], index: 4, kind: input, shape index: {}]
  %s5 = inlined_call_operand.vmem [shape: bf16[4,32,128], index: 5, kind: input, shape index: {}]
  %s6 = inlined_call_operand.vmem [shape: f32[4,1,32], index: 6, kind: input, shape index: {}]
  %s7 = inlined_call_operand.vmem [shape: f32[4,1,32], index: 7, kind: input, shape index: {}]
  %s8 = inlined_call_operand.vmem [shape: f32[4,1,32], index: 8, kind: input, shape index: {}]
  %s9 = inlined_call_operand.vmem [shape: f32[1,128], index: 9, kind: input, shape index: {}]
  %s10 = inlined_call_operand.vmem [shape: f32[1,128], index: 10, kind: input, shape index: {}]
  %s11 = inlined_call_operand.vmem [shape: f32[1,128], index: 11, kind: input, shape index: {}]
  %s12 = inlined_call_operand.vmem [shape: bf16[4,128,32], index: 12, kind: input, shape index: {}]
  %s13 = inlined_call_operand.vmem [shape: bf16[4,128,32], index: 13, kind: input, shape index: {}]
  %s14 = inlined_call_operand.vmem [shape: bf16[4,128,32], index: 14, kind: input, shape index: {}]
  %s15 = inlined_call_operand.vmem [shape: bf16[4,32,128], index: 15, kind: input, shape index: {}]
  %s16 = inlined_call_operand.vmem [shape: f32[4,1,32], index: 16, kind: input, shape index: {}]
  %s17 = inlined_call_operand.vmem [shape: f32[4,1,32], index: 17, kind: input, shape index: {}]
  %s18 = inlined_call_operand.vmem [shape: f32[4,1,32], index: 18, kind: input, shape index: {}]
  %s19 = inlined_call_operand.vmem [shape: f32[1,128], index: 19, kind: input, shape index: {}]
  %s20 = inlined_call_operand.vmem [shape: f32[1,128], index: 20, kind: input, shape index: {}]
  %s21 = inlined_call_operand.vmem [shape: f32[1,128], index: 21, kind: input, shape index: {}]
  %s22 = inlined_call_operand.vmem [shape: bf16[128,512], index: 22, kind: input, shape index: {}]
  %s23 = inlined_call_operand.vmem [shape: f32[1,512], index: 23, kind: input, shape index: {}]
  %s24 = inlined_call_operand.vmem [shape: bf16[512,128], index: 24, kind: input, shape index: {}]
  %s25 = inlined_call_operand.vmem [shape: f32[1,128], index: 25, kind: input, shape index: {}]
  %s26 = inlined_call_operand.vmem [shape: f32[1,128], index: 26, kind: input, shape index: {}]
  %s27 = inlined_call_operand.vmem [shape: f32[1,128], index: 27, kind: input, shape index: {}]
  %s28 = inlined_call_operand.hbm [shape: f32[2,8,128], index: 28, kind: output, shape index: {}]
  %s29 = sld [smem:[#allocation0]]
  $region145: #{tpu_custom_call.1} parent=0
    _
  %s31 = ssub.s32 1, %s29
  %s32 = scalar_select 0, %s31, %s29
  $region1: #{tpu_custom_call.1} parent=0
    #allocation2 [shape = 'u8[8192]{0}', space=vmem, size = 0x2000, scoped, tag = 'output window, operand 0']
    #allocation3 [shape = 's32[2]{0}', space=sflag, size = 0x8, scoped, tag = 'scoped memory for tpu_custom_call.1']
    %33 = vsyncpa [#allocation3], 0
    %s34 = scalar_lea.sflag [#allocation3], 1
    %35 = vsyncpa %s34, 0
    loop: start=0, step=1, limit=4
    $region2: #{tpu_custom_call.1} parent=1 // loop_pre_header
      _
    $region3: #{tpu_custom_call.1} parent=1 // loop_header
      %s37 = sphi 0, %s41
      %p38 = scmp.ge.s32.totalorder %s37, 4
      %s47 = sphi 0, %s49
      %s50 = sphi 0, %s47
      %s51 = sphi 0, %s50
      %s67 = sphi 0, %s51
      %s73 = sphi 0, %s75
      %s76 = sphi 0, %s73
      %s77 = sphi 0, %s76
      %s93 = sphi 0, %s77
      %s97 = sphi 0, %s97
      %s99 = sphi 0, %s97
      %s100 = sphi 0, %s99
      %s114 = sphi 0, %s100
      %s118 = sphi 0, %s118
      %s120 = sphi 0, %s118
      %s121 = sphi 0, %s120
      %s135 = sphi 0, %s121
      %s139 = sphi 0, %s139
      %s141 = sphi 0, %s139
      %s142 = sphi 0, %s141
      %s156 = sphi 0, %s142
      %s160 = sphi 0, %s160
      %s162 = sphi 0, %s160
      %s163 = sphi 0, %s162
      %s177 = sphi 0, %s163
      %s181 = sphi 0, %s181
      %s183 = sphi 0, %s181
      %s184 = sphi 0, %s183
      %s198 = sphi 0, %s184
      %s202 = sphi 0, %s202
      %s204 = sphi 0, %s202
      %s205 = sphi 0, %s204
      %s219 = sphi 0, %s205
      %s223 = sphi 0, %s223
      %s225 = sphi 0, %s223
      %s226 = sphi 0, %s225
      %s240 = sphi 0, %s226
      %s244 = sphi 0, %s244
      %s246 = sphi 0, %s244
      %s247 = sphi 0, %s246
      %s261 = sphi 0, %s247
      %s265 = sphi 0, %s265
      %s267 = sphi 0, %s265
      %s268 = sphi 0, %s267
      %s282 = sphi 0, %s268
      %s286 = sphi 0, %s286
      %s288 = sphi 0, %s286
      %s289 = sphi 0, %s288
      %s303 = sphi 0, %s289
      %s307 = sphi 0, %s307
      %s309 = sphi 0, %s307
      %s310 = sphi 0, %s309
      %s324 = sphi 0, %s310
      %s328 = sphi 0, %s328
      %s330 = sphi 0, %s328
      %s331 = sphi 0, %s330
      %s345 = sphi 0, %s331
      %s349 = sphi 0, %s349
      %s351 = sphi 0, %s349
      %s352 = sphi 0, %s351
      %s366 = sphi 0, %s352
      %s370 = sphi 0, %s370
      %s372 = sphi 0, %s370
      %s373 = sphi 0, %s372
      %s387 = sphi 0, %s373
      %s391 = sphi 0, %s391
      %s393 = sphi 0, %s391
      %s394 = sphi 0, %s393
      %s408 = sphi 0, %s394
      %s412 = sphi 0, %s412
      %s414 = sphi 0, %s412
      %s415 = sphi 0, %s414
      %s429 = sphi 0, %s415
      %s433 = sphi 0, %s433
      %s435 = sphi 0, %s433
      %s436 = sphi 0, %s435
      %s450 = sphi 0, %s436
      %s454 = sphi 0, %s454
      %s456 = sphi 0, %s454
      %s457 = sphi 0, %s456
      %s471 = sphi 0, %s457
      %s475 = sphi 0, %s475
      %s477 = sphi 0, %s475
      %s478 = sphi 0, %s477
      %s492 = sphi 0, %s478
      %s496 = sphi 0, %s496
      %s498 = sphi 0, %s496
      %s499 = sphi 0, %s498
      %s513 = sphi 0, %s499
      %s517 = sphi 0, %s517
      %s519 = sphi 0, %s517
      %s520 = sphi 0, %s519
      %s534 = sphi 0, %s520
      %s538 = sphi 0, %s538
      %s540 = sphi 0, %s538
      %s541 = sphi 0, %s540
      %s555 = sphi 0, %s541
      %s559 = sphi 0, %s559
      %s561 = sphi 0, %s559
      %s562 = sphi 0, %s561
      %s576 = sphi 0, %s562
      %s580 = sphi 0, %s580
      %s582 = sphi 0, %s580
      %s583 = sphi 0, %s582
      %s597 = sphi 0, %s583
      %s601 = sphi 0, %s601
      %s603 = sphi 0, %s601
      %s604 = sphi 0, %s603
      %s618 = sphi 0, %s604
      %s622 = sphi 0, %s622
      %s624 = sphi 0, %s622
      %s625 = sphi 0, %s624
      %s639 = sphi 0, %s625
      %s645 = sphi 0, %s647
      %s648 = sphi 0, %s645
      %s649 = sphi 0, %s648
      %s665 = sphi 0, %s649
    $region4: #{tpu_custom_call.1} parent=1 // loop_header_branch
      %40 = sbr.rel (%p38) target = $region8
    $region5: #{tpu_custom_call.1} parent=1 // loop_body
      %s42 = ssub.s32 %s37, 1
      %s43 = ssub.s32 %s37, 2
      %s44 = sadd.s32 %s37, 1
      %s45 = ssub.s32 %s37, %s44
      %p46 = scmp.eq.s32.totalorder %s45, 0
      %s48 = sadd.s32 %s47, 1
      %s49 = scalar_select %p46, %s47, %s48
      %p52 = pneg %p46
      %p53 = scmp.eq.s32.totalorder %s37, 1
      %p54 = por %p52, %p53
      %p55 = scmp.ne.s32.totalorder %s47, %s50
      %p56 = scmp.eq.s32.totalorder %s37, 0
      %p57 = por %p55, %p56
      %p58 = scmp.ne.s32.totalorder %s47, %s50
      %p59 = scmp.eq.s32.totalorder %s42, 1
      %p60 = por %p58, %p59
      %p61 = scmp.ne.s32.totalorder %s50, %s51
      %p62 = scmp.eq.s32.totalorder %s42, 0
      %p63 = por %p61, %p62
      %p64 = scmp.ne.s32.totalorder %s50, %s51
      %p65 = scmp.eq.s32.totalorder %s43, 1
      %p66 = por %p64, %p65
      %p68 = scmp.ne.s32.totalorder %s51, %s67
      %p69 = scmp.eq.s32.totalorder %s43, 0
      %p70 = por %p68, %p69
      %s71 = ssub.s32 %s37, %s44
      %p72 = scmp.eq.s32.totalorder %s71, 0
      %s74 = sadd.s32 %s73, 1
      %s75 = scalar_select %p72, %s73, %s74
      %p78 = pneg %p72
      %p79 = scmp.eq.s32.totalorder %s37, 1
      %p80 = por %p78, %p79
      %p81 = scmp.ne.s32.totalorder %s73, %s76
      %p82 = scmp.eq.s32.totalorder %s37, 0
      %p83 = por %p81, %p82
      %p84 = scmp.ne.s32.totalorder %s73, %s76
      %p85 = scmp.eq.s32.totalorder %s42, 1
      %p86 = por %p84, %p85
      %p87 = scmp.ne.s32.totalorder %s76, %s77
      %p88 = scmp.eq.s32.totalorder %s42, 0
      %p89 = por %p87, %p88
      %p90 = scmp.ne.s32.totalorder %s76, %s77
      %p91 = scmp.eq.s32.totalorder %s43, 1
      %p92 = por %p90, %p91
      %p94 = scmp.ne.s32.totalorder %s77, %s93
      %p95 = scmp.eq.s32.totalorder %s43, 0
      %p96 = por %p94, %p95
      %s98 = sadd.s32 %s97, 1
      %p101 = scmp.eq.s32.totalorder %s37, 1
      %p102 = scmp.ne.s32.totalorder %s97, %s99
      %p103 = scmp.eq.s32.totalorder %s37, 0
      %p104 = por %p102, %p103
      %p105 = scmp.ne.s32.totalorder %s97, %s99
      %p106 = scmp.eq.s32.totalorder %s42, 1
      %p107 = por %p105, %p106
      %p108 = scmp.ne.s32.totalorder %s99, %s100
      %p109 = scmp.eq.s32.totalorder %s42, 0
      %p110 = por %p108, %p109
      %p111 = scmp.ne.s32.totalorder %s99, %s100
      %p112 = scmp.eq.s32.totalorder %s43, 1
      %p113 = por %p111, %p112
      %p115 = scmp.ne.s32.totalorder %s100, %s114
      %p116 = scmp.eq.s32.totalorder %s43, 0
      %p117 = por %p115, %p116
      %s119 = sadd.s32 %s118, 1
      %p122 = scmp.eq.s32.totalorder %s37, 1
      %p123 = scmp.ne.s32.totalorder %s118, %s120
      %p124 = scmp.eq.s32.totalorder %s37, 0
      %p125 = por %p123, %p124
      %p126 = scmp.ne.s32.totalorder %s118, %s120
      %p127 = scmp.eq.s32.totalorder %s42, 1
      %p128 = por %p126, %p127
      %p129 = scmp.ne.s32.totalorder %s120, %s121
      %p130 = scmp.eq.s32.totalorder %s42, 0
      %p131 = por %p129, %p130
      %p132 = scmp.ne.s32.totalorder %s120, %s121
      %p133 = scmp.eq.s32.totalorder %s43, 1
      %p134 = por %p132, %p133
      %p136 = scmp.ne.s32.totalorder %s121, %s135
      %p137 = scmp.eq.s32.totalorder %s43, 0
      %p138 = por %p136, %p137
      %s140 = sadd.s32 %s139, 1
      %p143 = scmp.eq.s32.totalorder %s37, 1
      %p144 = scmp.ne.s32.totalorder %s139, %s141
      %p145 = scmp.eq.s32.totalorder %s37, 0
      %p146 = por %p144, %p145
      %p147 = scmp.ne.s32.totalorder %s139, %s141
      %p148 = scmp.eq.s32.totalorder %s42, 1
      %p149 = por %p147, %p148
      %p150 = scmp.ne.s32.totalorder %s141, %s142
      %p151 = scmp.eq.s32.totalorder %s42, 0
      %p152 = por %p150, %p151
      %p153 = scmp.ne.s32.totalorder %s141, %s142
      %p154 = scmp.eq.s32.totalorder %s43, 1
      %p155 = por %p153, %p154
      %p157 = scmp.ne.s32.totalorder %s142, %s156
      %p158 = scmp.eq.s32.totalorder %s43, 0
      %p159 = por %p157, %p158
      %s161 = sadd.s32 %s160, 1
      %p164 = scmp.eq.s32.totalorder %s37, 1
      %p165 = scmp.ne.s32.totalorder %s160, %s162
      %p166 = scmp.eq.s32.totalorder %s37, 0
      %p167 = por %p165, %p166
      %p168 = scmp.ne.s32.totalorder %s160, %s162
      %p169 = scmp.eq.s32.totalorder %s42, 1
      %p170 = por %p168, %p169
      %p171 = scmp.ne.s32.totalorder %s162, %s163
      %p172 = scmp.eq.s32.totalorder %s42, 0
      %p173 = por %p171, %p172
      %p174 = scmp.ne.s32.totalorder %s162, %s163
      %p175 = scmp.eq.s32.totalorder %s43, 1
      %p176 = por %p174, %p175
      %p178 = scmp.ne.s32.totalorder %s163, %s177
      %p179 = scmp.eq.s32.totalorder %s43, 0
      %p180 = por %p178, %p179
      %s182 = sadd.s32 %s181, 1
      %p185 = scmp.eq.s32.totalorder %s37, 1
      %p186 = scmp.ne.s32.totalorder %s181, %s183
      %p187 = scmp.eq.s32.totalorder %s37, 0
      %p188 = por %p186, %p187
      %p189 = scmp.ne.s32.totalorder %s181, %s183
      %p190 = scmp.eq.s32.totalorder %s42, 1
      %p191 = por %p189, %p190
      %p192 = scmp.ne.s32.totalorder %s183, %s184
      %p193 = scmp.eq.s32.totalorder %s42, 0
      %p194 = por %p192, %p193
      %p195 = scmp.ne.s32.totalorder %s183, %s184
      %p196 = scmp.eq.s32.totalorder %s43, 1
      %p197 = por %p195, %p196
      %p199 = scmp.ne.s32.totalorder %s184, %s198
      %p200 = scmp.eq.s32.totalorder %s43, 0
      %p201 = por %p199, %p200
      %s203 = sadd.s32 %s202, 1
      %p206 = scmp.eq.s32.totalorder %s37, 1
      %p207 = scmp.ne.s32.totalorder %s202, %s204
      %p208 = scmp.eq.s32.totalorder %s37, 0
      %p209 = por %p207, %p208
      %p210 = scmp.ne.s32.totalorder %s202, %s204
      %p211 = scmp.eq.s32.totalorder %s42, 1
      %p212 = por %p210, %p211
      %p213 = scmp.ne.s32.totalorder %s204, %s205
      %p214 = scmp.eq.s32.totalorder %s42, 0
      %p215 = por %p213, %p214
      %p216 = scmp.ne.s32.totalorder %s204, %s205
      %p217 = scmp.eq.s32.totalorder %s43, 1
      %p218 = por %p216, %p217
      %p220 = scmp.ne.s32.totalorder %s205, %s219
      %p221 = scmp.eq.s32.totalorder %s43, 0
      %p222 = por %p220, %p221
      %s224 = sadd.s32 %s223, 1
      %p227 = scmp.eq.s32.totalorder %s37, 1
      %p228 = scmp.ne.s32.totalorder %s223, %s225
      %p229 = scmp.eq.s32.totalorder %s37, 0
      %p230 = por %p228, %p229
      %p231 = scmp.ne.s32.totalorder %s223, %s225
      %p232 = scmp.eq.s32.totalorder %s42, 1
      %p233 = por %p231, %p232
      %p234 = scmp.ne.s32.totalorder %s225, %s226
      %p235 = scmp.eq.s32.totalorder %s42, 0
      %p236 = por %p234, %p235
      %p237 = scmp.ne.s32.totalorder %s225, %s226
      %p238 = scmp.eq.s32.totalorder %s43, 1
      %p239 = por %p237, %p238
      %p241 = scmp.ne.s32.totalorder %s226, %s240
      %p242 = scmp.eq.s32.totalorder %s43, 0
      %p243 = por %p241, %p242
      %s245 = sadd.s32 %s244, 1
      %p248 = scmp.eq.s32.totalorder %s37, 1
      %p249 = scmp.ne.s32.totalorder %s244, %s246
      %p250 = scmp.eq.s32.totalorder %s37, 0
      %p251 = por %p249, %p250
      %p252 = scmp.ne.s32.totalorder %s244, %s246
      %p253 = scmp.eq.s32.totalorder %s42, 1
      %p254 = por %p252, %p253
      %p255 = scmp.ne.s32.totalorder %s246, %s247
      %p256 = scmp.eq.s32.totalorder %s42, 0
      %p257 = por %p255, %p256
      %p258 = scmp.ne.s32.totalorder %s246, %s247
      %p259 = scmp.eq.s32.totalorder %s43, 1
      %p260 = por %p258, %p259
      %p262 = scmp.ne.s32.totalorder %s247, %s261
      %p263 = scmp.eq.s32.totalorder %s43, 0
      %p264 = por %p262, %p263
      %s266 = sadd.s32 %s265, 1
      %p269 = scmp.eq.s32.totalorder %s37, 1
      %p270 = scmp.ne.s32.totalorder %s265, %s267
      %p271 = scmp.eq.s32.totalorder %s37, 0
      %p272 = por %p270, %p271
      %p273 = scmp.ne.s32.totalorder %s265, %s267
      %p274 = scmp.eq.s32.totalorder %s42, 1
      %p275 = por %p273, %p274
      %p276 = scmp.ne.s32.totalorder %s267, %s268
      %p277 = scmp.eq.s32.totalorder %s42, 0
      %p278 = por %p276, %p277
      %p279 = scmp.ne.s32.totalorder %s267, %s268
      %p280 = scmp.eq.s32.totalorder %s43, 1
      %p281 = por %p279, %p280
      %p283 = scmp.ne.s32.totalorder %s268, %s282
      %p284 = scmp.eq.s32.totalorder %s43, 0
      %p285 = por %p283, %p284
      %s287 = sadd.s32 %s286, 1
      %p290 = scmp.eq.s32.totalorder %s37, 1
      %p291 = scmp.ne.s32.totalorder %s286, %s288
      %p292 = scmp.eq.s32.totalorder %s37, 0
      %p293 = por %p291, %p292
      %p294 = scmp.ne.s32.totalorder %s286, %s288
      %p295 = scmp.eq.s32.totalorder %s42, 1
      %p296 = por %p294, %p295
      %p297 = scmp.ne.s32.totalorder %s288, %s289
      %p298 = scmp.eq.s32.totalorder %s42, 0
      %p299 = por %p297, %p298
      %p300 = scmp.ne.s32.totalorder %s288, %s289
      %p301 = scmp.eq.s32.totalorder %s43, 1
      %p302 = por %p300, %p301
      %p304 = scmp.ne.s32.totalorder %s289, %s303
      %p305 = scmp.eq.s32.totalorder %s43, 0
      %p306 = por %p304, %p305
      %s308 = sadd.s32 %s307, 1
      %p311 = scmp.eq.s32.totalorder %s37, 1
      %p312 = scmp.ne.s32.totalorder %s307, %s309
      %p313 = scmp.eq.s32.totalorder %s37, 0
      %p314 = por %p312, %p313
      %p315 = scmp.ne.s32.totalorder %s307, %s309
      %p316 = scmp.eq.s32.totalorder %s42, 1
      %p317 = por %p315, %p316
      %p318 = scmp.ne.s32.totalorder %s309, %s310
      %p319 = scmp.eq.s32.totalorder %s42, 0
      %p320 = por %p318, %p319
      %p321 = scmp.ne.s32.totalorder %s309, %s310
      %p322 = scmp.eq.s32.totalorder %s43, 1
      %p323 = por %p321, %p322
      %p325 = scmp.ne.s32.totalorder %s310, %s324
      %p326 = scmp.eq.s32.totalorder %s43, 0
      %p327 = por %p325, %p326
      %s329 = sadd.s32 %s328, 1
      %p332 = scmp.eq.s32.totalorder %s37, 1
      %p333 = scmp.ne.s32.totalorder %s328, %s330
      %p334 = scmp.eq.s32.totalorder %s37, 0
      %p335 = por %p333, %p334
      %p336 = scmp.ne.s32.totalorder %s328, %s330
      %p337 = scmp.eq.s32.totalorder %s42, 1
      %p338 = por %p336, %p337
      %p339 = scmp.ne.s32.totalorder %s330, %s331
      %p340 = scmp.eq.s32.totalorder %s42, 0
      %p341 = por %p339, %p340
      %p342 = scmp.ne.s32.totalorder %s330, %s331
      %p343 = scmp.eq.s32.totalorder %s43, 1
      %p344 = por %p342, %p343
      %p346 = scmp.ne.s32.totalorder %s331, %s345
      %p347 = scmp.eq.s32.totalorder %s43, 0
      %p348 = por %p346, %p347
      %s350 = sadd.s32 %s349, 1
      %p353 = scmp.eq.s32.totalorder %s37, 1
      %p354 = scmp.ne.s32.totalorder %s349, %s351
      %p355 = scmp.eq.s32.totalorder %s37, 0
      %p356 = por %p354, %p355
      %p357 = scmp.ne.s32.totalorder %s349, %s351
      %p358 = scmp.eq.s32.totalorder %s42, 1
      %p359 = por %p357, %p358
      %p360 = scmp.ne.s32.totalorder %s351, %s352
      %p361 = scmp.eq.s32.totalorder %s42, 0
      %p362 = por %p360, %p361
      %p363 = scmp.ne.s32.totalorder %s351, %s352
      %p364 = scmp.eq.s32.totalorder %s43, 1
      %p365 = por %p363, %p364
      %p367 = scmp.ne.s32.totalorder %s352, %s366
      %p368 = scmp.eq.s32.totalorder %s43, 0
      %p369 = por %p367, %p368
      %s371 = sadd.s32 %s370, 1
      %p374 = scmp.eq.s32.totalorder %s37, 1
      %p375 = scmp.ne.s32.totalorder %s370, %s372
      %p376 = scmp.eq.s32.totalorder %s37, 0
      %p377 = por %p375, %p376
      %p378 = scmp.ne.s32.totalorder %s370, %s372
      %p379 = scmp.eq.s32.totalorder %s42, 1
      %p380 = por %p378, %p379
      %p381 = scmp.ne.s32.totalorder %s372, %s373
      %p382 = scmp.eq.s32.totalorder %s42, 0
      %p383 = por %p381, %p382
      %p384 = scmp.ne.s32.totalorder %s372, %s373
      %p385 = scmp.eq.s32.totalorder %s43, 1
      %p386 = por %p384, %p385
      %p388 = scmp.ne.s32.totalorder %s373, %s387
      %p389 = scmp.eq.s32.totalorder %s43, 0
      %p390 = por %p388, %p389
      %s392 = sadd.s32 %s391, 1
      %p395 = scmp.eq.s32.totalorder %s37, 1
      %p396 = scmp.ne.s32.totalorder %s391, %s393
      %p397 = scmp.eq.s32.totalorder %s37, 0
      %p398 = por %p396, %p397
      %p399 = scmp.ne.s32.totalorder %s391, %s393
      %p400 = scmp.eq.s32.totalorder %s42, 1
      %p401 = por %p399, %p400
      %p402 = scmp.ne.s32.totalorder %s393, %s394
      %p403 = scmp.eq.s32.totalorder %s42, 0
      %p404 = por %p402, %p403
      %p405 = scmp.ne.s32.totalorder %s393, %s394
      %p406 = scmp.eq.s32.totalorder %s43, 1
      %p407 = por %p405, %p406
      %p409 = scmp.ne.s32.totalorder %s394, %s408
      %p410 = scmp.eq.s32.totalorder %s43, 0
      %p411 = por %p409, %p410
      %s413 = sadd.s32 %s412, 1
      %p416 = scmp.eq.s32.totalorder %s37, 1
      %p417 = scmp.ne.s32.totalorder %s412, %s414
      %p418 = scmp.eq.s32.totalorder %s37, 0
      %p419 = por %p417, %p418
      %p420 = scmp.ne.s32.totalorder %s412, %s414
      %p421 = scmp.eq.s32.totalorder %s42, 1
      %p422 = por %p420, %p421
      %p423 = scmp.ne.s32.totalorder %s414, %s415
      %p424 = scmp.eq.s32.totalorder %s42, 0
      %p425 = por %p423, %p424
      %p426 = scmp.ne.s32.totalorder %s414, %s415
      %p427 = scmp.eq.s32.totalorder %s43, 1
      %p428 = por %p426, %p427
      %p430 = scmp.ne.s32.totalorder %s415, %s429
      %p431 = scmp.eq.s32.totalorder %s43, 0
      %p432 = por %p430, %p431
      %s434 = sadd.s32 %s433, 1
      %p437 = scmp.eq.s32.totalorder %s37, 1
      %p438 = scmp.ne.s32.totalorder %s433, %s435
      %p439 = scmp.eq.s32.totalorder %s37, 0
      %p440 = por %p438, %p439
      %p441 = scmp.ne.s32.totalorder %s433, %s435
      %p442 = scmp.eq.s32.totalorder %s42, 1
      %p443 = por %p441, %p442
      %p444 = scmp.ne.s32.totalorder %s435, %s436
      %p445 = scmp.eq.s32.totalorder %s42, 0
      %p446 = por %p444, %p445
      %p447 = scmp.ne.s32.totalorder %s435, %s436
      %p448 = scmp.eq.s32.totalorder %s43, 1
      %p449 = por %p447, %p448
      %p451 = scmp.ne.s32.totalorder %s436, %s450
      %p452 = scmp.eq.s32.totalorder %s43, 0
      %p453 = por %p451, %p452
      %s455 = sadd.s32 %s454, 1
      %p458 = scmp.eq.s32.totalorder %s37, 1
      %p459 = scmp.ne.s32.totalorder %s454, %s456
      %p460 = scmp.eq.s32.totalorder %s37, 0
      %p461 = por %p459, %p460
      %p462 = scmp.ne.s32.totalorder %s454, %s456
      %p463 = scmp.eq.s32.totalorder %s42, 1
      %p464 = por %p462, %p463
      %p465 = scmp.ne.s32.totalorder %s456, %s457
      %p466 = scmp.eq.s32.totalorder %s42, 0
      %p467 = por %p465, %p466
      %p468 = scmp.ne.s32.totalorder %s456, %s457
      %p469 = scmp.eq.s32.totalorder %s43, 1
      %p470 = por %p468, %p469
      %p472 = scmp.ne.s32.totalorder %s457, %s471
      %p473 = scmp.eq.s32.totalorder %s43, 0
      %p474 = por %p472, %p473
      %s476 = sadd.s32 %s475, 1
      %p479 = scmp.eq.s32.totalorder %s37, 1
      %p480 = scmp.ne.s32.totalorder %s475, %s477
      %p481 = scmp.eq.s32.totalorder %s37, 0
      %p482 = por %p480, %p481
      %p483 = scmp.ne.s32.totalorder %s475, %s477
      %p484 = scmp.eq.s32.totalorder %s42, 1
      %p485 = por %p483, %p484
      %p486 = scmp.ne.s32.totalorder %s477, %s478
      %p487 = scmp.eq.s32.totalorder %s42, 0
      %p488 = por %p486, %p487
      %p489 = scmp.ne.s32.totalorder %s477, %s478
      %p490 = scmp.eq.s32.totalorder %s43, 1
      %p491 = por %p489, %p490
      %p493 = scmp.ne.s32.totalorder %s478, %s492
      %p494 = scmp.eq.s32.totalorder %s43, 0
      %p495 = por %p493, %p494
      %s497 = sadd.s32 %s496, 1
      %p500 = scmp.eq.s32.totalorder %s37, 1
      %p501 = scmp.ne.s32.totalorder %s496, %s498
      %p502 = scmp.eq.s32.totalorder %s37, 0
      %p503 = por %p501, %p502
      %p504 = scmp.ne.s32.totalorder %s496, %s498
      %p505 = scmp.eq.s32.totalorder %s42, 1
      %p506 = por %p504, %p505
      %p507 = scmp.ne.s32.totalorder %s498, %s499
      %p508 = scmp.eq.s32.totalorder %s42, 0
      %p509 = por %p507, %p508
      %p510 = scmp.ne.s32.totalorder %s498, %s499
      %p511 = scmp.eq.s32.totalorder %s43, 1
      %p512 = por %p510, %p511
      %p514 = scmp.ne.s32.totalorder %s499, %s513
      %p515 = scmp.eq.s32.totalorder %s43, 0
      %p516 = por %p514, %p515
      %s518 = sadd.s32 %s517, 1
      %p521 = scmp.eq.s32.totalorder %s37, 1
      %p522 = scmp.ne.s32.totalorder %s517, %s519
      %p523 = scmp.eq.s32.totalorder %s37, 0
      %p524 = por %p522, %p523
      %p525 = scmp.ne.s32.totalorder %s517, %s519
      %p526 = scmp.eq.s32.totalorder %s42, 1
      %p527 = por %p525, %p526
      %p528 = scmp.ne.s32.totalorder %s519, %s520
      %p529 = scmp.eq.s32.totalorder %s42, 0
      %p530 = por %p528, %p529
      %p531 = scmp.ne.s32.totalorder %s519, %s520
      %p532 = scmp.eq.s32.totalorder %s43, 1
      %p533 = por %p531, %p532
      %p535 = scmp.ne.s32.totalorder %s520, %s534
      %p536 = scmp.eq.s32.totalorder %s43, 0
      %p537 = por %p535, %p536
      %s539 = sadd.s32 %s538, 1
      %p542 = scmp.eq.s32.totalorder %s37, 1
      %p543 = scmp.ne.s32.totalorder %s538, %s540
      %p544 = scmp.eq.s32.totalorder %s37, 0
      %p545 = por %p543, %p544
      %p546 = scmp.ne.s32.totalorder %s538, %s540
      %p547 = scmp.eq.s32.totalorder %s42, 1
      %p548 = por %p546, %p547
      %p549 = scmp.ne.s32.totalorder %s540, %s541
      %p550 = scmp.eq.s32.totalorder %s42, 0
      %p551 = por %p549, %p550
      %p552 = scmp.ne.s32.totalorder %s540, %s541
      %p553 = scmp.eq.s32.totalorder %s43, 1
      %p554 = por %p552, %p553
      %p556 = scmp.ne.s32.totalorder %s541, %s555
      %p557 = scmp.eq.s32.totalorder %s43, 0
      %p558 = por %p556, %p557
      %s560 = sadd.s32 %s559, 1
      %p563 = scmp.eq.s32.totalorder %s37, 1
      %p564 = scmp.ne.s32.totalorder %s559, %s561
      %p565 = scmp.eq.s32.totalorder %s37, 0
      %p566 = por %p564, %p565
      %p567 = scmp.ne.s32.totalorder %s559, %s561
      %p568 = scmp.eq.s32.totalorder %s42, 1
      %p569 = por %p567, %p568
      %p570 = scmp.ne.s32.totalorder %s561, %s562
      %p571 = scmp.eq.s32.totalorder %s42, 0
      %p572 = por %p570, %p571
      %p573 = scmp.ne.s32.totalorder %s561, %s562
      %p574 = scmp.eq.s32.totalorder %s43, 1
      %p575 = por %p573, %p574
      %p577 = scmp.ne.s32.totalorder %s562, %s576
      %p578 = scmp.eq.s32.totalorder %s43, 0
      %p579 = por %p577, %p578
      %s581 = sadd.s32 %s580, 1
      %p584 = scmp.eq.s32.totalorder %s37, 1
      %p585 = scmp.ne.s32.totalorder %s580, %s582
      %p586 = scmp.eq.s32.totalorder %s37, 0
      %p587 = por %p585, %p586
      %p588 = scmp.ne.s32.totalorder %s580, %s582
      %p589 = scmp.eq.s32.totalorder %s42, 1
      %p590 = por %p588, %p589
      %p591 = scmp.ne.s32.totalorder %s582, %s583
      %p592 = scmp.eq.s32.totalorder %s42, 0
      %p593 = por %p591, %p592
      %p594 = scmp.ne.s32.totalorder %s582, %s583
      %p595 = scmp.eq.s32.totalorder %s43, 1
      %p596 = por %p594, %p595
      %p598 = scmp.ne.s32.totalorder %s583, %s597
      %p599 = scmp.eq.s32.totalorder %s43, 0
      %p600 = por %p598, %p599
      %s602 = sadd.s32 %s601, 1
      %p605 = scmp.eq.s32.totalorder %s37, 1
      %p606 = scmp.ne.s32.totalorder %s601, %s603
      %p607 = scmp.eq.s32.totalorder %s37, 0
      %p608 = por %p606, %p607
      %p609 = scmp.ne.s32.totalorder %s601, %s603
      %p610 = scmp.eq.s32.totalorder %s42, 1
      %p611 = por %p609, %p610
      %p612 = scmp.ne.s32.totalorder %s603, %s604
      %p613 = scmp.eq.s32.totalorder %s42, 0
      %p614 = por %p612, %p613
      %p615 = scmp.ne.s32.totalorder %s603, %s604
      %p616 = scmp.eq.s32.totalorder %s43, 1
      %p617 = por %p615, %p616
      %p619 = scmp.ne.s32.totalorder %s604, %s618
      %p620 = scmp.eq.s32.totalorder %s43, 0
      %p621 = por %p619, %p620
      %s623 = sadd.s32 %s622, 1
      %p626 = scmp.eq.s32.totalorder %s37, 1
      %p627 = scmp.ne.s32.totalorder %s622, %s624
      %p628 = scmp.eq.s32.totalorder %s37, 0
      %p629 = por %p627, %p628
      %p630 = scmp.ne.s32.totalorder %s622, %s624
      %p631 = scmp.eq.s32.totalorder %s42, 1
      %p632 = por %p630, %p631
      %p633 = scmp.ne.s32.totalorder %s624, %s625
      %p634 = scmp.eq.s32.totalorder %s42, 0
      %p635 = por %p633, %p634
      %p636 = scmp.ne.s32.totalorder %s624, %s625
      %p637 = scmp.eq.s32.totalorder %s43, 1
      %p638 = por %p636, %p637
      %p640 = scmp.ne.s32.totalorder %s625, %s639
      %p641 = scmp.eq.s32.totalorder %s43, 0
      %p642 = por %p640, %p641
      %s643 = ssub.s32 %s37, %s44
      %p644 = scmp.eq.s32.totalorder %s643, 0
      %s646 = sadd.s32 %s645, 1
      %s647 = scalar_select %p644, %s645, %s646
      %p650 = pneg %p644
      %p651 = scmp.eq.s32.totalorder %s37, 1
      %p652 = por %p650, %p651
      %p653 = scmp.ne.s32.totalorder %s645, %s648
      %p654 = scmp.eq.s32.totalorder %s37, 0
      %p655 = por %p653, %p654
      %p656 = scmp.ne.s32.totalorder %s645, %s648
      %p657 = scmp.eq.s32.totalorder %s42, 1
      %p658 = por %p656, %p657
      %p659 = scmp.ne.s32.totalorder %s648, %s649
      %p660 = scmp.eq.s32.totalorder %s42, 0
      %p661 = por %p659, %p660
      %p662 = scmp.ne.s32.totalorder %s648, %s649
      %p663 = scmp.eq.s32.totalorder %s43, 1
      %p664 = por %p662, %p663
      %p666 = scmp.ne.s32.totalorder %s649, %s665
      %p667 = scmp.eq.s32.totalorder %s43, 0
      %p668 = por %p666, %p667
      %p669 = scmp.le.s32.totalorder 1, %s37
      %p670 = scmp.lt.s32.totalorder %s37, 3
      %p671 = pnand %p669, %p670
      %p672 = pneg %p671
      // Predicated region
      $region9: #{tpu_custom_call.1} parent=5 // pred_check
        _
      $region10: #{tpu_custom_call.1} parent=5 // pred_check_branch
        %674 = sbr.rel (%p671) target = $region12
      $region11: #{tpu_custom_call.1} parent=5 // pred_region
        %s675 = ssub.s32 %s37, 1
        // Predicated region
        $region13: #{tpu_custom_call.1} parent=11 // pred_check
          %p676 = pneg %p110
        $region14: #{tpu_custom_call.1} parent=11 // pred_check_branch
          %678 = sbr.rel (%p676) target = $region16
        $region15: #{tpu_custom_call.1} parent=11 // pred_region
          _
        $region16: #{tpu_custom_call.1} parent=11 // pred_fallthru
          _
        // Predicated region
        $region17: #{tpu_custom_call.1} parent=11 // pred_check
          %p679 = pneg %p131
        $region18: #{tpu_custom_call.1} parent=11 // pred_check_branch
          %681 = sbr.rel (%p679) target = $region20
        $region19: #{tpu_custom_call.1} parent=11 // pred_region
          _
        $region20: #{tpu_custom_call.1} parent=11 // pred_fallthru
          _
        // Predicated region
        $region21: #{tpu_custom_call.1} parent=11 // pred_check
          %p682 = pneg %p152
        $region22: #{tpu_custom_call.1} parent=11 // pred_check_branch
          %684 = sbr.rel (%p682) target = $region24
        $region23: #{tpu_custom_call.1} parent=11 // pred_region
          _
        $region24: #{tpu_custom_call.1} parent=11 // pred_fallthru
          _
        // Predicated region
        $region25: #{tpu_custom_call.1} parent=11 // pred_check
          %p685 = pneg %p173
        $region26: #{tpu_custom_call.1} parent=11 // pred_check_branch
          %687 = sbr.rel (%p685) target = $region28
        $region27: #{tpu_custom_call.1} parent=11 // pred_region
          _
        $region28: #{tpu_custom_call.1} parent=11 // pred_fallthru
          _
        // Predicated region
        $region29: #{tpu_custom_call.1} parent=11 // pred_check
          %p688 = pneg %p194
        $region30: #{tpu_custom_call.1} parent=11 // pred_check_branch
          %690 = sbr.rel (%p688) target = $region32
        $region31: #{tpu_custom_call.1} parent=11 // pred_region
          _
        $region32: #{tpu_custom_call.1} parent=11 // pred_fallthru
          _
        // Predicated region
        $region33: #{tpu_custom_call.1} parent=11 // pred_check
          %p691 = pneg %p215
        $region34: #{tpu_custom_call.1} parent=11 // pred_check_branch
          %693 = sbr.rel (%p691) target = $region36
        $region35: #{tpu_custom_call.1} parent=11 // pred_region
          _
        $region36: #{tpu_custom_call.1} parent=11 // pred_fallthru
          _
        // Predicated region
        $region37: #{tpu_custom_call.1} parent=11 // pred_check
          %p694 = pneg %p236
        $region38: #{tpu_custom_call.1} parent=11 // pred_check_branch
          %696 = sbr.rel (%p694) target = $region40
        $region39: #{tpu_custom_call.1} parent=11 // pred_region
          _
        $region40: #{tpu_custom_call.1} parent=11 // pred_fallthru
          _
        // Predicated region
        $region41: #{tpu_custom_call.1} parent=11 // pred_check
          %p697 = pneg %p257
        $region42: #{tpu_custom_call.1} parent=11 // pred_check_branch
          %699 = sbr.rel (%p697) target = $region44
        $region43: #{tpu_custom_call.1} parent=11 // pred_region
          _
        $region44: #{tpu_custom_call.1} parent=11 // pred_fallthru
          _
        // Predicated region
        $region45: #{tpu_custom_call.1} parent=11 // pred_check
          %p700 = pneg %p278
        $region46: #{tpu_custom_call.1} parent=11 // pred_check_branch
          %702 = sbr.rel (%p700) target = $region48
        $region47: #{tpu_custom_call.1} parent=11 // pred_region
          _
        $region48: #{tpu_custom_call.1} parent=11 // pred_fallthru
          _
        // Predicated region
        $region49: #{tpu_custom_call.1} parent=11 // pred_check
          %p703 = pneg %p299
        $region50: #{tpu_custom_call.1} parent=11 // pred_check_branch
          %705 = sbr.rel (%p703) target = $region52
        $region51: #{tpu_custom_call.1} parent=11 // pred_region
          _
        $region52: #{tpu_custom_call.1} parent=11 // pred_fallthru
          _
        // Predicated region
        $region53: #{tpu_custom_call.1} parent=11 // pred_check
          %p706 = pneg %p320
        $region54: #{tpu_custom_call.1} parent=11 // pred_check_branch
          %708 = sbr.rel (%p706) target = $region56
        $region55: #{tpu_custom_call.1} parent=11 // pred_region
          _
        $region56: #{tpu_custom_call.1} parent=11 // pred_fallthru
          _
        // Predicated region
        $region57: #{tpu_custom_call.1} parent=11 // pred_check
          %p709 = pneg %p341
        $region58: #{tpu_custom_call.1} parent=11 // pred_check_branch
          %711 = sbr.rel (%p709) target = $region60
        $region59: #{tpu_custom_call.1} parent=11 // pred_region
          _
        $region60: #{tpu_custom_call.1} parent=11 // pred_fallthru
          _
        // Predicated region
        $region61: #{tpu_custom_call.1} parent=11 // pred_check
          %p712 = pneg %p362
        $region62: #{tpu_custom_call.1} parent=11 // pred_check_branch
          %714 = sbr.rel (%p712) target = $region64
        $region63: #{tpu_custom_call.1} parent=11 // pred_region
          _
        $region64: #{tpu_custom_call.1} parent=11 // pred_fallthru
          _
        // Predicated region
        $region65: #{tpu_custom_call.1} parent=11 // pred_check
          %p715 = pneg %p383
        $region66: #{tpu_custom_call.1} parent=11 // pred_check_branch
          %717 = sbr.rel (%p715) target = $region68
        $region67: #{tpu_custom_call.1} parent=11 // pred_region
          _
        $region68: #{tpu_custom_call.1} parent=11 // pred_fallthru
          _
        // Predicated region
        $region69: #{tpu_custom_call.1} parent=11 // pred_check
          %p718 = pneg %p404
        $region70: #{tpu_custom_call.1} parent=11 // pred_check_branch
          %720 = sbr.rel (%p718) target = $region72
        $region71: #{tpu_custom_call.1} parent=11 // pred_region
          _
        $region72: #{tpu_custom_call.1} parent=11 // pred_fallthru
          _
        // Predicated region
        $region73: #{tpu_custom_call.1} parent=11 // pred_check
          %p721 = pneg %p425
        $region74: #{tpu_custom_call.1} parent=11 // pred_check_branch
          %723 = sbr.rel (%p721) target = $region76
        $region75: #{tpu_custom_call.1} parent=11 // pred_region
          _
        $region76: #{tpu_custom_call.1} parent=11 // pred_fallthru
          _
        // Predicated region
        $region77: #{tpu_custom_call.1} parent=11 // pred_check
          %p724 = pneg %p446
        $region78: #{tpu_custom_call.1} parent=11 // pred_check_branch
          %726 = sbr.rel (%p724) target = $region80
        $region79: #{tpu_custom_call.1} parent=11 // pred_region
          _
        $region80: #{tpu_custom_call.1} parent=11 // pred_fallthru
          _
        // Predicated region
        $region81: #{tpu_custom_call.1} parent=11 // pred_check
          %p727 = pneg %p467
        $region82: #{tpu_custom_call.1} parent=11 // pred_check_branch
          %729 = sbr.rel (%p727) target = $region84
        $region83: #{tpu_custom_call.1} parent=11 // pred_region
          _
        $region84: #{tpu_custom_call.1} parent=11 // pred_fallthru
          _
        // Predicated region
        $region85: #{tpu_custom_call.1} parent=11 // pred_check
          %p730 = pneg %p488
        $region86: #{tpu_custom_call.1} parent=11 // pred_check_branch
          %732 = sbr.rel (%p730) target = $region88
        $region87: #{tpu_custom_call.1} parent=11 // pred_region
          _
        $region88: #{tpu_custom_call.1} parent=11 // pred_fallthru
          _
        // Predicated region
        $region89: #{tpu_custom_call.1} parent=11 // pred_check
          %p733 = pneg %p509
        $region90: #{tpu_custom_call.1} parent=11 // pred_check_branch
          %735 = sbr.rel (%p733) target = $region92
        $region91: #{tpu_custom_call.1} parent=11 // pred_region
          _
        $region92: #{tpu_custom_call.1} parent=11 // pred_fallthru
          _
        // Predicated region
        $region93: #{tpu_custom_call.1} parent=11 // pred_check
          %p736 = pneg %p530
        $region94: #{tpu_custom_call.1} parent=11 // pred_check_branch
          %738 = sbr.rel (%p736) target = $region96
        $region95: #{tpu_custom_call.1} parent=11 // pred_region
          _
        $region96: #{tpu_custom_call.1} parent=11 // pred_fallthru
          _
        // Predicated region
        $region97: #{tpu_custom_call.1} parent=11 // pred_check
          %p739 = pneg %p551
        $region98: #{tpu_custom_call.1} parent=11 // pred_check_branch
          %741 = sbr.rel (%p739) target = $region100
        $region99: #{tpu_custom_call.1} parent=11 // pred_region
          _
        $region100: #{tpu_custom_call.1} parent=11 // pred_fallthru
          _
        // Predicated region
        $region101: #{tpu_custom_call.1} parent=11 // pred_check
          %p742 = pneg %p572
        $region102: #{tpu_custom_call.1} parent=11 // pred_check_branch
          %744 = sbr.rel (%p742) target = $region104
        $region103: #{tpu_custom_call.1} parent=11 // pred_region
          _
        $region104: #{tpu_custom_call.1} parent=11 // pred_fallthru
          _
        // Predicated region
        $region105: #{tpu_custom_call.1} parent=11 // pred_check
          %p745 = pneg %p593
        $region106: #{tpu_custom_call.1} parent=11 // pred_check_branch
          %747 = sbr.rel (%p745) target = $region108
        $region107: #{tpu_custom_call.1} parent=11 // pred_region
          _
        $region108: #{tpu_custom_call.1} parent=11 // pred_fallthru
          _
        // Predicated region
        $region109: #{tpu_custom_call.1} parent=11 // pred_check
          %p748 = pneg %p614
        $region110: #{tpu_custom_call.1} parent=11 // pred_check_branch
          %750 = sbr.rel (%p748) target = $region112
        $region111: #{tpu_custom_call.1} parent=11 // pred_region
          _
        $region112: #{tpu_custom_call.1} parent=11 // pred_fallthru
          _
        // Predicated region
        $region113: #{tpu_custom_call.1} parent=11 // pred_check
          %p751 = pneg %p635
        $region114: #{tpu_custom_call.1} parent=11 // pred_check_branch
          %753 = sbr.rel (%p751) target = $region116
        $region115: #{tpu_custom_call.1} parent=11 // pred_region
          _
        $region116: #{tpu_custom_call.1} parent=11 // pred_fallthru
          _
      $region12: #{tpu_custom_call.1} parent=5 // pred_fallthru
        _
      %p754 = scmp.lt.s32.totalorder %s37, 2
      // Predicated region
      $region117: #{tpu_custom_call.1} parent=5 // pred_check
        %p755 = pneg %p754
      $region118: #{tpu_custom_call.1} parent=5 // pred_check_branch
        %757 = sbr.rel (%p755) target = $region120
      $region119: #{tpu_custom_call.1} parent=5 // pred_region
        // Predicated region
        $region121: #{tpu_custom_call.1} parent=119 // pred_check
          %p758 = pneg %p57
        $region122: #{tpu_custom_call.1} parent=119 // pred_check_branch
          %760 = sbr.rel (%p758) target = $region124
        $region123: #{tpu_custom_call.1} parent=119 // pred_region
          %p761 = scmp.lt.s32.totalorder %s37, 1
          %s762 = scalar_select %p761, %s37, 1
          %s763 = smul.addr %s762, 8
          %s764 = scalar_lea.vmem %s0, %s763
        $region124: #{tpu_custom_call.1} parent=119 // pred_fallthru
          _
        // Predicated region
        $region125: #{tpu_custom_call.1} parent=119 // pred_check
          %p765 = pneg %p83
        $region126: #{tpu_custom_call.1} parent=119 // pred_check_branch
          %767 = sbr.rel (%p765) target = $region128
        $region127: #{tpu_custom_call.1} parent=119 // pred_region
          %p768 = scmp.lt.s32.totalorder %s37, 1
          %s769 = scalar_select %p768, %s37, 1
          %s770 = smul.addr %s769, 8
          %s771 = scalar_lea.vmem %s1, %s770
        $region128: #{tpu_custom_call.1} parent=119 // pred_fallthru
          _
      $region120: #{tpu_custom_call.1} parent=5 // pred_fallthru
        _
      %p772 = scmp.le.s32.totalorder 1, %s37
      %p773 = scmp.lt.s32.totalorder %s37, 3
      %p774 = pnand %p772, %p773
      %p775 = pneg %p774
      // Predicated region
      $region129: #{tpu_custom_call.1} parent=5 // pred_check
        _
      $region130: #{tpu_custom_call.1} parent=5 // pred_check_branch
        %777 = sbr.rel (%p774) target = $region132
      $region131: #{tpu_custom_call.1} parent=5 // pred_region
        %s778 = ssub.s32 %s37, 1
        %p779 = scmp.lt.s32.totalorder %s42, 1
        %s780 = scalar_select %p779, %s42, 1
        %s781 = smul.addr %s780, 8
        %s782 = scalar_lea.vmem %s0, %s781
        %p783 = pneg %p63
        %p784 = pneg %p60
        %p785 = scmp.lt.s32.totalorder %s42, 1
        %s786 = scalar_select %p785, %s42, 1
        %s787 = smul.addr %s786, 8
        %s788 = scalar_lea.vmem %s1, %s787
        %p789 = pneg %p89
        %p790 = pneg %p86
        %p791 = pneg %p110
        %p792 = pneg %p107
        %p793 = pneg %p131
        %p794 = pneg %p128
        %p795 = pneg %p152
        %p796 = pneg %p149
        %p797 = pneg %p173
        %p798 = pneg %p170
        %p799 = pneg %p194
        %p800 = pneg %p191
        %p801 = pneg %p215
        %p802 = pneg %p212
        %p803 = pneg %p236
        %p804 = pneg %p233
        %p805 = pneg %p257
        %p806 = pneg %p254
        %p807 = pneg %p278
        %p808 = pneg %p275
        %p809 = pneg %p299
        %p810 = pneg %p296
        %p811 = pneg %p320
        %p812 = pneg %p317
        %p813 = pneg %p341
        %p814 = pneg %p338
        %p815 = pneg %p362
        %p816 = pneg %p359
        %p817 = pneg %p383
        %p818 = pneg %p380
        %p819 = pneg %p404
        %p820 = pneg %p401
        %p821 = pneg %p425
        %p822 = pneg %p422
        %p823 = pneg %p446
        %p824 = pneg %p443
        %p825 = pneg %p467
        %p826 = pneg %p464
        %p827 = pneg %p488
        %p828 = pneg %p485
        %p829 = pneg %p509
        %p830 = pneg %p506
        %p831 = pneg %p530
        %p832 = pneg %p527
        %p833 = pneg %p551
        %p834 = pneg %p548
        %p835 = pneg %p572
        %p836 = pneg %p569
        %p837 = pneg %p593
        %p838 = pneg %p590
        %p839 = pneg %p614
        %p840 = pneg %p611
        %p841 = pneg %p635
        %p842 = pneg %p632
        %p843 = pneg %p661
        %p844 = pneg %p658
        %s845 = sand.u32 %s648, 1
        %s846 = scalar_lea.sflag [#allocation3], %s845
        %s847 = sand.u32 %s648, 1
        %s848 = smul.addr %s847, 8
        %s849 = scalar_lea.vmem [#allocation2], %s848
        %p850 = scmp.lt.s32.totalorder %s42, 1
        %s851 = scalar_select %p850, %s42, 1
        %s852 = smul.addr %s851, 8
        %s853 = scalar_lea.vmem %s0, %s852
        %p854 = scmp.lt.s32.totalorder %s42, 1
        %s855 = scalar_select %p854, %s42, 1
        %s856 = smul.addr %s855, 8
        %s857 = scalar_lea.vmem %s1, %s856
        %v859 = vld [vmem:[%s853] sm:$0xff]
        %v860 = vld [vmem:[%s857] sm:$0xff]
        %v861 = vlaneseq
        %v862 = vshrl.u32 %v861, 7
        %v863 = vlaneseq
        %v864 = vand.u32 %v863, 127
        %vm865 = vcmp.ge.s32.totalorder %v862, %v864
        %v866 = vpack.c.bf16 %v859, %v859
        %v867 = vld [vmem:[%s2] sm:$0xf]
        %v868 = vld [vmem:[%s2 + $0x4] sm:$0xf]
        %v869 = vld [vmem:[%s2 + $0x8] sm:$0xf]
        %v870 = vld [vmem:[%s2 + $0xc] sm:$0xf]
        %v871 = vld [vmem:[%s2 + $0x10] sm:$0xf]
        %v872 = vld [vmem:[%s2 + $0x14] sm:$0xf]
        %v873 = vld [vmem:[%s2 + $0x18] sm:$0xf]
        %v874 = vld [vmem:[%s2 + $0x1c] sm:$0xf]
        %v875 = vld [vmem:[%s2 + $0x20] sm:$0xf]
        %v876 = vld [vmem:[%s2 + $0x24] sm:$0xf]
        %v877 = vld [vmem:[%s2 + $0x28] sm:$0xf]
        %v878 = vld [vmem:[%s2 + $0x2c] sm:$0xf]
        %v879 = vld [vmem:[%s2 + $0x30] sm:$0xf]
        %v880 = vld [vmem:[%s2 + $0x34] sm:$0xf]
        %v881 = vld [vmem:[%s2 + $0x38] sm:$0xf]
        %v882 = vld [vmem:[%s2 + $0x3c] sm:$0xf]
        %v883 = vld [vmem:[%s2 + $0x40] sm:$0xf]
        %v884 = vld [vmem:[%s2 + $0x44] sm:$0xf]
        %v885 = vld [vmem:[%s2 + $0x48] sm:$0xf]
        %v886 = vld [vmem:[%s2 + $0x4c] sm:$0xf]
        %v887 = vld [vmem:[%s2 + $0x50] sm:$0xf]
        %v888 = vld [vmem:[%s2 + $0x54] sm:$0xf]
        %v889 = vld [vmem:[%s2 + $0x58] sm:$0xf]
        %v890 = vld [vmem:[%s2 + $0x5c] sm:$0xf]
        %v891 = vld [vmem:[%s2 + $0x60] sm:$0xf]
        %v892 = vld [vmem:[%s2 + $0x64] sm:$0xf]
        %v893 = vld [vmem:[%s2 + $0x68] sm:$0xf]
        %v894 = vld [vmem:[%s2 + $0x6c] sm:$0xf]
        %v895 = vld [vmem:[%s2 + $0x70] sm:$0xf]
        %v896 = vld [vmem:[%s2 + $0x74] sm:$0xf]
        %v897 = vld [vmem:[%s2 + $0x78] sm:$0xf]
        %v898 = vld [vmem:[%s2 + $0x7c] sm:$0xf]
        %v899 = vld [vmem:[%s2 + $0x80] sm:$0xf]
        %v900 = vld [vmem:[%s2 + $0x84] sm:$0xf]
        %v901 = vld [vmem:[%s2 + $0x88] sm:$0xf]
        %v902 = vld [vmem:[%s2 + $0x8c] sm:$0xf]
        %v903 = vld [vmem:[%s2 + $0x90] sm:$0xf]
        %v904 = vld [vmem:[%s2 + $0x94] sm:$0xf]
        %v905 = vld [vmem:[%s2 + $0x98] sm:$0xf]
        %v906 = vld [vmem:[%s2 + $0x9c] sm:$0xf]
        %v907 = vld [vmem:[%s2 + $0xa0] sm:$0xf]
        %v908 = vld [vmem:[%s2 + $0xa4] sm:$0xf]
        %v909 = vld [vmem:[%s2 + $0xa8] sm:$0xf]
        %v910 = vld [vmem:[%s2 + $0xac] sm:$0xf]
        %v911 = vld [vmem:[%s2 + $0xb0] sm:$0xf]
        %v912 = vld [vmem:[%s2 + $0xb4] sm:$0xf]
        %v913 = vld [vmem:[%s2 + $0xb8] sm:$0xf]
        %v914 = vld [vmem:[%s2 + $0xbc] sm:$0xf]
        %v915 = vld [vmem:[%s2 + $0xc0] sm:$0xf]
        %v916 = vld [vmem:[%s2 + $0xc4] sm:$0xf]
        %v917 = vld [vmem:[%s2 + $0xc8] sm:$0xf]
        %v918 = vld [vmem:[%s2 + $0xcc] sm:$0xf]
        %v919 = vld [vmem:[%s2 + $0xd0] sm:$0xf]
        %v920 = vld [vmem:[%s2 + $0xd4] sm:$0xf]
        %v921 = vld [vmem:[%s2 + $0xd8] sm:$0xf]
        %v922 = vld [vmem:[%s2 + $0xdc] sm:$0xf]
        %v923 = vld [vmem:[%s2 + $0xe0] sm:$0xf]
        %v924 = vld [vmem:[%s2 + $0xe4] sm:$0xf]
        %v925 = vld [vmem:[%s2 + $0xe8] sm:$0xf]
        %v926 = vld [vmem:[%s2 + $0xec] sm:$0xf]
        %v927 = vld [vmem:[%s2 + $0xf0] sm:$0xf]
        %v928 = vld [vmem:[%s2 + $0xf4] sm:$0xf]
        %v929 = vld [vmem:[%s2 + $0xf8] sm:$0xf]
        %v930 = vld [vmem:[%s2 + $0xfc] sm:$0xf]
        %v931 = vld [vmem:[%s6] sm:$0x1]
        %v932 = vld [vmem:[%s6 + $0x1] sm:$0x1]
        %v933 = vld [vmem:[%s6 + $0x2] sm:$0x1]
        %v934 = vld [vmem:[%s6 + $0x3] sm:$0x1]
        %v939 = vlaneseq
        %v940 = vshrl.u32 %v939, 7
        %v941 = vsub.s32 0, %v940
        %v942 = vrot.slane %v931, %v941
        %v943 = vlaneseq
        %v944 = vshrl.u32 %v943, 7
        %v945 = vsub.s32 0, %v944
        %v946 = vrot.slane %v932, %v945
        %v947 = vlaneseq
        %v948 = vshrl.u32 %v947, 7
        %v949 = vsub.s32 0, %v948
        %v950 = vrot.slane %v933, %v949
        %v951 = vlaneseq
        %v952 = vshrl.u32 %v951, 7
        %v953 = vsub.s32 0, %v952
        %v954 = vrot.slane %v934, %v953
        %v975 = vunpack.c.l.b16 %v867
        %v976 = vunpack.c.l.b16 %v868
        %v977 = vunpack.c.l.b16 %v869
        %v978 = vunpack.c.l.b16 %v870
        %v979 = vunpack.c.l.b16 %v871
        %v980 = vunpack.c.l.b16 %v872
        %v981 = vunpack.c.l.b16 %v873
        %v982 = vunpack.c.l.b16 %v874
        %v983 = vunpack.c.l.b16 %v875
        %v984 = vunpack.c.l.b16 %v876
        %v985 = vunpack.c.l.b16 %v877
        %v986 = vunpack.c.l.b16 %v878
        %v987 = vunpack.c.l.b16 %v879
        %v988 = vunpack.c.l.b16 %v880
        %v989 = vunpack.c.l.b16 %v881
        %v990 = vunpack.c.l.b16 %v882
        %v991 = vpack.c.b16 %v976, %v975
        %v992 = vpack.c.b16 %v978, %v977
        %v993 = vpack.c.b16 %v980, %v979
        %v994 = vpack.c.b16 %v982, %v981
        %v995 = vpack.c.b16 %v984, %v983
        %v996 = vpack.c.b16 %v986, %v985
        %v997 = vpack.c.b16 %v988, %v987
        %v998 = vpack.c.b16 %v990, %v989
        %1007 = vmatprep.subr.bf16.mxu0 0
        %1008 = vmatpush1.bf16.msra.mxu0 %v998
        %1009 = vmatprep.subr.bf16.mxu0 0
        %1010 = vmatpush1.bf16.msra.mxu0 %v997
        %1011 = vmatprep.subr.bf16.mxu0 0
        %1012 = vmatpush1.bf16.msra.mxu0 %v996
        %1013 = vmatprep.subr.bf16.mxu0 0
        %1014 = vmatpush1.bf16.msra.mxu0 %v995
        %1015 = vmatprep.subr.bf16.mxu0 0
        %1016 = vmatpush1.bf16.msra.mxu0 %v994
        %1017 = vmatprep.subr.bf16.mxu0 0
        %1018 = vmatpush1.bf16.msra.mxu0 %v993
        %1019 = vmatprep.subr.bf16.mxu0 0
        %1020 = vmatpush1.bf16.msra.mxu0 %v992
        %1021 = vmatprep.subr.bf16.mxu0 0
        %1022 = vmatpush1.bf16.msra.mxu0 %v991
        %1023 = vmatprep.subr.bf16.mxu0 0
        %1024 = vmatpush2.bf16.msra.mxu0 0
        %1025 = vmatprep.subr.bf16.mxu0 0
        %1026 = vmatpush2.bf16.msra.mxu0 0
        %1027 = vmatprep.subr.bf16.mxu0 0
        %1028 = vmatpush2.bf16.msra.mxu0 0
        %1029 = vmatprep.subr.bf16.mxu0 0
        %1030 = vmatpush2.bf16.msra.mxu0 0
        %1031 = vmatprep.subr.bf16.mxu0 0
        %1032 = vmatpush2.bf16.msra.mxu0 0
        %1033 = vmatprep.subr.bf16.mxu0 0
        %1034 = vmatpush2.bf16.msra.mxu0 0
        %1035 = vmatprep.subr.bf16.mxu0 0
        %1036 = vmatpush2.bf16.msra.mxu0 0
        %1037 = vmatprep.subr.bf16.mxu0 0
        %1038 = vmatpush2.bf16.msra.mxu0 0
        %1039 = vmatprep.mubr.bf16.mxu0 0
        %1040 = vmatmul.mubr.bf16.gmra.mxu0 %v866
        %v1041 = vpop.f32.mrf.mxu0
        %v1042 = vadd.f32 %v942, %v1041
        %v1043 = vpop.f32.mrf.mxu0
        %v1044 = vpop.f32.mrf.mxu0
        %v1045 = vpop.f32.mrf.mxu0
        %1046 = vdwg.mxu0
        %v1063 = vunpack.c.l.b16 %v883
        %v1064 = vunpack.c.l.b16 %v884
        %v1065 = vunpack.c.l.b16 %v885
        %v1066 = vunpack.c.l.b16 %v886
        %v1067 = vunpack.c.l.b16 %v887
        %v1068 = vunpack.c.l.b16 %v888
        %v1069 = vunpack.c.l.b16 %v889
        %v1070 = vunpack.c.l.b16 %v890
        %v1071 = vunpack.c.l.b16 %v891
        %v1072 = vunpack.c.l.b16 %v892
        %v1073 = vunpack.c.l.b16 %v893
        %v1074 = vunpack.c.l.b16 %v894
        %v1075 = vunpack.c.l.b16 %v895
        %v1076 = vunpack.c.l.b16 %v896
        %v1077 = vunpack.c.l.b16 %v897
        %v1078 = vunpack.c.l.b16 %v898
        %v1079 = vpack.c.b16 %v1064, %v1063
        %v1080 = vpack.c.b16 %v1066, %v1065
        %v1081 = vpack.c.b16 %v1068, %v1067
        %v1082 = vpack.c.b16 %v1070, %v1069
        %v1083 = vpack.c.b16 %v1072, %v1071
        %v1084 = vpack.c.b16 %v1074, %v1073
        %v1085 = vpack.c.b16 %v1076, %v1075
        %v1086 = vpack.c.b16 %v1078, %v1077
        %1095 = vmatprep.subr.bf16.mxu0 0
        %1096 = vmatpush1.bf16.msra.mxu0 %v1086
        %1097 = vmatprep.subr.bf16.mxu0 0
        %1098 = vmatpush1.bf16.msra.mxu0 %v1085
        %1099 = vmatprep.subr.bf16.mxu0 0
        %1100 = vmatpush1.bf16.msra.mxu0 %v1084
        %1101 = vmatprep.subr.bf16.mxu0 0
        %1102 = vmatpush1.bf16.msra.mxu0 %v1083
        %1103 = vmatprep.subr.bf16.mxu0 0
        %1104 = vmatpush1.bf16.msra.mxu0 %v1082
        %1105 = vmatprep.subr.bf16.mxu0 0
        %1106 = vmatpush1.bf16.msra.mxu0 %v1081
        %1107 = vmatprep.subr.bf16.mxu0 0
        %1108 = vmatpush1.bf16.msra.mxu0 %v1080
        %1109 = vmatprep.subr.bf16.mxu0 0
        %1110 = vmatpush1.bf16.msra.mxu0 %v1079
        %1111 = vmatprep.subr.bf16.mxu0 0
        %1112 = vmatpush2.bf16.msra.mxu0 0
        %1113 = vmatprep.subr.bf16.mxu0 0
        %1114 = vmatpush2.bf16.msra.mxu0 0
        %1115 = vmatprep.subr.bf16.mxu0 0
        %1116 = vmatpush2.bf16.msra.mxu0 0
        %1117 = vmatprep.subr.bf16.mxu0 0
        %1118 = vmatpush2.bf16.msra.mxu0 0
        %1119 = vmatprep.subr.bf16.mxu0 0
        %1120 = vmatpush2.bf16.msra.mxu0 0
        %1121 = vmatprep.subr.bf16.mxu0 0
        %1122 = vmatpush2.bf16.msra.mxu0 0
        %1123 = vmatprep.subr.bf16.mxu0 0
        %1124 = vmatpush2.bf16.msra.mxu0 0
        %1125 = vmatprep.subr.bf16.mxu0 0
        %1126 = vmatpush2.bf16.msra.mxu0 0
        %1127 = vmatprep.mubr.bf16.mxu0 0
        %1128 = vmatmul.mubr.bf16.gmra.mxu0 %v866
        %v1129 = vpop.f32.mrf.mxu0
        %v1130 = vadd.f32 %v946, %v1129
        %v1131 = vpop.f32.mrf.mxu0
        %v1132 = vpop.f32.mrf.mxu0
        %v1133 = vpop.f32.mrf.mxu0
        %1134 = vdwg.mxu0
        %v1151 = vunpack.c.l.b16 %v899
        %v1152 = vunpack.c.l.b16 %v900
        %v1153 = vunpack.c.l.b16 %v901
        %v1154 = vunpack.c.l.b16 %v902
        %v1155 = vunpack.c.l.b16 %v903
        %v1156 = vunpack.c.l.b16 %v904
        %v1157 = vunpack.c.l.b16 %v905
        %v1158 = vunpack.c.l.b16 %v906
        %v1159 = vunpack.c.l.b16 %v907
        %v1160 = vunpack.c.l.b16 %v908
        %v1161 = vunpack.c.l.b16 %v909
        %v1162 = vunpack.c.l.b16 %v910
        %v1163 = vunpack.c.l.b16 %v911
        %v1164 = vunpack.c.l.b16 %v912
        %v1165 = vunpack.c.l.b16 %v913
        %v1166 = vunpack.c.l.b16 %v914
        %v1167 = vpack.c.b16 %v1152, %v1151
        %v1168 = vpack.c.b16 %v1154, %v1153
        %v1169 = vpack.c.b16 %v1156, %v1155
        %v1170 = vpack.c.b16 %v1158, %v1157
        %v1171 = vpack.c.b16 %v1160, %v1159
        %v1172 = vpack.c.b16 %v1162, %v1161
        %v1173 = vpack.c.b16 %v1164, %v1163
        %v1174 = vpack.c.b16 %v1166, %v1165
        %1183 = vmatprep.subr.bf16.mxu0 0
        %1184 = vmatpush1.bf16.msra.mxu0 %v1174
        %1185 = vmatprep.subr.bf16.mxu0 0
        %1186 = vmatpush1.bf16.msra.mxu0 %v1173
        %1187 = vmatprep.subr.bf16.mxu0 0
        %1188 = vmatpush1.bf16.msra.mxu0 %v1172
        %1189 = vmatprep.subr.bf16.mxu0 0
        %1190 = vmatpush1.bf16.msra.mxu0 %v1171
        %1191 = vmatprep.subr.bf16.mxu0 0
        %1192 = vmatpush1.bf16.msra.mxu0 %v1170
        %1193 = vmatprep.subr.bf16.mxu0 0
        %1194 = vmatpush1.bf16.msra.mxu0 %v1169
        %1195 = vmatprep.subr.bf16.mxu0 0
        %1196 = vmatpush1.bf16.msra.mxu0 %v1168
        %1197 = vmatprep.subr.bf16.mxu0 0
        %1198 = vmatpush1.bf16.msra.mxu0 %v1167
        %1199 = vmatprep.subr.bf16.mxu0 0
        %1200 = vmatpush2.bf16.msra.mxu0 0
        %1201 = vmatprep.subr.bf16.mxu0 0
        %1202 = vmatpush2.bf16.msra.mxu0 0
        %1203 = vmatprep.subr.bf16.mxu0 0
        %1204 = vmatpush2.bf16.msra.mxu0 0
        %1205 = vmatprep.subr.bf16.mxu0 0
        %1206 = vmatpush2.bf16.msra.mxu0 0
        %1207 = vmatprep.subr.bf16.mxu0 0
        %1208 = vmatpush2.bf16.msra.mxu0 0
        %1209 = vmatprep.subr.bf16.mxu0 0
        %1210 = vmatpush2.bf16.msra.mxu0 0
        %1211 = vmatprep.subr.bf16.mxu0 0
        %1212 = vmatpush2.bf16.msra.mxu0 0
        %1213 = vmatprep.subr.bf16.mxu0 0
        %1214 = vmatpush2.bf16.msra.mxu0 0
        %1215 = vmatprep.mubr.bf16.mxu0 0
        %1216 = vmatmul.mubr.bf16.gmra.mxu0 %v866
        %v1217 = vpop.f32.mrf.mxu0
        %v1218 = vadd.f32 %v950, %v1217
        %v1219 = vpop.f32.mrf.mxu0
        %v1220 = vpop.f32.mrf.mxu0
        %v1221 = vpop.f32.mrf.mxu0
        %1222 = vdwg.mxu0
        %v1239 = vunpack.c.l.b16 %v915
        %v1240 = vunpack.c.l.b16 %v916
        %v1241 = vunpack.c.l.b16 %v917
        %v1242 = vunpack.c.l.b16 %v918
        %v1243 = vunpack.c.l.b16 %v919
        %v1244 = vunpack.c.l.b16 %v920
        %v1245 = vunpack.c.l.b16 %v921
        %v1246 = vunpack.c.l.b16 %v922
        %v1247 = vunpack.c.l.b16 %v923
        %v1248 = vunpack.c.l.b16 %v924
        %v1249 = vunpack.c.l.b16 %v925
        %v1250 = vunpack.c.l.b16 %v926
        %v1251 = vunpack.c.l.b16 %v927
        %v1252 = vunpack.c.l.b16 %v928
        %v1253 = vunpack.c.l.b16 %v929
        %v1254 = vunpack.c.l.b16 %v930
        %v1255 = vpack.c.b16 %v1240, %v1239
        %v1256 = vpack.c.b16 %v1242, %v1241
        %v1257 = vpack.c.b16 %v1244, %v1243
        %v1258 = vpack.c.b16 %v1246, %v1245
        %v1259 = vpack.c.b16 %v1248, %v1247
        %v1260 = vpack.c.b16 %v1250, %v1249
        %v1261 = vpack.c.b16 %v1252, %v1251
        %v1262 = vpack.c.b16 %v1254, %v1253
        %1271 = vmatprep.subr.bf16.mxu0 0
        %1272 = vmatpush1.bf16.msra.mxu0 %v1262
        %1273 = vmatprep.subr.bf16.mxu0 0
        %1274 = vmatpush1.bf16.msra.mxu0 %v1261
        %1275 = vmatprep.subr.bf16.mxu0 0
        %1276 = vmatpush1.bf16.msra.mxu0 %v1260
        %1277 = vmatprep.subr.bf16.mxu0 0
        %1278 = vmatpush1.bf16.msra.mxu0 %v1259
        %1279 = vmatprep.subr.bf16.mxu0 0
        %1280 = vmatpush1.bf16.msra.mxu0 %v1258
        %1281 = vmatprep.subr.bf16.mxu0 0
        %1282 = vmatpush1.bf16.msra.mxu0 %v1257
        %1283 = vmatprep.subr.bf16.mxu0 0
        %1284 = vmatpush1.bf16.msra.mxu0 %v1256
        %1285 = vmatprep.subr.bf16.mxu0 0
        %1286 = vmatpush1.bf16.msra.mxu0 %v1255
        %1287 = vmatprep.subr.bf16.mxu0 0
        %1288 = vmatpush2.bf16.msra.mxu0 0
        %1289 = vmatprep.subr.bf16.mxu0 0
        %1290 = vmatpush2.bf16.msra.mxu0 0
        %1291 = vmatprep.subr.bf16.mxu0 0
        %1292 = vmatpush2.bf16.msra.mxu0 0
        %1293 = vmatprep.subr.bf16.mxu0 0
        %1294 = vmatpush2.bf16.msra.mxu0 0
        %1295 = vmatprep.subr.bf16.mxu0 0
        %1296 = vmatpush2.bf16.msra.mxu0 0
        %1297 = vmatprep.subr.bf16.mxu0 0
        %1298 = vmatpush2.bf16.msra.mxu0 0
        %1299 = vmatprep.subr.bf16.mxu0 0
        %1300 = vmatpush2.bf16.msra.mxu0 0
        %1301 = vmatprep.subr.bf16.mxu0 0
        %1302 = vmatpush2.bf16.msra.mxu0 0
        %1303 = vmatprep.mubr.bf16.mxu0 0
        %1304 = vmatmul.mubr.bf16.gmra.mxu0 %v866
        %v1305 = vpop.f32.mrf.mxu0
        %v1306 = vadd.f32 %v954, %v1305
        %v1307 = vpop.f32.mrf.mxu0
        %v1308 = vpop.f32.mrf.mxu0
        %v1309 = vpop.f32.mrf.mxu0
        %1310 = vdwg.mxu0
        %v1311 = vld [vmem:[%s3] sm:$0xf]
        %v1312 = vld [vmem:[%s3 + $0x4] sm:$0xf]
        %v1313 = vld [vmem:[%s3 + $0x8] sm:$0xf]
        %v1314 = vld [vmem:[%s3 + $0xc] sm:$0xf]
        %v1315 = vld [vmem:[%s3 + $0x10] sm:$0xf]
        %v1316 = vld [vmem:[%s3 + $0x14] sm:$0xf]
        %v1317 = vld [vmem:[%s3 + $0x18] sm:$0xf]
        %v1318 = vld [vmem:[%s3 + $0x1c] sm:$0xf]
        %v1319 = vld [vmem:[%s3 + $0x20] sm:$0xf]
        %v1320 = vld [vmem:[%s3 + $0x24] sm:$0xf]
        %v1321 = vld [vmem:[%s3 + $0x28] sm:$0xf]
        %v1322 = vld [vmem:[%s3 + $0x2c] sm:$0xf]
        %v1323 = vld [vmem:[%s3 + $0x30] sm:$0xf]
        %v1324 = vld [vmem:[%s3 + $0x34] sm:$0xf]
        %v1325 = vld [vmem:[%s3 + $0x38] sm:$0xf]
        %v1326 = vld [vmem:[%s3 + $0x3c] sm:$0xf]
        %v1327 = vld [vmem:[%s3 + $0x40] sm:$0xf]
        %v1328 = vld [vmem:[%s3 + $0x44] sm:$0xf]
        %v1329 = vld [vmem:[%s3 + $0x48] sm:$0xf]
        %v1330 = vld [vmem:[%s3 + $0x4c] sm:$0xf]
        %v1331 = vld [vmem:[%s3 + $0x50] sm:$0xf]
        %v1332 = vld [vmem:[%s3 + $0x54] sm:$0xf]
        %v1333 = vld [vmem:[%s3 + $0x58] sm:$0xf]
        %v1334 = vld [vmem:[%s3 + $0x5c] sm:$0xf]
        %v1335 = vld [vmem:[%s3 + $0x60] sm:$0xf]
        %v1336 = vld [vmem:[%s3 + $0x64] sm:$0xf]
        %v1337 = vld [vmem:[%s3 + $0x68] sm:$0xf]
        %v1338 = vld [vmem:[%s3 + $0x6c] sm:$0xf]
        %v1339 = vld [vmem:[%s3 + $0x70] sm:$0xf]
        %v1340 = vld [vmem:[%s3 + $0x74] sm:$0xf]
        %v1341 = vld [vmem:[%s3 + $0x78] sm:$0xf]
        %v1342 = vld [vmem:[%s3 + $0x7c] sm:$0xf]
        %v1343 = vld [vmem:[%s3 + $0x80] sm:$0xf]
        %v1344 = vld [vmem:[%s3 + $0x84] sm:$0xf]
        %v1345 = vld [vmem:[%s3 + $0x88] sm:$0xf]
        %v1346 = vld [vmem:[%s3 + $0x8c] sm:$0xf]
        %v1347 = vld [vmem:[%s3 + $0x90] sm:$0xf]
        %v1348 = vld [vmem:[%s3 + $0x94] sm:$0xf]
        %v1349 = vld [vmem:[%s3 + $0x98] sm:$0xf]
        %v1350 = vld [vmem:[%s3 + $0x9c] sm:$0xf]
        %v1351 = vld [vmem:[%s3 + $0xa0] sm:$0xf]
        %v1352 = vld [vmem:[%s3 + $0xa4] sm:$0xf]
        %v1353 = vld [vmem:[%s3 + $0xa8] sm:$0xf]
        %v1354 = vld [vmem:[%s3 + $0xac] sm:$0xf]
        %v1355 = vld [vmem:[%s3 + $0xb0] sm:$0xf]
        %v1356 = vld [vmem:[%s3 + $0xb4] sm:$0xf]
        %v1357 = vld [vmem:[%s3 + $0xb8] sm:$0xf]
        %v1358 = vld [vmem:[%s3 + $0xbc] sm:$0xf]
        %v1359 = vld [vmem:[%s3 + $0xc0] sm:$0xf]
        %v1360 = vld [vmem:[%s3 + $0xc4] sm:$0xf]
        %v1361 = vld [vmem:[%s3 + $0xc8] sm:$0xf]
        %v1362 = vld [vmem:[%s3 + $0xcc] sm:$0xf]
        %v1363 = vld [vmem:[%s3 + $0xd0] sm:$0xf]
        %v1364 = vld [vmem:[%s3 + $0xd4] sm:$0xf]
        %v1365 = vld [vmem:[%s3 + $0xd8] sm:$0xf]
        %v1366 = vld [vmem:[%s3 + $0xdc] sm:$0xf]
        %v1367 = vld [vmem:[%s3 + $0xe0] sm:$0xf]
        %v1368 = vld [vmem:[%s3 + $0xe4] sm:$0xf]
        %v1369 = vld [vmem:[%s3 + $0xe8] sm:$0xf]
        %v1370 = vld [vmem:[%s3 + $0xec] sm:$0xf]
        %v1371 = vld [vmem:[%s3 + $0xf0] sm:$0xf]
        %v1372 = vld [vmem:[%s3 + $0xf4] sm:$0xf]
        %v1373 = vld [vmem:[%s3 + $0xf8] sm:$0xf]
        %v1374 = vld [vmem:[%s3 + $0xfc] sm:$0xf]
        %v1375 = vld [vmem:[%s7] sm:$0x1]
        %v1376 = vld [vmem:[%s7 + $0x1] sm:$0x1]
        %v1377 = vld [vmem:[%s7 + $0x2] sm:$0x1]
        %v1378 = vld [vmem:[%s7 + $0x3] sm:$0x1]
        %v1383 = vlaneseq
        %v1384 = vshrl.u32 %v1383, 7
        %v1385 = vsub.s32 0, %v1384
        %v1386 = vrot.slane %v1375, %v1385
        %v1387 = vlaneseq
        %v1388 = vshrl.u32 %v1387, 7
        %v1389 = vsub.s32 0, %v1388
        %v1390 = vrot.slane %v1376, %v1389
        %v1391 = vlaneseq
        %v1392 = vshrl.u32 %v1391, 7
        %v1393 = vsub.s32 0, %v1392
        %v1394 = vrot.slane %v1377, %v1393
        %v1395 = vlaneseq
        %v1396 = vshrl.u32 %v1395, 7
        %v1397 = vsub.s32 0, %v1396
        %v1398 = vrot.slane %v1378, %v1397
        %v1419 = vunpack.c.l.b16 %v1311
        %v1420 = vunpack.c.l.b16 %v1312
        %v1421 = vunpack.c.l.b16 %v1313
        %v1422 = vunpack.c.l.b16 %v1314
        %v1423 = vunpack.c.l.b16 %v1315
        %v1424 = vunpack.c.l.b16 %v1316
        %v1425 = vunpack.c.l.b16 %v1317
        %v1426 = vunpack.c.l.b16 %v1318
        %v1427 = vunpack.c.l.b16 %v1319
        %v1428 = vunpack.c.l.b16 %v1320
        %v1429 = vunpack.c.l.b16 %v1321
        %v1430 = vunpack.c.l.b16 %v1322
        %v1431 = vunpack.c.l.b16 %v1323
        %v1432 = vunpack.c.l.b16 %v1324
        %v1433 = vunpack.c.l.b16 %v1325
        %v1434 = vunpack.c.l.b16 %v1326
        %v1435 = vpack.c.b16 %v1420, %v1419
        %v1436 = vpack.c.b16 %v1422, %v1421
        %v1437 = vpack.c.b16 %v1424, %v1423
        %v1438 = vpack.c.b16 %v1426, %v1425
        %v1439 = vpack.c.b16 %v1428, %v1427
        %v1440 = vpack.c.b16 %v1430, %v1429
        %v1441 = vpack.c.b16 %v1432, %v1431
        %v1442 = vpack.c.b16 %v1434, %v1433
        %1451 = vmatprep.subr.bf16.mxu0 0
        %1452 = vmatpush1.bf16.msra.mxu0 %v1442
        %1453 = vmatprep.subr.bf16.mxu0 0
        %1454 = vmatpush1.bf16.msra.mxu0 %v1441
        %1455 = vmatprep.subr.bf16.mxu0 0
        %1456 = vmatpush1.bf16.msra.mxu0 %v1440
        %1457 = vmatprep.subr.bf16.mxu0 0
        %1458 = vmatpush1.bf16.msra.mxu0 %v1439
        %1459 = vmatprep.subr.bf16.mxu0 0
        %1460 = vmatpush1.bf16.msra.mxu0 %v1438
        %1461 = vmatprep.subr.bf16.mxu0 0
        %1462 = vmatpush1.bf16.msra.mxu0 %v1437
        %1463 = vmatprep.subr.bf16.mxu0 0
        %1464 = vmatpush1.bf16.msra.mxu0 %v1436
        %1465 = vmatprep.subr.bf16.mxu0 0
        %1466 = vmatpush1.bf16.msra.mxu0 %v1435
        %1467 = vmatprep.subr.bf16.mxu0 0
        %1468 = vmatpush2.bf16.msra.mxu0 0
        %1469 = vmatprep.subr.bf16.mxu0 0
        %1470 = vmatpush2.bf16.msra.mxu0 0
        %1471 = vmatprep.subr.bf16.mxu0 0
        %1472 = vmatpush2.bf16.msra.mxu0 0
        %1473 = vmatprep.subr.bf16.mxu0 0
        %1474 = vmatpush2.bf16.msra.mxu0 0
        %1475 = vmatprep.subr.bf16.mxu0 0
        %1476 = vmatpush2.bf16.msra.mxu0 0
        %1477 = vmatprep.subr.bf16.mxu0 0
        %1478 = vmatpush2.bf16.msra.mxu0 0
        %1479 = vmatprep.subr.bf16.mxu0 0
        %1480 = vmatpush2.bf16.msra.mxu0 0
        %1481 = vmatprep.subr.bf16.mxu0 0
        %1482 = vmatpush2.bf16.msra.mxu0 0
        %1483 = vmatprep.mubr.bf16.mxu0 0
        %1484 = vmatmul.mubr.bf16.gmra.mxu0 %v866
        %v1485 = vpop.f32.mrf.mxu0
        %v1486 = vadd.f32 %v1386, %v1485
        %v1487 = vpop.f32.mrf.mxu0
        %v1488 = vpop.f32.mrf.mxu0
        %v1489 = vpop.f32.mrf.mxu0
        %1490 = vdwg.mxu0
        %v1507 = vunpack.c.l.b16 %v1327
        %v1508 = vunpack.c.l.b16 %v1328
        %v1509 = vunpack.c.l.b16 %v1329
        %v1510 = vunpack.c.l.b16 %v1330
        %v1511 = vunpack.c.l.b16 %v1331
        %v1512 = vunpack.c.l.b16 %v1332
        %v1513 = vunpack.c.l.b16 %v1333
        %v1514 = vunpack.c.l.b16 %v1334
        %v1515 = vunpack.c.l.b16 %v1335
        %v1516 = vunpack.c.l.b16 %v1336
        %v1517 = vunpack.c.l.b16 %v1337
        %v1518 = vunpack.c.l.b16 %v1338
        %v1519 = vunpack.c.l.b16 %v1339
        %v1520 = vunpack.c.l.b16 %v1340
        %v1521 = vunpack.c.l.b16 %v1341
        %v1522 = vunpack.c.l.b16 %v1342
        %v1523 = vpack.c.b16 %v1508, %v1507
        %v1524 = vpack.c.b16 %v1510, %v1509
        %v1525 = vpack.c.b16 %v1512, %v1511
        %v1526 = vpack.c.b16 %v1514, %v1513
        %v1527 = vpack.c.b16 %v1516, %v1515
        %v1528 = vpack.c.b16 %v1518, %v1517
        %v1529 = vpack.c.b16 %v1520, %v1519
        %v1530 = vpack.c.b16 %v1522, %v1521
        %1539 = vmatprep.subr.bf16.mxu0 0
        %1540 = vmatpush1.bf16.msra.mxu0 %v1530
        %1541 = vmatprep.subr.bf16.mxu0 0
        %1542 = vmatpush1.bf16.msra.mxu0 %v1529
        %1543 = vmatprep.subr.bf16.mxu0 0
        %1544 = vmatpush1.bf16.msra.mxu0 %v1528
        %1545 = vmatprep.subr.bf16.mxu0 0
        %1546 = vmatpush1.bf16.msra.mxu0 %v1527
        %1547 = vmatprep.subr.bf16.mxu0 0
        %1548 = vmatpush1.bf16.msra.mxu0 %v1526
        %1549 = vmatprep.subr.bf16.mxu0 0
        %1550 = vmatpush1.bf16.msra.mxu0 %v1525
        %1551 = vmatprep.subr.bf16.mxu0 0
        %1552 = vmatpush1.bf16.msra.mxu0 %v1524
        %1553 = vmatprep.subr.bf16.mxu0 0
        %1554 = vmatpush1.bf16.msra.mxu0 %v1523
        %1555 = vmatprep.subr.bf16.mxu0 0
        %1556 = vmatpush2.bf16.msra.mxu0 0
        %1557 = vmatprep.subr.bf16.mxu0 0
        %1558 = vmatpush2.bf16.msra.mxu0 0
        %1559 = vmatprep.subr.bf16.mxu0 0
        %1560 = vmatpush2.bf16.msra.mxu0 0
        %1561 = vmatprep.subr.bf16.mxu0 0
        %1562 = vmatpush2.bf16.msra.mxu0 0
        %1563 = vmatprep.subr.bf16.mxu0 0
        %1564 = vmatpush2.bf16.msra.mxu0 0
        %1565 = vmatprep.subr.bf16.mxu0 0
        %1566 = vmatpush2.bf16.msra.mxu0 0
        %1567 = vmatprep.subr.bf16.mxu0 0
        %1568 = vmatpush2.bf16.msra.mxu0 0
        %1569 = vmatprep.subr.bf16.mxu0 0
        %1570 = vmatpush2.bf16.msra.mxu0 0
        %1571 = vmatprep.mubr.bf16.mxu0 0
        %1572 = vmatmul.mubr.bf16.gmra.mxu0 %v866
        %v1573 = vpop.f32.mrf.mxu0
        %v1574 = vadd.f32 %v1390, %v1573
        %v1575 = vpop.f32.mrf.mxu0
        %v1576 = vpop.f32.mrf.mxu0
        %v1577 = vpop.f32.mrf.mxu0
        %1578 = vdwg.mxu0
        %v1595 = vunpack.c.l.b16 %v1343
        %v1596 = vunpack.c.l.b16 %v1344
        %v1597 = vunpack.c.l.b16 %v1345
        %v1598 = vunpack.c.l.b16 %v1346
        %v1599 = vunpack.c.l.b16 %v1347
        %v1600 = vunpack.c.l.b16 %v1348
        %v1601 = vunpack.c.l.b16 %v1349
        %v1602 = vunpack.c.l.b16 %v1350
        %v1603 = vunpack.c.l.b16 %v1351
        %v1604 = vunpack.c.l.b16 %v1352
        %v1605 = vunpack.c.l.b16 %v1353
        %v1606 = vunpack.c.l.b16 %v1354
        %v1607 = vunpack.c.l.b16 %v1355
        %v1608 = vunpack.c.l.b16 %v1356
        %v1609 = vunpack.c.l.b16 %v1357
        %v1610 = vunpack.c.l.b16 %v1358
        %v1611 = vpack.c.b16 %v1596, %v1595
        %v1612 = vpack.c.b16 %v1598, %v1597
        %v1613 = vpack.c.b16 %v1600, %v1599
        %v1614 = vpack.c.b16 %v1602, %v1601
        %v1615 = vpack.c.b16 %v1604, %v1603
        %v1616 = vpack.c.b16 %v1606, %v1605
        %v1617 = vpack.c.b16 %v1608, %v1607
        %v1618 = vpack.c.b16 %v1610, %v1609
        %1627 = vmatprep.subr.bf16.mxu0 0
        %1628 = vmatpush1.bf16.msra.mxu0 %v1618
        %1629 = vmatprep.subr.bf16.mxu0 0
        %1630 = vmatpush1.bf16.msra.mxu0 %v1617
        %1631 = vmatprep.subr.bf16.mxu0 0
        %1632 = vmatpush1.bf16.msra.mxu0 %v1616
        %1633 = vmatprep.subr.bf16.mxu0 0
        %1634 = vmatpush1.bf16.msra.mxu0 %v1615
        %1635 = vmatprep.subr.bf16.mxu0 0
        %1636 = vmatpush1.bf16.msra.mxu0 %v1614
        %1637 = vmatprep.subr.bf16.mxu0 0
        %1638 = vmatpush1.bf16.msra.mxu0 %v1613
        %1639 = vmatprep.subr.bf16.mxu0 0
        %1640 = vmatpush1.bf16.msra.mxu0 %v1612
        %1641 = vmatprep.subr.bf16.mxu0 0
        %1642 = vmatpush1.bf16.msra.mxu0 %v1611
        %1643 = vmatprep.subr.bf16.mxu0 0
        %1644 = vmatpush2.bf16.msra.mxu0 0
        %1645 = vmatprep.subr.bf16.mxu0 0
        %1646 = vmatpush2.bf16.msra.mxu0 0
        %1647 = vmatprep.subr.bf16.mxu0 0
        %1648 = vmatpush2.bf16.msra.mxu0 0
        %1649 = vmatprep.subr.bf16.mxu0 0
        %1650 = vmatpush2.bf16.msra.mxu0 0
        %1651 = vmatprep.subr.bf16.mxu0 0
        %1652 = vmatpush2.bf16.msra.mxu0 0
        %1653 = vmatprep.subr.bf16.mxu0 0
        %1654 = vmatpush2.bf16.msra.mxu0 0
        %1655 = vmatprep.subr.bf16.mxu0 0
        %1656 = vmatpush2.bf16.msra.mxu0 0
        %1657 = vmatprep.subr.bf16.mxu0 0
        %1658 = vmatpush2.bf16.msra.mxu0 0
        %1659 = vmatprep.mubr.bf16.mxu0 0
        %1660 = vmatmul.mubr.bf16.gmra.mxu0 %v866
        %v1661 = vpop.f32.mrf.mxu0
        %v1662 = vadd.f32 %v1394, %v1661
        %v1663 = vpop.f32.mrf.mxu0
        %v1664 = vpop.f32.mrf.mxu0
        %v1665 = vpop.f32.mrf.mxu0
        %1666 = vdwg.mxu0
        %v1683 = vunpack.c.l.b16 %v1359
        %v1684 = vunpack.c.l.b16 %v1360
        %v1685 = vunpack.c.l.b16 %v1361
        %v1686 = vunpack.c.l.b16 %v1362
        %v1687 = vunpack.c.l.b16 %v1363
        %v1688 = vunpack.c.l.b16 %v1364
        %v1689 = vunpack.c.l.b16 %v1365
        %v1690 = vunpack.c.l.b16 %v1366
        %v1691 = vunpack.c.l.b16 %v1367
        %v1692 = vunpack.c.l.b16 %v1368
        %v1693 = vunpack.c.l.b16 %v1369
        %v1694 = vunpack.c.l.b16 %v1370
        %v1695 = vunpack.c.l.b16 %v1371
        %v1696 = vunpack.c.l.b16 %v1372
        %v1697 = vunpack.c.l.b16 %v1373
        %v1698 = vunpack.c.l.b16 %v1374
        %v1699 = vpack.c.b16 %v1684, %v1683
        %v1700 = vpack.c.b16 %v1686, %v1685
        %v1701 = vpack.c.b16 %v1688, %v1687
        %v1702 = vpack.c.b16 %v1690, %v1689
        %v1703 = vpack.c.b16 %v1692, %v1691
        %v1704 = vpack.c.b16 %v1694, %v1693
        %v1705 = vpack.c.b16 %v1696, %v1695
        %v1706 = vpack.c.b16 %v1698, %v1697
        %1715 = vmatprep.subr.bf16.mxu0 0
        %1716 = vmatpush1.bf16.msra.mxu0 %v1706
        %1717 = vmatprep.subr.bf16.mxu0 0
        %1718 = vmatpush1.bf16.msra.mxu0 %v1705
        %1719 = vmatprep.subr.bf16.mxu0 0
        %1720 = vmatpush1.bf16.msra.mxu0 %v1704
        %1721 = vmatprep.subr.bf16.mxu0 0
        %1722 = vmatpush1.bf16.msra.mxu0 %v1703
        %1723 = vmatprep.subr.bf16.mxu0 0
        %1724 = vmatpush1.bf16.msra.mxu0 %v1702
        %1725 = vmatprep.subr.bf16.mxu0 0
        %1726 = vmatpush1.bf16.msra.mxu0 %v1701
        %1727 = vmatprep.subr.bf16.mxu0 0
        %1728 = vmatpush1.bf16.msra.mxu0 %v1700
        %1729 = vmatprep.subr.bf16.mxu0 0
        %1730 = vmatpush1.bf16.msra.mxu0 %v1699
        %1731 = vmatprep.subr.bf16.mxu0 0
        %1732 = vmatpush2.bf16.msra.mxu0 0
        %1733 = vmatprep.subr.bf16.mxu0 0
        %1734 = vmatpush2.bf16.msra.mxu0 0
        %1735 = vmatprep.subr.bf16.mxu0 0
        %1736 = vmatpush2.bf16.msra.mxu0 0
        %1737 = vmatprep.subr.bf16.mxu0 0
        %1738 = vmatpush2.bf16.msra.mxu0 0
        %1739 = vmatprep.subr.bf16.mxu0 0
        %1740 = vmatpush2.bf16.msra.mxu0 0
        %1741 = vmatprep.subr.bf16.mxu0 0
        %1742 = vmatpush2.bf16.msra.mxu0 0
        %1743 = vmatprep.subr.bf16.mxu0 0
        %1744 = vmatpush2.bf16.msra.mxu0 0
        %1745 = vmatprep.subr.bf16.mxu0 0
        %1746 = vmatpush2.bf16.msra.mxu0 0
        %1747 = vmatprep.mubr.bf16.mxu0 0
        %1748 = vmatmul.mubr.bf16.gmra.mxu0 %v866
        %v1749 = vpop.f32.mrf.mxu0
        %v1750 = vadd.f32 %v1398, %v1749
        %v1751 = vpop.f32.mrf.mxu0
        %v1752 = vpop.f32.mrf.mxu0
        %v1753 = vpop.f32.mrf.mxu0
        %1754 = vdwg.mxu0
        %v1755 = vld [vmem:[%s4] sm:$0xf]
        %v1756 = vld [vmem:[%s4 + $0x4] sm:$0xf]
        %v1757 = vld [vmem:[%s4 + $0x8] sm:$0xf]
        %v1758 = vld [vmem:[%s4 + $0xc] sm:$0xf]
        %v1759 = vld [vmem:[%s4 + $0x10] sm:$0xf]
        %v1760 = vld [vmem:[%s4 + $0x14] sm:$0xf]
        %v1761 = vld [vmem:[%s4 + $0x18] sm:$0xf]
        %v1762 = vld [vmem:[%s4 + $0x1c] sm:$0xf]
        %v1763 = vld [vmem:[%s4 + $0x20] sm:$0xf]
        %v1764 = vld [vmem:[%s4 + $0x24] sm:$0xf]
        %v1765 = vld [vmem:[%s4 + $0x28] sm:$0xf]
        %v1766 = vld [vmem:[%s4 + $0x2c] sm:$0xf]
        %v1767 = vld [vmem:[%s4 + $0x30] sm:$0xf]
        %v1768 = vld [vmem:[%s4 + $0x34] sm:$0xf]
        %v1769 = vld [vmem:[%s4 + $0x38] sm:$0xf]
        %v1770 = vld [vmem:[%s4 + $0x3c] sm:$0xf]
        %v1771 = vld [vmem:[%s4 + $0x40] sm:$0xf]
        %v1772 = vld [vmem:[%s4 + $0x44] sm:$0xf]
        %v1773 = vld [vmem:[%s4 + $0x48] sm:$0xf]
        %v1774 = vld [vmem:[%s4 + $0x4c] sm:$0xf]
        %v1775 = vld [vmem:[%s4 + $0x50] sm:$0xf]
        %v1776 = vld [vmem:[%s4 + $0x54] sm:$0xf]
        %v1777 = vld [vmem:[%s4 + $0x58] sm:$0xf]
        %v1778 = vld [vmem:[%s4 + $0x5c] sm:$0xf]
        %v1779 = vld [vmem:[%s4 + $0x60] sm:$0xf]
        %v1780 = vld [vmem:[%s4 + $0x64] sm:$0xf]
        %v1781 = vld [vmem:[%s4 + $0x68] sm:$0xf]
        %v1782 = vld [vmem:[%s4 + $0x6c] sm:$0xf]
        %v1783 = vld [vmem:[%s4 + $0x70] sm:$0xf]
        %v1784 = vld [vmem:[%s4 + $0x74] sm:$0xf]
        %v1785 = vld [vmem:[%s4 + $0x78] sm:$0xf]
        %v1786 = vld [vmem:[%s4 + $0x7c] sm:$0xf]
        %v1787 = vld [vmem:[%s4 + $0x80] sm:$0xf]
        %v1788 = vld [vmem:[%s4 + $0x84] sm:$0xf]
        %v1789 = vld [vmem:[%s4 + $0x88] sm:$0xf]
        %v1790 = vld [vmem:[%s4 + $0x8c] sm:$0xf]
        %v1791 = vld [vmem:[%s4 + $0x90] sm:$0xf]
        %v1792 = vld [vmem:[%s4 + $0x94] sm:$0xf]
        %v1793 = vld [vmem:[%s4 + $0x98] sm:$0xf]
        %v1794 = vld [vmem:[%s4 + $0x9c] sm:$0xf]
        %v1795 = vld [vmem:[%s4 + $0xa0] sm:$0xf]
        %v1796 = vld [vmem:[%s4 + $0xa4] sm:$0xf]
        %v1797 = vld [vmem:[%s4 + $0xa8] sm:$0xf]
        %v1798 = vld [vmem:[%s4 + $0xac] sm:$0xf]
        %v1799 = vld [vmem:[%s4 + $0xb0] sm:$0xf]
        %v1800 = vld [vmem:[%s4 + $0xb4] sm:$0xf]
        %v1801 = vld [vmem:[%s4 + $0xb8] sm:$0xf]
        %v1802 = vld [vmem:[%s4 + $0xbc] sm:$0xf]
        %v1803 = vld [vmem:[%s4 + $0xc0] sm:$0xf]
        %v1804 = vld [vmem:[%s4 + $0xc4] sm:$0xf]
        %v1805 = vld [vmem:[%s4 + $0xc8] sm:$0xf]
        %v1806 = vld [vmem:[%s4 + $0xcc] sm:$0xf]
        %v1807 = vld [vmem:[%s4 + $0xd0] sm:$0xf]
        %v1808 = vld [vmem:[%s4 + $0xd4] sm:$0xf]
        %v1809 = vld [vmem:[%s4 + $0xd8] sm:$0xf]
        %v1810 = vld [vmem:[%s4 + $0xdc] sm:$0xf]
        %v1811 = vld [vmem:[%s4 + $0xe0] sm:$0xf]
        %v1812 = vld [vmem:[%s4 + $0xe4] sm:$0xf]
        %v1813 = vld [vmem:[%s4 + $0xe8] sm:$0xf]
        %v1814 = vld [vmem:[%s4 + $0xec] sm:$0xf]
        %v1815 = vld [vmem:[%s4 + $0xf0] sm:$0xf]
        %v1816 = vld [vmem:[%s4 + $0xf4] sm:$0xf]
        %v1817 = vld [vmem:[%s4 + $0xf8] sm:$0xf]
        %v1818 = vld [vmem:[%s4 + $0xfc] sm:$0xf]
        %v1819 = vld [vmem:[%s8] sm:$0x1]
        %v1820 = vld [vmem:[%s8 + $0x1] sm:$0x1]
        %v1821 = vld [vmem:[%s8 + $0x2] sm:$0x1]
        %v1822 = vld [vmem:[%s8 + $0x3] sm:$0x1]
        %v1827 = vlaneseq
        %v1828 = vshrl.u32 %v1827, 7
        %v1829 = vsub.s32 0, %v1828
        %v1830 = vrot.slane %v1819, %v1829
        %v1831 = vlaneseq
        %v1832 = vshrl.u32 %v1831, 7
        %v1833 = vsub.s32 0, %v1832
        %v1834 = vrot.slane %v1820, %v1833
        %v1835 = vlaneseq
        %v1836 = vshrl.u32 %v1835, 7
        %v1837 = vsub.s32 0, %v1836
        %v1838 = vrot.slane %v1821, %v1837
        %v1839 = vlaneseq
        %v1840 = vshrl.u32 %v1839, 7
        %v1841 = vsub.s32 0, %v1840
        %v1842 = vrot.slane %v1822, %v1841
        %v1863 = vunpack.c.l.b16 %v1755
        %v1864 = vunpack.c.l.b16 %v1756
        %v1865 = vunpack.c.l.b16 %v1757
        %v1866 = vunpack.c.l.b16 %v1758
        %v1867 = vunpack.c.l.b16 %v1759
        %v1868 = vunpack.c.l.b16 %v1760
        %v1869 = vunpack.c.l.b16 %v1761
        %v1870 = vunpack.c.l.b16 %v1762
        %v1871 = vunpack.c.l.b16 %v1763
        %v1872 = vunpack.c.l.b16 %v1764
        %v1873 = vunpack.c.l.b16 %v1765
        %v1874 = vunpack.c.l.b16 %v1766
        %v1875 = vunpack.c.l.b16 %v1767
        %v1876 = vunpack.c.l.b16 %v1768
        %v1877 = vunpack.c.l.b16 %v1769
        %v1878 = vunpack.c.l.b16 %v1770
        %v1879 = vpack.c.b16 %v1864, %v1863
        %v1880 = vpack.c.b16 %v1866, %v1865
        %v1881 = vpack.c.b16 %v1868, %v1867
        %v1882 = vpack.c.b16 %v1870, %v1869
        %v1883 = vpack.c.b16 %v1872, %v1871
        %v1884 = vpack.c.b16 %v1874, %v1873
        %v1885 = vpack.c.b16 %v1876, %v1875
        %v1886 = vpack.c.b16 %v1878, %v1877
        %1895 = vmatprep.subr.bf16.mxu0 0
        %1896 = vmatpush1.bf16.msra.mxu0 %v1886
        %1897 = vmatprep.subr.bf16.mxu0 0
        %1898 = vmatpush1.bf16.msra.mxu0 %v1885
        %1899 = vmatprep.subr.bf16.mxu0 0
        %1900 = vmatpush1.bf16.msra.mxu0 %v1884
        %1901 = vmatprep.subr.bf16.mxu0 0
        %1902 = vmatpush1.bf16.msra.mxu0 %v1883
        %1903 = vmatprep.subr.bf16.mxu0 0
        %1904 = vmatpush1.bf16.msra.mxu0 %v1882
        %1905 = vmatprep.subr.bf16.mxu0 0
        %1906 = vmatpush1.bf16.msra.mxu0 %v1881
        %1907 = vmatprep.subr.bf16.mxu0 0
        %1908 = vmatpush1.bf16.msra.mxu0 %v1880
        %1909 = vmatprep.subr.bf16.mxu0 0
        %1910 = vmatpush1.bf16.msra.mxu0 %v1879
        %1911 = vmatprep.subr.bf16.mxu0 0
        %1912 = vmatpush2.bf16.msra.mxu0 0
        %1913 = vmatprep.subr.bf16.mxu0 0
        %1914 = vmatpush2.bf16.msra.mxu0 0
        %1915 = vmatprep.subr.bf16.mxu0 0
        %1916 = vmatpush2.bf16.msra.mxu0 0
        %1917 = vmatprep.subr.bf16.mxu0 0
        %1918 = vmatpush2.bf16.msra.mxu0 0
        %1919 = vmatprep.subr.bf16.mxu0 0
        %1920 = vmatpush2.bf16.msra.mxu0 0
        %1921 = vmatprep.subr.bf16.mxu0 0
        %1922 = vmatpush2.bf16.msra.mxu0 0
        %1923 = vmatprep.subr.bf16.mxu0 0
        %1924 = vmatpush2.bf16.msra.mxu0 0
        %1925 = vmatprep.subr.bf16.mxu0 0
        %1926 = vmatpush2.bf16.msra.mxu0 0
        %1927 = vmatprep.mubr.bf16.mxu0 0
        %1928 = vmatmul.mubr.bf16.gmra.mxu0 %v866
        %v1929 = vpop.f32.mrf.mxu0
        %v1930 = vadd.f32 %v1830, %v1929
        %v1931 = vpop.f32.mrf.mxu0
        %v1932 = vpop.f32.mrf.mxu0
        %v1933 = vpop.f32.mrf.mxu0
        %1934 = vdwg.mxu0
        %v1951 = vunpack.c.l.b16 %v1771
        %v1952 = vunpack.c.l.b16 %v1772
        %v1953 = vunpack.c.l.b16 %v1773
        %v1954 = vunpack.c.l.b16 %v1774
        %v1955 = vunpack.c.l.b16 %v1775
        %v1956 = vunpack.c.l.b16 %v1776
        %v1957 = vunpack.c.l.b16 %v1777
        %v1958 = vunpack.c.l.b16 %v1778
        %v1959 = vunpack.c.l.b16 %v1779
        %v1960 = vunpack.c.l.b16 %v1780
        %v1961 = vunpack.c.l.b16 %v1781
        %v1962 = vunpack.c.l.b16 %v1782
        %v1963 = vunpack.c.l.b16 %v1783
        %v1964 = vunpack.c.l.b16 %v1784
        %v1965 = vunpack.c.l.b16 %v1785
        %v1966 = vunpack.c.l.b16 %v1786
        %v1967 = vpack.c.b16 %v1952, %v1951
        %v1968 = vpack.c.b16 %v1954, %v1953
        %v1969 = vpack.c.b16 %v1956, %v1955
        %v1970 = vpack.c.b16 %v1958, %v1957
        %v1971 = vpack.c.b16 %v1960, %v1959
        %v1972 = vpack.c.b16 %v1962, %v1961
        %v1973 = vpack.c.b16 %v1964, %v1963
        %v1974 = vpack.c.b16 %v1966, %v1965
        %1983 = vmatprep.subr.bf16.mxu0 0
        %1984 = vmatpush1.bf16.msra.mxu0 %v1974
        %1985 = vmatprep.subr.bf16.mxu0 0
        %1986 = vmatpush1.bf16.msra.mxu0 %v1973
        %1987 = vmatprep.subr.bf16.mxu0 0
        %1988 = vmatpush1.bf16.msra.mxu0 %v1972
        %1989 = vmatprep.subr.bf16.mxu0 0
        %1990 = vmatpush1.bf16.msra.mxu0 %v1971
        %1991 = vmatprep.subr.bf16.mxu0 0
        %1992 = vmatpush1.bf16.msra.mxu0 %v1970
        %1993 = vmatprep.subr.bf16.mxu0 0
        %1994 = vmatpush1.bf16.msra.mxu0 %v1969
        %1995 = vmatprep.subr.bf16.mxu0 0
        %1996 = vmatpush1.bf16.msra.mxu0 %v1968
        %1997 = vmatprep.subr.bf16.mxu0 0
        %1998 = vmatpush1.bf16.msra.mxu0 %v1967
        %1999 = vmatprep.subr.bf16.mxu0 0
        %2000 = vmatpush2.bf16.msra.mxu0 0
        %2001 = vmatprep.subr.bf16.mxu0 0
        %2002 = vmatpush2.bf16.msra.mxu0 0
        %2003 = vmatprep.subr.bf16.mxu0 0
        %2004 = vmatpush2.bf16.msra.mxu0 0
        %2005 = vmatprep.subr.bf16.mxu0 0
        %2006 = vmatpush2.bf16.msra.mxu0 0
        %2007 = vmatprep.subr.bf16.mxu0 0
        %2008 = vmatpush2.bf16.msra.mxu0 0
        %2009 = vmatprep.subr.bf16.mxu0 0
        %2010 = vmatpush2.bf16.msra.mxu0 0
        %2011 = vmatprep.subr.bf16.mxu0 0
        %2012 = vmatpush2.bf16.msra.mxu0 0
        %2013 = vmatprep.subr.bf16.mxu0 0
        %2014 = vmatpush2.bf16.msra.mxu0 0
        %2015 = vmatprep.mubr.bf16.mxu0 0
        %2016 = vmatmul.mubr.bf16.gmra.mxu0 %v866
        %v2017 = vpop.f32.mrf.mxu0
        %v2018 = vadd.f32 %v1834, %v2017
        %v2019 = vpop.f32.mrf.mxu0
        %v2020 = vpop.f32.mrf.mxu0
        %v2021 = vpop.f32.mrf.mxu0
        %2022 = vdwg.mxu0
        %v2039 = vunpack.c.l.b16 %v1787
        %v2040 = vunpack.c.l.b16 %v1788
        %v2041 = vunpack.c.l.b16 %v1789
        %v2042 = vunpack.c.l.b16 %v1790
        %v2043 = vunpack.c.l.b16 %v1791
        %v2044 = vunpack.c.l.b16 %v1792
        %v2045 = vunpack.c.l.b16 %v1793
        %v2046 = vunpack.c.l.b16 %v1794
        %v2047 = vunpack.c.l.b16 %v1795
        %v2048 = vunpack.c.l.b16 %v1796
        %v2049 = vunpack.c.l.b16 %v1797
        %v2050 = vunpack.c.l.b16 %v1798
        %v2051 = vunpack.c.l.b16 %v1799
        %v2052 = vunpack.c.l.b16 %v1800
        %v2053 = vunpack.c.l.b16 %v1801
        %v2054 = vunpack.c.l.b16 %v1802
        %v2055 = vpack.c.b16 %v2040, %v2039
        %v2056 = vpack.c.b16 %v2042, %v2041
        %v2057 = vpack.c.b16 %v2044, %v2043
        %v2058 = vpack.c.b16 %v2046, %v2045
        %v2059 = vpack.c.b16 %v2048, %v2047
        %v2060 = vpack.c.b16 %v2050, %v2049
        %v2061 = vpack.c.b16 %v2052, %v2051
        %v2062 = vpack.c.b16 %v2054, %v2053
        %2071 = vmatprep.subr.bf16.mxu0 0
        %2072 = vmatpush1.bf16.msra.mxu0 %v2062
        %2073 = vmatprep.subr.bf16.mxu0 0
        %2074 = vmatpush1.bf16.msra.mxu0 %v2061
        %2075 = vmatprep.subr.bf16.mxu0 0
        %2076 = vmatpush1.bf16.msra.mxu0 %v2060
        %2077 = vmatprep.subr.bf16.mxu0 0
        %2078 = vmatpush1.bf16.msra.mxu0 %v2059
        %2079 = vmatprep.subr.bf16.mxu0 0
        %2080 = vmatpush1.bf16.msra.mxu0 %v2058
        %2081 = vmatprep.subr.bf16.mxu0 0
        %2082 = vmatpush1.bf16.msra.mxu0 %v2057
        %2083 = vmatprep.subr.bf16.mxu0 0
        %2084 = vmatpush1.bf16.msra.mxu0 %v2056
        %2085 = vmatprep.subr.bf16.mxu0 0
        %2086 = vmatpush1.bf16.msra.mxu0 %v2055
        %2087 = vmatprep.subr.bf16.mxu0 0
        %2088 = vmatpush2.bf16.msra.mxu0 0
        %2089 = vmatprep.subr.bf16.mxu0 0
        %2090 = vmatpush2.bf16.msra.mxu0 0
        %2091 = vmatprep.subr.bf16.mxu0 0
        %2092 = vmatpush2.bf16.msra.mxu0 0
        %2093 = vmatprep.subr.bf16.mxu0 0
        %2094 = vmatpush2.bf16.msra.mxu0 0
        %2095 = vmatprep.subr.bf16.mxu0 0
        %2096 = vmatpush2.bf16.msra.mxu0 0
        %2097 = vmatprep.subr.bf16.mxu0 0
        %2098 = vmatpush2.bf16.msra.mxu0 0
        %2099 = vmatprep.subr.bf16.mxu0 0
        %2100 = vmatpush2.bf16.msra.mxu0 0
        %2101 = vmatprep.subr.bf16.mxu0 0
        %2102 = vmatpush2.bf16.msra.mxu0 0
        %2103 = vmatprep.mubr.bf16.mxu0 0
        %2104 = vmatmul.mubr.bf16.gmra.mxu0 %v866
        %v2105 = vpop.f32.mrf.mxu0
        %v2106 = vadd.f32 %v1838, %v2105
        %v2107 = vpop.f32.mrf.mxu0
        %v2108 = vpop.f32.mrf.mxu0
        %v2109 = vpop.f32.mrf.mxu0
        %2110 = vdwg.mxu0
        %v2127 = vunpack.c.l.b16 %v1803
        %v2128 = vunpack.c.l.b16 %v1804
        %v2129 = vunpack.c.l.b16 %v1805
        %v2130 = vunpack.c.l.b16 %v1806
        %v2131 = vunpack.c.l.b16 %v1807
        %v2132 = vunpack.c.l.b16 %v1808
        %v2133 = vunpack.c.l.b16 %v1809
        %v2134 = vunpack.c.l.b16 %v1810
        %v2135 = vunpack.c.l.b16 %v1811
        %v2136 = vunpack.c.l.b16 %v1812
        %v2137 = vunpack.c.l.b16 %v1813
        %v2138 = vunpack.c.l.b16 %v1814
        %v2139 = vunpack.c.l.b16 %v1815
        %v2140 = vunpack.c.l.b16 %v1816
        %v2141 = vunpack.c.l.b16 %v1817
        %v2142 = vunpack.c.l.b16 %v1818
        %v2143 = vpack.c.b16 %v2128, %v2127
        %v2144 = vpack.c.b16 %v2130, %v2129
        %v2145 = vpack.c.b16 %v2132, %v2131
        %v2146 = vpack.c.b16 %v2134, %v2133
        %v2147 = vpack.c.b16 %v2136, %v2135
        %v2148 = vpack.c.b16 %v2138, %v2137
        %v2149 = vpack.c.b16 %v2140, %v2139
        %v2150 = vpack.c.b16 %v2142, %v2141
        %2159 = vmatprep.subr.bf16.mxu0 0
        %2160 = vmatpush1.bf16.msra.mxu0 %v2150
        %2161 = vmatprep.subr.bf16.mxu0 0
        %2162 = vmatpush1.bf16.msra.mxu0 %v2149
        %2163 = vmatprep.subr.bf16.mxu0 0
        %2164 = vmatpush1.bf16.msra.mxu0 %v2148
        %2165 = vmatprep.subr.bf16.mxu0 0
        %2166 = vmatpush1.bf16.msra.mxu0 %v2147
        %2167 = vmatprep.subr.bf16.mxu0 0
        %2168 = vmatpush1.bf16.msra.mxu0 %v2146
        %2169 = vmatprep.subr.bf16.mxu0 0
        %2170 = vmatpush1.bf16.msra.mxu0 %v2145
        %2171 = vmatprep.subr.bf16.mxu0 0
        %2172 = vmatpush1.bf16.msra.mxu0 %v2144
        %2173 = vmatprep.subr.bf16.mxu0 0
        %2174 = vmatpush1.bf16.msra.mxu0 %v2143
        %2175 = vmatprep.subr.bf16.mxu0 0
        %2176 = vmatpush2.bf16.msra.mxu0 0
        %2177 = vmatprep.subr.bf16.mxu0 0
        %2178 = vmatpush2.bf16.msra.mxu0 0
        %2179 = vmatprep.subr.bf16.mxu0 0
        %2180 = vmatpush2.bf16.msra.mxu0 0
        %2181 = vmatprep.subr.bf16.mxu0 0
        %2182 = vmatpush2.bf16.msra.mxu0 0
        %2183 = vmatprep.subr.bf16.mxu0 0
        %2184 = vmatpush2.bf16.msra.mxu0 0
        %2185 = vmatprep.subr.bf16.mxu0 0
        %2186 = vmatpush2.bf16.msra.mxu0 0
        %2187 = vmatprep.subr.bf16.mxu0 0
        %2188 = vmatpush2.bf16.msra.mxu0 0
        %2189 = vmatprep.subr.bf16.mxu0 0
        %2190 = vmatpush2.bf16.msra.mxu0 0
        %2191 = vmatprep.mubr.bf16.mxu0 0
        %2192 = vmatmul.mubr.bf16.gmra.mxu0 %v866
        %v2193 = vpop.f32.mrf.mxu0
        %v2194 = vadd.f32 %v1842, %v2193
        %v2195 = vpop.f32.mrf.mxu0
        %v2196 = vpop.f32.mrf.mxu0
        %v2197 = vpop.f32.mrf.mxu0
        %2198 = vdwg.mxu0
        %v2199 = vpack.c.bf16 %v1042, %v1042
        %v2200 = vpack.c.bf16 %v1130, %v1130
        %v2201 = vpack.c.bf16 %v1218, %v1218
        %v2202 = vpack.c.bf16 %v1306, %v1306
        %v2203 = vpack.c.bf16 %v1486, %v1486
        %v2204 = vpack.c.bf16 %v1574, %v1574
        %v2205 = vpack.c.bf16 %v1662, %v1662
        %v2206 = vpack.c.bf16 %v1750, %v1750
        %v2207 = vpack.c.bf16 %v1930, %v1930
        %v2208 = vpack.c.bf16 %v2018, %v2018
        %v2209 = vpack.c.bf16 %v2106, %v2106
        %v2210 = vpack.c.bf16 %v2194, %v2194
        %vm2211 = vcmask 261120
        %v2213 = vsel %vm2211, %v2199, 0
        %v2216 = vsel %vm2211, %v2203, 0
        %2218 = vmatprep.subr.bf16.mxu0 0
        %2219 = vmatpush1.bf16.xpose.msra.mxu0 0
        %2220 = vmatprep.subr.bf16.mxu0 0
        %2221 = vmatpush1.bf16.xpose.msra.mxu0 0
        %2222 = vmatprep.subr.bf16.mxu0 0
        %2223 = vmatpush1.bf16.xpose.msra.mxu0 0
        %2224 = vmatprep.subr.bf16.mxu0 0
        %2225 = vmatpush1.bf16.xpose.msra.mxu0 0
        %2226 = vmatprep.subr.bf16.mxu0 0
        %2227 = vmatpush1.bf16.xpose.msra.mxu0 0
        %2228 = vmatprep.subr.bf16.mxu0 0
        %2229 = vmatpush1.bf16.xpose.msra.mxu0 0
        %2230 = vmatprep.subr.bf16.mxu0 0
        %2231 = vmatpush1.bf16.xpose.msra.mxu0 0
        %2232 = vmatprep.subr.bf16.mxu0 0
        %2233 = vmatpush1.bf16.xpose.msra.mxu0 %v2216
        %2234 = vmatprep.subr.bf16.mxu0 0
        %2235 = vmatpush2.bf16.xpose.msra.mxu0 0
        %2236 = vmatprep.subr.bf16.mxu0 0
        %2237 = vmatpush2.bf16.xpose.msra.mxu0 0
        %2238 = vmatprep.subr.bf16.mxu0 0
        %2239 = vmatpush2.bf16.xpose.msra.mxu0 0
        %2240 = vmatprep.subr.bf16.mxu0 0
        %2241 = vmatpush2.bf16.xpose.msra.mxu0 0
        %2242 = vmatprep.subr.bf16.mxu0 0
        %2243 = vmatpush2.bf16.xpose.msra.mxu0 0
        %2244 = vmatprep.subr.bf16.mxu0 0
        %2245 = vmatpush2.bf16.xpose.msra.mxu0 0
        %2246 = vmatprep.subr.bf16.mxu0 0
        %2247 = vmatpush2.bf16.xpose.msra.mxu0 0
        %2248 = vmatprep.subr.bf16.mxu0 0
        %2249 = vmatpush2.bf16.xpose.msra.mxu0 0
        %2250 = vmatprep.mubr.bf16.mxu0 0
        %2251 = vmatmul.mubr.bf16.gmra.mxu0 %v2213
        %v2252 = vpop.f32.mrf.mxu0
        %v2253 = vadd.f32 0.0, %v2252
        %v2254 = vpop.f32.mrf.mxu0
        %v2255 = vpop.f32.mrf.mxu0
        %v2256 = vpop.f32.mrf.mxu0
        %2257 = vdwg.mxu0
        %v2259 = vsel %vm2211, %v2200, 0
        %v2262 = vsel %vm2211, %v2204, 0
        %2264 = vmatprep.subr.bf16.mxu0 0
        %2265 = vmatpush1.bf16.xpose.msra.mxu0 0
        %2266 = vmatprep.subr.bf16.mxu0 0
        %2267 = vmatpush1.bf16.xpose.msra.mxu0 0
        %2268 = vmatprep.subr.bf16.mxu0 0
        %2269 = vmatpush1.bf16.xpose.msra.mxu0 0
        %2270 = vmatprep.subr.bf16.mxu0 0
        %2271 = vmatpush1.bf16.xpose.msra.mxu0 0
        %2272 = vmatprep.subr.bf16.mxu0 0
        %2273 = vmatpush1.bf16.xpose.msra.mxu0 0
        %2274 = vmatprep.subr.bf16.mxu0 0
        %2275 = vmatpush1.bf16.xpose.msra.mxu0 0
        %2276 = vmatprep.subr.bf16.mxu0 0
        %2277 = vmatpush1.bf16.xpose.msra.mxu0 0
        %2278 = vmatprep.subr.bf16.mxu0 0
        %2279 = vmatpush1.bf16.xpose.msra.mxu0 %v2262
        %2280 = vmatprep.subr.bf16.mxu0 0
        %2281 = vmatpush2.bf16.xpose.msra.mxu0 0
        %2282 = vmatprep.subr.bf16.mxu0 0
        %2283 = vmatpush2.bf16.xpose.msra.mxu0 0
        %2284 = vmatprep.subr.bf16.mxu0 0
        %2285 = vmatpush2.bf16.xpose.msra.mxu0 0
        %2286 = vmatprep.subr.bf16.mxu0 0
        %2287 = vmatpush2.bf16.xpose.msra.mxu0 0
        %2288 = vmatprep.subr.bf16.mxu0 0
        %2289 = vmatpush2.bf16.xpose.msra.mxu0 0
        %2290 = vmatprep.subr.bf16.mxu0 0
        %2291 = vmatpush2.bf16.xpose.msra.mxu0 0
        %2292 = vmatprep.subr.bf16.mxu0 0
        %2293 = vmatpush2.bf16.xpose.msra.mxu0 0
        %2294 = vmatprep.subr.bf16.mxu0 0
        %2295 = vmatpush2.bf16.xpose.msra.mxu0 0
        %2296 = vmatprep.mubr.bf16.mxu0 0
        %2297 = vmatmul.mubr.bf16.gmra.mxu0 %v2259
        %v2298 = vpop.f32.mrf.mxu0
        %v2299 = vadd.f32 0.0, %v2298
        %v2300 = vpop.f32.mrf.mxu0
        %v2301 = vpop.f32.mrf.mxu0
        %v2302 = vpop.f32.mrf.mxu0
        %2303 = vdwg.mxu0
        %v2305 = vsel %vm2211, %v2201, 0
        %v2308 = vsel %vm2211, %v2205, 0
        %2310 = vmatprep.subr.bf16.mxu0 0
        %2311 = vmatpush1.bf16.xpose.msra.mxu0 0
        %2312 = vmatprep.subr.bf16.mxu0 0
        %2313 = vmatpush1.bf16.xpose.msra.mxu0 0
        %2314 = vmatprep.subr.bf16.mxu0 0
        %2315 = vmatpush1.bf16.xpose.msra.mxu0 0
        %2316 = vmatprep.subr.bf16.mxu0 0
        %2317 = vmatpush1.bf16.xpose.msra.mxu0 0
        %2318 = vmatprep.subr.bf16.mxu0 0
        %2319 = vmatpush1.bf16.xpose.msra.mxu0 0
        %2320 = vmatprep.subr.bf16.mxu0 0
        %2321 = vmatpush1.bf16.xpose.msra.mxu0 0
        %2322 = vmatprep.subr.bf16.mxu0 0
        %2323 = vmatpush1.bf16.xpose.msra.mxu0 0
        %2324 = vmatprep.subr.bf16.mxu0 0
        %2325 = vmatpush1.bf16.xpose.msra.mxu0 %v2308
        %2326 = vmatprep.subr.bf16.mxu0 0
        %2327 = vmatpush2.bf16.xpose.msra.mxu0 0
        %2328 = vmatprep.subr.bf16.mxu0 0
        %2329 = vmatpush2.bf16.xpose.msra.mxu0 0
        %2330 = vmatprep.subr.bf16.mxu0 0
        %2331 = vmatpush2.bf16.xpose.msra.mxu0 0
        %2332 = vmatprep.subr.bf16.mxu0 0
        %2333 = vmatpush2.bf16.xpose.msra.mxu0 0
        %2334 = vmatprep.subr.bf16.mxu0 0
        %2335 = vmatpush2.bf16.xpose.msra.mxu0 0
        %2336 = vmatprep.subr.bf16.mxu0 0
        %2337 = vmatpush2.bf16.xpose.msra.mxu0 0
        %2338 = vmatprep.subr.bf16.mxu0 0
        %2339 = vmatpush2.bf16.xpose.msra.mxu0 0
        %2340 = vmatprep.subr.bf16.mxu0 0
        %2341 = vmatpush2.bf16.xpose.msra.mxu0 0
        %2342 = vmatprep.mubr.bf16.mxu0 0
        %2343 = vmatmul.mubr.bf16.gmra.mxu0 %v2305
        %v2344 = vpop.f32.mrf.mxu0
        %v2345 = vadd.f32 0.0, %v2344
        %v2346 = vpop.f32.mrf.mxu0
        %v2347 = vpop.f32.mrf.mxu0
        %v2348 = vpop.f32.mrf.mxu0
        %2349 = vdwg.mxu0
        %v2351 = vsel %vm2211, %v2202, 0
        %v2354 = vsel %vm2211, %v2206, 0
        %2356 = vmatprep.subr.bf16.mxu0 0
        %2357 = vmatpush1.bf16.xpose.msra.mxu0 0
        %2358 = vmatprep.subr.bf16.mxu0 0
        %2359 = vmatpush1.bf16.xpose.msra.mxu0 0
        %2360 = vmatprep.subr.bf16.mxu0 0
        %2361 = vmatpush1.bf16.xpose.msra.mxu0 0
        %2362 = vmatprep.subr.bf16.mxu0 0
        %2363 = vmatpush1.bf16.xpose.msra.mxu0 0
        %2364 = vmatprep.subr.bf16.mxu0 0
        %2365 = vmatpush1.bf16.xpose.msra.mxu0 0
        %2366 = vmatprep.subr.bf16.mxu0 0
        %2367 = vmatpush1.bf16.xpose.msra.mxu0 0
        %2368 = vmatprep.subr.bf16.mxu0 0
        %2369 = vmatpush1.bf16.xpose.msra.mxu0 0
        %2370 = vmatprep.subr.bf16.mxu0 0
        %2371 = vmatpush1.bf16.xpose.msra.mxu0 %v2354
        %2372 = vmatprep.subr.bf16.mxu0 0
        %2373 = vmatpush2.bf16.xpose.msra.mxu0 0
        %2374 = vmatprep.subr.bf16.mxu0 0
        %2375 = vmatpush2.bf16.xpose.msra.mxu0 0
        %2376 = vmatprep.subr.bf16.mxu0 0
        %2377 = vmatpush2.bf16.xpose.msra.mxu0 0
        %2378 = vmatprep.subr.bf16.mxu0 0
        %2379 = vmatpush2.bf16.xpose.msra.mxu0 0
        %2380 = vmatprep.subr.bf16.mxu0 0
        %2381 = vmatpush2.bf16.xpose.msra.mxu0 0
        %2382 = vmatprep.subr.bf16.mxu0 0
        %2383 = vmatpush2.bf16.xpose.msra.mxu0 0
        %2384 = vmatprep.subr.bf16.mxu0 0
        %2385 = vmatpush2.bf16.xpose.msra.mxu0 0
        %2386 = vmatprep.subr.bf16.mxu0 0
        %2387 = vmatpush2.bf16.xpose.msra.mxu0 0
        %2388 = vmatprep.mubr.bf16.mxu0 0
        %2389 = vmatmul.mubr.bf16.gmra.mxu0 %v2351
        %v2390 = vpop.f32.mrf.mxu0
        %v2391 = vadd.f32 0.0, %v2390
        %v2392 = vpop.f32.mrf.mxu0
        %v2393 = vpop.f32.mrf.mxu0
        %v2394 = vpop.f32.mrf.mxu0
        %2395 = vdwg.mxu0
        %v2396 = vmul.f32 %v2253, 0.17677669
        %v2397 = vmul.f32 %v2299, 0.17677669
        %v2398 = vmul.f32 %v2345, 0.17677669
        %v2399 = vmul.f32 %v2391, 0.17677669
        %v2400 = vsel %vm865, 1, 0
        %vm2401 = vcmp.eq.s32.totalorder %v2400, 1
        %v2402 = vsel %vm2401, %v2396, -1e+09
        %v2403 = vsel %vm2401, %v2397, -1e+09
        %v2404 = vsel %vm2401, %v2398, -1e+09
        %v2405 = vsel %vm2401, %v2399, -1e+09
        %vm2406 = vcmask 64512
        %v2407 = vsel %vm2406, %v2402, -inf
        %2408 = vmax.xlane.f32.xlu0 %v2407
        %v2409 = vpop.xlane.xlu0 %2408
        %v2410 = vsel %vm2406, %v2403, -inf
        %2411 = vmax.xlane.f32.xlu0 %v2410
        %v2412 = vpop.xlane.xlu0 %2411
        %v2413 = vsel %vm2406, %v2404, -inf
        %2414 = vmax.xlane.f32.xlu0 %v2413
        %v2415 = vpop.xlane.xlu0 %2414
        %v2416 = vsel %vm2406, %v2405, -inf
        %2417 = vmax.xlane.f32.xlu0 %v2416
        %v2418 = vpop.xlane.xlu0 %2417
        %v2419 = vsub.f32 %v2402, %v2409
        %v2420 = vsub.f32 %v2403, %v2412
        %v2421 = vsub.f32 %v2404, %v2415
        %v2422 = vsub.f32 %v2405, %v2418
        %v2423 = vmul.f32 %v2419, 1.442695
        %v2424 = vpow.pop %v2423
        %v2425 = vmul.f32 %v2420, 1.442695
        %v2426 = vpow.pop %v2425
        %v2427 = vmul.f32 %v2421, 1.442695
        %v2428 = vpow.pop %v2427
        %v2429 = vmul.f32 %v2422, 1.442695
        %v2430 = vpow.pop %v2429
        %v2431 = vsel %vm2406, %v2424, 0.0
        %2432 = vadd.xlane.f32.xlu0 %v2431
        %v2433 = vpop.xlane.xlu0 %2432
        %v2434 = vsel %vm2406, %v2426, 0.0
        %2435 = vadd.xlane.f32.xlu0 %v2434
        %v2436 = vpop.xlane.xlu0 %2435
        %v2437 = vsel %vm2406, %v2428, 0.0
        %2438 = vadd.xlane.f32.xlu0 %v2437
        %v2439 = vpop.xlane.xlu0 %2438
        %v2440 = vsel %vm2406, %v2430, 0.0
        %2441 = vadd.xlane.f32.xlu0 %v2440
        %v2442 = vpop.xlane.xlu0 %2441
        %v2443 = vrcp.pop %v2433
        %v2444 = vrcp.pop %v2436
        %v2445 = vrcp.pop %v2439
        %v2446 = vrcp.pop %v2442
        %v2447 = vmul.f32 %v2424, %v2443
        %v2448 = vmul.f32 %v2426, %v2444
        %v2449 = vmul.f32 %v2428, %v2445
        %v2450 = vmul.f32 %v2430, %v2446
        %v2451 = vpack.c.bf16 %v2447, %v2447
        %v2452 = vpack.c.bf16 %v2448, %v2448
        %v2453 = vpack.c.bf16 %v2449, %v2449
        %v2454 = vpack.c.bf16 %v2450, %v2450
        %v2456 = vsel %vm2406, %v2451, 0
        %vm2458 = vcmask 1043456
        %v2460 = vsel %vm2458, %v2207, 0
        %2462 = vmatprep.subr.bf16.mxu0 0
        %2463 = vmatpush1.bf16.msra.mxu0 0
        %2464 = vmatprep.subr.bf16.mxu0 0
        %2465 = vmatpush1.bf16.msra.mxu0 0
        %2466 = vmatprep.subr.bf16.mxu0 0
        %2467 = vmatpush1.bf16.msra.mxu0 0
        %2468 = vmatprep.subr.bf16.mxu0 0
        %2469 = vmatpush1.bf16.msra.mxu0 0
        %2470 = vmatprep.subr.bf16.mxu0 0
        %2471 = vmatpush1.bf16.msra.mxu0 0
        %2472 = vmatprep.subr.bf16.mxu0 0
        %2473 = vmatpush1.bf16.msra.mxu0 0
        %2474 = vmatprep.subr.bf16.mxu0 0
        %2475 = vmatpush1.bf16.msra.mxu0 0
        %2476 = vmatprep.subr.bf16.mxu0 0
        %2477 = vmatpush1.bf16.msra.mxu0 %v2460
        %2478 = vmatprep.subr.bf16.mxu0 0
        %2479 = vmatpush2.bf16.msra.mxu0 0
        %2480 = vmatprep.subr.bf16.mxu0 0
        %2481 = vmatpush2.bf16.msra.mxu0 0
        %2482 = vmatprep.subr.bf16.mxu0 0
        %2483 = vmatpush2.bf16.msra.mxu0 0
        %2484 = vmatprep.subr.bf16.mxu0 0
        %2485 = vmatpush2.bf16.msra.mxu0 0
        %2486 = vmatprep.subr.bf16.mxu0 0
        %2487 = vmatpush2.bf16.msra.mxu0 0
        %2488 = vmatprep.subr.bf16.mxu0 0
        %2489 = vmatpush2.bf16.msra.mxu0 0
        %2490 = vmatprep.subr.bf16.mxu0 0
        %2491 = vmatpush2.bf16.msra.mxu0 0
        %2492 = vmatprep.subr.bf16.mxu0 0
        %2493 = vmatpush2.bf16.msra.mxu0 0
        %2494 = vmatprep.mubr.bf16.mxu0 0
        %2495 = vmatmul.mubr.bf16.gmra.mxu0 %v2456
        %v2496 = vpop.f32.mrf.mxu0
        %v2497 = vadd.f32 0.0, %v2496
        %v2498 = vpop.f32.mrf.mxu0
        %v2499 = vpop.f32.mrf.mxu0
        %v2500 = vpop.f32.mrf.mxu0
        %2501 = vdwg.mxu0
        %v2503 = vsel %vm2406, %v2452, 0
        %v2506 = vsel %vm2458, %v2208, 0
        %2508 = vmatprep.subr.bf16.mxu0 0
        %2509 = vmatpush1.bf16.msra.mxu0 0
        %2510 = vmatprep.subr.bf16.mxu0 0
        %2511 = vmatpush1.bf16.msra.mxu0 0
        %2512 = vmatprep.subr.bf16.mxu0 0
        %2513 = vmatpush1.bf16.msra.mxu0 0
        %2514 = vmatprep.subr.bf16.mxu0 0
        %2515 = vmatpush1.bf16.msra.mxu0 0
        %2516 = vmatprep.subr.bf16.mxu0 0
        %2517 = vmatpush1.bf16.msra.mxu0 0
        %2518 = vmatprep.subr.bf16.mxu0 0
        %2519 = vmatpush1.bf16.msra.mxu0 0
        %2520 = vmatprep.subr.bf16.mxu0 0
        %2521 = vmatpush1.bf16.msra.mxu0 0
        %2522 = vmatprep.subr.bf16.mxu0 0
        %2523 = vmatpush1.bf16.msra.mxu0 %v2506
        %2524 = vmatprep.subr.bf16.mxu0 0
        %2525 = vmatpush2.bf16.msra.mxu0 0
        %2526 = vmatprep.subr.bf16.mxu0 0
        %2527 = vmatpush2.bf16.msra.mxu0 0
        %2528 = vmatprep.subr.bf16.mxu0 0
        %2529 = vmatpush2.bf16.msra.mxu0 0
        %2530 = vmatprep.subr.bf16.mxu0 0
        %2531 = vmatpush2.bf16.msra.mxu0 0
        %2532 = vmatprep.subr.bf16.mxu0 0
        %2533 = vmatpush2.bf16.msra.mxu0 0
        %2534 = vmatprep.subr.bf16.mxu0 0
        %2535 = vmatpush2.bf16.msra.mxu0 0
        %2536 = vmatprep.subr.bf16.mxu0 0
        %2537 = vmatpush2.bf16.msra.mxu0 0
        %2538 = vmatprep.subr.bf16.mxu0 0
        %2539 = vmatpush2.bf16.msra.mxu0 0
        %2540 = vmatprep.mubr.bf16.mxu0 0
        %2541 = vmatmul.mubr.bf16.gmra.mxu0 %v2503
        %v2542 = vpop.f32.mrf.mxu0
        %v2543 = vadd.f32 0.0, %v2542
        %v2544 = vpop.f32.mrf.mxu0
        %v2545 = vpop.f32.mrf.mxu0
        %v2546 = vpop.f32.mrf.mxu0
        %2547 = vdwg.mxu0
        %v2549 = vsel %vm2406, %v2453, 0
        %v2552 = vsel %vm2458, %v2209, 0
        %2554 = vmatprep.subr.bf16.mxu0 0
        %2555 = vmatpush1.bf16.msra.mxu0 0
        %2556 = vmatprep.subr.bf16.mxu0 0
        %2557 = vmatpush1.bf16.msra.mxu0 0
        %2558 = vmatprep.subr.bf16.mxu0 0
        %2559 = vmatpush1.bf16.msra.mxu0 0
        %2560 = vmatprep.subr.bf16.mxu0 0
        %2561 = vmatpush1.bf16.msra.mxu0 0
        %2562 = vmatprep.subr.bf16.mxu0 0
        %2563 = vmatpush1.bf16.msra.mxu0 0
        %2564 = vmatprep.subr.bf16.mxu0 0
        %2565 = vmatpush1.bf16.msra.mxu0 0
        %2566 = vmatprep.subr.bf16.mxu0 0
        %2567 = vmatpush1.bf16.msra.mxu0 0
        %2568 = vmatprep.subr.bf16.mxu0 0
        %2569 = vmatpush1.bf16.msra.mxu0 %v2552
        %2570 = vmatprep.subr.bf16.mxu0 0
        %2571 = vmatpush2.bf16.msra.mxu0 0
        %2572 = vmatprep.subr.bf16.mxu0 0
        %2573 = vmatpush2.bf16.msra.mxu0 0
        %2574 = vmatprep.subr.bf16.mxu0 0
        %2575 = vmatpush2.bf16.msra.mxu0 0
        %2576 = vmatprep.subr.bf16.mxu0 0
        %2577 = vmatpush2.bf16.msra.mxu0 0
        %2578 = vmatprep.subr.bf16.mxu0 0
        %2579 = vmatpush2.bf16.msra.mxu0 0
        %2580 = vmatprep.subr.bf16.mxu0 0
        %2581 = vmatpush2.bf16.msra.mxu0 0
        %2582 = vmatprep.subr.bf16.mxu0 0
        %2583 = vmatpush2.bf16.msra.mxu0 0
        %2584 = vmatprep.subr.bf16.mxu0 0
        %2585 = vmatpush2.bf16.msra.mxu0 0
        %2586 = vmatprep.mubr.bf16.mxu0 0
        %2587 = vmatmul.mubr.bf16.gmra.mxu0 %v2549
        %v2588 = vpop.f32.mrf.mxu0
        %v2589 = vadd.f32 0.0, %v2588
        %v2590 = vpop.f32.mrf.mxu0
        %v2591 = vpop.f32.mrf.mxu0
        %v2592 = vpop.f32.mrf.mxu0
        %2593 = vdwg.mxu0
        %v2595 = vsel %vm2406, %v2454, 0
        %v2598 = vsel %vm2458, %v2210, 0
        %2600 = vmatprep.subr.bf16.mxu0 0
        %2601 = vmatpush1.bf16.msra.mxu0 0
        %2602 = vmatprep.subr.bf16.mxu0 0
        %2603 = vmatpush1.bf16.msra.mxu0 0
        %2604 = vmatprep.subr.bf16.mxu0 0
        %2605 = vmatpush1.bf16.msra.mxu0 0
        %2606 = vmatprep.subr.bf16.mxu0 0
        %2607 = vmatpush1.bf16.msra.mxu0 0
        %2608 = vmatprep.subr.bf16.mxu0 0
        %2609 = vmatpush1.bf16.msra.mxu0 0
        %2610 = vmatprep.subr.bf16.mxu0 0
        %2611 = vmatpush1.bf16.msra.mxu0 0
        %2612 = vmatprep.subr.bf16.mxu0 0
        %2613 = vmatpush1.bf16.msra.mxu0 0
        %2614 = vmatprep.subr.bf16.mxu0 0
        %2615 = vmatpush1.bf16.msra.mxu0 %v2598
        %2616 = vmatprep.subr.bf16.mxu0 0
        %2617 = vmatpush2.bf16.msra.mxu0 0
        %2618 = vmatprep.subr.bf16.mxu0 0
        %2619 = vmatpush2.bf16.msra.mxu0 0
        %2620 = vmatprep.subr.bf16.mxu0 0
        %2621 = vmatpush2.bf16.msra.mxu0 0
        %2622 = vmatprep.subr.bf16.mxu0 0
        %2623 = vmatpush2.bf16.msra.mxu0 0
        %2624 = vmatprep.subr.bf16.mxu0 0
        %2625 = vmatpush2.bf16.msra.mxu0 0
        %2626 = vmatprep.subr.bf16.mxu0 0
        %2627 = vmatpush2.bf16.msra.mxu0 0
        %2628 = vmatprep.subr.bf16.mxu0 0
        %2629 = vmatpush2.bf16.msra.mxu0 0
        %2630 = vmatprep.subr.bf16.mxu0 0
        %2631 = vmatpush2.bf16.msra.mxu0 0
        %2632 = vmatprep.mubr.bf16.mxu0 0
        %2633 = vmatmul.mubr.bf16.gmra.mxu0 %v2595
        %v2634 = vpop.f32.mrf.mxu0
        %v2635 = vadd.f32 0.0, %v2634
        %v2636 = vpop.f32.mrf.mxu0
        %v2637 = vpop.f32.mrf.mxu0
        %v2638 = vpop.f32.mrf.mxu0
        %2639 = vdwg.mxu0
        %v2640 = vpack.c.bf16 %v2497, %v2497
        %v2641 = vpack.c.bf16 %v2543, %v2543
        %v2642 = vpack.c.bf16 %v2589, %v2589
        %v2643 = vpack.c.bf16 %v2635, %v2635
        %v2644 = vld [vmem:[%s5] sm:$0xf]
        %v2645 = vld [vmem:[%s5 + $0x4] sm:$0xf]
        %v2646 = vld [vmem:[%s5 + $0x8] sm:$0xf]
        %v2647 = vld [vmem:[%s5 + $0xc] sm:$0xf]
        %v2648 = vld [vmem:[%s5 + $0x10] sm:$0xf]
        %v2649 = vld [vmem:[%s5 + $0x14] sm:$0xf]
        %v2650 = vld [vmem:[%s5 + $0x18] sm:$0xf]
        %v2651 = vld [vmem:[%s5 + $0x1c] sm:$0xf]
        %v2652 = vld [vmem:[%s5 + $0x20] sm:$0xf]
        %v2653 = vld [vmem:[%s5 + $0x24] sm:$0xf]
        %v2654 = vld [vmem:[%s5 + $0x28] sm:$0xf]
        %v2655 = vld [vmem:[%s5 + $0x2c] sm:$0xf]
        %v2656 = vld [vmem:[%s5 + $0x30] sm:$0xf]
        %v2657 = vld [vmem:[%s5 + $0x34] sm:$0xf]
        %v2658 = vld [vmem:[%s5 + $0x38] sm:$0xf]
        %v2659 = vld [vmem:[%s5 + $0x3c] sm:$0xf]
        %v2664 = vunpack.c.l.b16 %v2644
        %v2665 = vunpack.c.l.b16 %v2645
        %v2666 = vunpack.c.l.b16 %v2646
        %v2667 = vunpack.c.l.b16 %v2647
        %v2668 = vpack.c.b16 %v2665, %v2664
        %v2669 = vpack.c.b16 %v2667, %v2666
        %v2673 = vsel %vm2211, %v2640, 0
        %2675 = vmatprep.subr.bf16.mxu0 0
        %2676 = vmatpush1.bf16.msra.mxu0 0
        %2677 = vmatprep.subr.bf16.mxu0 0
        %2678 = vmatpush1.bf16.msra.mxu0 0
        %2679 = vmatprep.subr.bf16.mxu0 0
        %2680 = vmatpush1.bf16.msra.mxu0 0
        %2681 = vmatprep.subr.bf16.mxu0 0
        %2682 = vmatpush1.bf16.msra.mxu0 0
        %2683 = vmatprep.subr.bf16.mxu0 0
        %2684 = vmatpush1.bf16.msra.mxu0 0
        %2685 = vmatprep.subr.bf16.mxu0 0
        %2686 = vmatpush1.bf16.msra.mxu0 0
        %2687 = vmatprep.subr.bf16.mxu0 0
        %2688 = vmatpush1.bf16.msra.mxu0 %v2669
        %2689 = vmatprep.subr.bf16.mxu0 0
        %2690 = vmatpush1.bf16.msra.mxu0 %v2668
        %2691 = vmatprep.subr.bf16.mxu0 0
        %2692 = vmatpush2.bf16.msra.mxu0 0
        %2693 = vmatprep.subr.bf16.mxu0 0
        %2694 = vmatpush2.bf16.msra.mxu0 0
        %2695 = vmatprep.subr.bf16.mxu0 0
        %2696 = vmatpush2.bf16.msra.mxu0 0
        %2697 = vmatprep.subr.bf16.mxu0 0
        %2698 = vmatpush2.bf16.msra.mxu0 0
        %2699 = vmatprep.subr.bf16.mxu0 0
        %2700 = vmatpush2.bf16.msra.mxu0 0
        %2701 = vmatprep.subr.bf16.mxu0 0
        %2702 = vmatpush2.bf16.msra.mxu0 0
        %2703 = vmatprep.subr.bf16.mxu0 0
        %2704 = vmatpush2.bf16.msra.mxu0 0
        %2705 = vmatprep.subr.bf16.mxu0 0
        %2706 = vmatpush2.bf16.msra.mxu0 0
        %2707 = vmatprep.mubr.bf16.mxu0 0
        %2708 = vmatmul.mubr.bf16.gmra.mxu0 %v2673
        %v2709 = vpop.f32.mrf.mxu0
        %v2710 = vadd.f32 0.0, %v2709
        %v2711 = vpop.f32.mrf.mxu0
        %v2712 = vpop.f32.mrf.mxu0
        %v2713 = vpop.f32.mrf.mxu0
        %2714 = vdwg.mxu0
        %v2719 = vunpack.c.l.b16 %v2648
        %v2720 = vunpack.c.l.b16 %v2649
        %v2721 = vunpack.c.l.b16 %v2650
        %v2722 = vunpack.c.l.b16 %v2651
        %v2723 = vpack.c.b16 %v2720, %v2719
        %v2724 = vpack.c.b16 %v2722, %v2721
        %v2728 = vsel %vm2211, %v2641, 0
        %2730 = vmatprep.subr.bf16.mxu0 0
        %2731 = vmatpush1.bf16.msra.mxu0 0
        %2732 = vmatprep.subr.bf16.mxu0 0
        %2733 = vmatpush1.bf16.msra.mxu0 0
        %2734 = vmatprep.subr.bf16.mxu0 0
        %2735 = vmatpush1.bf16.msra.mxu0 0
        %2736 = vmatprep.subr.bf16.mxu0 0
        %2737 = vmatpush1.bf16.msra.mxu0 0
        %2738 = vmatprep.subr.bf16.mxu0 0
        %2739 = vmatpush1.bf16.msra.mxu0 0
        %2740 = vmatprep.subr.bf16.mxu0 0
        %2741 = vmatpush1.bf16.msra.mxu0 0
        %2742 = vmatprep.subr.bf16.mxu0 0
        %2743 = vmatpush1.bf16.msra.mxu0 %v2724
        %2744 = vmatprep.subr.bf16.mxu0 0
        %2745 = vmatpush1.bf16.msra.mxu0 %v2723
        %2746 = vmatprep.subr.bf16.mxu0 0
        %2747 = vmatpush2.bf16.msra.mxu0 0
        %2748 = vmatprep.subr.bf16.mxu0 0
        %2749 = vmatpush2.bf16.msra.mxu0 0
        %2750 = vmatprep.subr.bf16.mxu0 0
        %2751 = vmatpush2.bf16.msra.mxu0 0
        %2752 = vmatprep.subr.bf16.mxu0 0
        %2753 = vmatpush2.bf16.msra.mxu0 0
        %2754 = vmatprep.subr.bf16.mxu0 0
        %2755 = vmatpush2.bf16.msra.mxu0 0
        %2756 = vmatprep.subr.bf16.mxu0 0
        %2757 = vmatpush2.bf16.msra.mxu0 0
        %2758 = vmatprep.subr.bf16.mxu0 0
        %2759 = vmatpush2.bf16.msra.mxu0 0
        %2760 = vmatprep.subr.bf16.mxu0 0
        %2761 = vmatpush2.bf16.msra.mxu0 0
        %2762 = vmatprep.mubr.bf16.mxu0 0
        %2763 = vmatmul.mubr.bf16.gmra.mxu0 %v2728
        %v2764 = vpop.f32.mrf.mxu0
        %v2765 = vadd.f32 0.0, %v2764
        %v2766 = vpop.f32.mrf.mxu0
        %v2767 = vpop.f32.mrf.mxu0
        %v2768 = vpop.f32.mrf.mxu0
        %2769 = vdwg.mxu0
        %v2774 = vunpack.c.l.b16 %v2652
        %v2775 = vunpack.c.l.b16 %v2653
        %v2776 = vunpack.c.l.b16 %v2654
        %v2777 = vunpack.c.l.b16 %v2655
        %v2778 = vpack.c.b16 %v2775, %v2774
        %v2779 = vpack.c.b16 %v2777, %v2776
        %v2783 = vsel %vm2211, %v2642, 0
        %2785 = vmatprep.subr.bf16.mxu0 0
        %2786 = vmatpush1.bf16.msra.mxu0 0
        %2787 = vmatprep.subr.bf16.mxu0 0
        %2788 = vmatpush1.bf16.msra.mxu0 0
        %2789 = vmatprep.subr.bf16.mxu0 0
        %2790 = vmatpush1.bf16.msra.mxu0 0
        %2791 = vmatprep.subr.bf16.mxu0 0
        %2792 = vmatpush1.bf16.msra.mxu0 0
        %2793 = vmatprep.subr.bf16.mxu0 0
        %2794 = vmatpush1.bf16.msra.mxu0 0
        %2795 = vmatprep.subr.bf16.mxu0 0
        %2796 = vmatpush1.bf16.msra.mxu0 0
        %2797 = vmatprep.subr.bf16.mxu0 0
        %2798 = vmatpush1.bf16.msra.mxu0 %v2779
        %2799 = vmatprep.subr.bf16.mxu0 0
        %2800 = vmatpush1.bf16.msra.mxu0 %v2778
        %2801 = vmatprep.subr.bf16.mxu0 0
        %2802 = vmatpush2.bf16.msra.mxu0 0
        %2803 = vmatprep.subr.bf16.mxu0 0
        %2804 = vmatpush2.bf16.msra.mxu0 0
        %2805 = vmatprep.subr.bf16.mxu0 0
        %2806 = vmatpush2.bf16.msra.mxu0 0
        %2807 = vmatprep.subr.bf16.mxu0 0
        %2808 = vmatpush2.bf16.msra.mxu0 0
        %2809 = vmatprep.subr.bf16.mxu0 0
        %2810 = vmatpush2.bf16.msra.mxu0 0
        %2811 = vmatprep.subr.bf16.mxu0 0
        %2812 = vmatpush2.bf16.msra.mxu0 0
        %2813 = vmatprep.subr.bf16.mxu0 0
        %2814 = vmatpush2.bf16.msra.mxu0 0
        %2815 = vmatprep.subr.bf16.mxu0 0
        %2816 = vmatpush2.bf16.msra.mxu0 0
        %2817 = vmatprep.mubr.bf16.mxu0 0
        %2818 = vmatmul.mubr.bf16.gmra.mxu0 %v2783
        %v2819 = vpop.f32.mrf.mxu0
        %v2820 = vadd.f32 0.0, %v2819
        %v2821 = vpop.f32.mrf.mxu0
        %v2822 = vpop.f32.mrf.mxu0
        %v2823 = vpop.f32.mrf.mxu0
        %2824 = vdwg.mxu0
        %v2829 = vunpack.c.l.b16 %v2656
        %v2830 = vunpack.c.l.b16 %v2657
        %v2831 = vunpack.c.l.b16 %v2658
        %v2832 = vunpack.c.l.b16 %v2659
        %v2833 = vpack.c.b16 %v2830, %v2829
        %v2834 = vpack.c.b16 %v2832, %v2831
        %v2838 = vsel %vm2211, %v2643, 0
        %2840 = vmatprep.subr.bf16.mxu0 0
        %2841 = vmatpush1.bf16.msra.mxu0 0
        %2842 = vmatprep.subr.bf16.mxu0 0
        %2843 = vmatpush1.bf16.msra.mxu0 0
        %2844 = vmatprep.subr.bf16.mxu0 0
        %2845 = vmatpush1.bf16.msra.mxu0 0
        %2846 = vmatprep.subr.bf16.mxu0 0
        %2847 = vmatpush1.bf16.msra.mxu0 0
        %2848 = vmatprep.subr.bf16.mxu0 0
        %2849 = vmatpush1.bf16.msra.mxu0 0
        %2850 = vmatprep.subr.bf16.mxu0 0
        %2851 = vmatpush1.bf16.msra.mxu0 0
        %2852 = vmatprep.subr.bf16.mxu0 0
        %2853 = vmatpush1.bf16.msra.mxu0 %v2834
        %2854 = vmatprep.subr.bf16.mxu0 0
        %2855 = vmatpush1.bf16.msra.mxu0 %v2833
        %2856 = vmatprep.subr.bf16.mxu0 0
        %2857 = vmatpush2.bf16.msra.mxu0 0
        %2858 = vmatprep.subr.bf16.mxu0 0
        %2859 = vmatpush2.bf16.msra.mxu0 0
        %2860 = vmatprep.subr.bf16.mxu0 0
        %2861 = vmatpush2.bf16.msra.mxu0 0
        %2862 = vmatprep.subr.bf16.mxu0 0
        %2863 = vmatpush2.bf16.msra.mxu0 0
        %2864 = vmatprep.subr.bf16.mxu0 0
        %2865 = vmatpush2.bf16.msra.mxu0 0
        %2866 = vmatprep.subr.bf16.mxu0 0
        %2867 = vmatpush2.bf16.msra.mxu0 0
        %2868 = vmatprep.subr.bf16.mxu0 0
        %2869 = vmatpush2.bf16.msra.mxu0 0
        %2870 = vmatprep.subr.bf16.mxu0 0
        %2871 = vmatpush2.bf16.msra.mxu0 0
        %2872 = vmatprep.mubr.bf16.mxu0 0
        %2873 = vmatmul.mubr.bf16.gmra.mxu0 %v2838
        %v2874 = vpop.f32.mrf.mxu0
        %v2875 = vadd.f32 0.0, %v2874
        %v2876 = vpop.f32.mrf.mxu0
        %v2877 = vpop.f32.mrf.mxu0
        %v2878 = vpop.f32.mrf.mxu0
        %2879 = vdwg.mxu0
        %v2880 = vadd.f32 %v2710, %v2765
        %v2881 = vadd.f32 %v2880, %v2820
        %v2882 = vadd.f32 %v2881, %v2875
        %v2883 = vld [vmem:[%s9] sm:$0x1]
        %v2885 = vlaneseq
        %v2886 = vshrl.u32 %v2885, 7
        %v2887 = vsub.s32 0, %v2886
        %v2888 = vrot.slane %v2883, %v2887
        %v2890 = vadd.f32 %v2882, %v2888
        %v2891 = vadd.f32 %v859, %v2890
        %v2892 = vld [vmem:[%s10] sm:$0x1]
        %v2893 = vld [vmem:[%s11] sm:$0x1]
        %2894 = vadd.xlane.f32.xlu0 %v2891
        %v2895 = vpop.xlane.xlu0 %2894
        %v2896 = vrcp.pop 128.0
        %v2897 = vmul.f32 %v2895, %v2896
        %v2898 = vsub.f32 %v2891, %v2897
        %v2899 = vmul.f32 %v2898, %v2898
        %2900 = vadd.xlane.f32.xlu0 %v2899
        %v2901 = vpop.xlane.xlu0 %2900
        %v2902 = vmul.f32 %v2901, %v2896
        %v2903 = vadd.f32 %v2902, 1e-05
        %v2904 = vrsqrt.pop %v2903
        %v2905 = vmul.f32 %v2898, %v2904
        %v2907 = vlaneseq
        %v2908 = vshrl.u32 %v2907, 7
        %v2909 = vsub.s32 0, %v2908
        %v2910 = vrot.slane %v2892, %v2909
        %v2912 = vmul.f32 %v2905, %v2910
        %v2914 = vlaneseq
        %v2915 = vshrl.u32 %v2914, 7
        %v2916 = vsub.s32 0, %v2915
        %v2917 = vrot.slane %v2893, %v2916
        %v2919 = vadd.f32 %v2912, %v2917
        %v2920 = vpack.c.bf16 %v2919, %v2919
        %v2921 = vpack.c.bf16 %v860, %v860
        %v2922 = vld [vmem:[%s12] sm:$0xf]
        %v2923 = vld [vmem:[%s12 + $0x4] sm:$0xf]
        %v2924 = vld [vmem:[%s12 + $0x8] sm:$0xf]
        %v2925 = vld [vmem:[%s12 + $0xc] sm:$0xf]
        %v2926 = vld [vmem:[%s12 + $0x10] sm:$0xf]
        %v2927 = vld [vmem:[%s12 + $0x14] sm:$0xf]
        %v2928 = vld [vmem:[%s12 + $0x18] sm:$0xf]
        %v2929 = vld [vmem:[%s12 + $0x1c] sm:$0xf]
        %v2930 = vld [vmem:[%s12 + $0x20] sm:$0xf]
        %v2931 = vld [vmem:[%s12 + $0x24] sm:$0xf]
        %v2932 = vld [vmem:[%s12 + $0x28] sm:$0xf]
        %v2933 = vld [vmem:[%s12 + $0x2c] sm:$0xf]
        %v2934 = vld [vmem:[%s12 + $0x30] sm:$0xf]
        %v2935 = vld [vmem:[%s12 + $0x34] sm:$0xf]
        %v2936 = vld [vmem:[%s12 + $0x38] sm:$0xf]
        %v2937 = vld [vmem:[%s12 + $0x3c] sm:$0xf]
        %v2938 = vld [vmem:[%s12 + $0x40] sm:$0xf]
        %v2939 = vld [vmem:[%s12 + $0x44] sm:$0xf]
        %v2940 = vld [vmem:[%s12 + $0x48] sm:$0xf]
        %v2941 = vld [vmem:[%s12 + $0x4c] sm:$0xf]
        %v2942 = vld [vmem:[%s12 + $0x50] sm:$0xf]
        %v2943 = vld [vmem:[%s12 + $0x54] sm:$0xf]
        %v2944 = vld [vmem:[%s12 + $0x58] sm:$0xf]
        %v2945 = vld [vmem:[%s12 + $0x5c] sm:$0xf]
        %v2946 = vld [vmem:[%s12 + $0x60] sm:$0xf]
        %v2947 = vld [vmem:[%s12 + $0x64] sm:$0xf]
        %v2948 = vld [vmem:[%s12 + $0x68] sm:$0xf]
        %v2949 = vld [vmem:[%s12 + $0x6c] sm:$0xf]
        %v2950 = vld [vmem:[%s12 + $0x70] sm:$0xf]
        %v2951 = vld [vmem:[%s12 + $0x74] sm:$0xf]
        %v2952 = vld [vmem:[%s12 + $0x78] sm:$0xf]
        %v2953 = vld [vmem:[%s12 + $0x7c] sm:$0xf]
        %v2954 = vld [vmem:[%s12 + $0x80] sm:$0xf]
        %v2955 = vld [vmem:[%s12 + $0x84] sm:$0xf]
        %v2956 = vld [vmem:[%s12 + $0x88] sm:$0xf]
        %v2957 = vld [vmem:[%s12 + $0x8c] sm:$0xf]
        %v2958 = vld [vmem:[%s12 + $0x90] sm:$0xf]
        %v2959 = vld [vmem:[%s12 + $0x94] sm:$0xf]
        %v2960 = vld [vmem:[%s12 + $0x98] sm:$0xf]
        %v2961 = vld [vmem:[%s12 + $0x9c] sm:$0xf]
        %v2962 = vld [vmem:[%s12 + $0xa0] sm:$0xf]
        %v2963 = vld [vmem:[%s12 + $0xa4] sm:$0xf]
        %v2964 = vld [vmem:[%s12 + $0xa8] sm:$0xf]
        %v2965 = vld [vmem:[%s12 + $0xac] sm:$0xf]
        %v2966 = vld [vmem:[%s12 + $0xb0] sm:$0xf]
        %v2967 = vld [vmem:[%s12 + $0xb4] sm:$0xf]
        %v2968 = vld [vmem:[%s12 + $0xb8] sm:$0xf]
        %v2969 = vld [vmem:[%s12 + $0xbc] sm:$0xf]
        %v2970 = vld [vmem:[%s12 + $0xc0] sm:$0xf]
        %v2971 = vld [vmem:[%s12 + $0xc4] sm:$0xf]
        %v2972 = vld [vmem:[%s12 + $0xc8] sm:$0xf]
        %v2973 = vld [vmem:[%s12 + $0xcc] sm:$0xf]
        %v2974 = vld [vmem:[%s12 + $0xd0] sm:$0xf]
        %v2975 = vld [vmem:[%s12 + $0xd4] sm:$0xf]
        %v2976 = vld [vmem:[%s12 + $0xd8] sm:$0xf]
        %v2977 = vld [vmem:[%s12 + $0xdc] sm:$0xf]
        %v2978 = vld [vmem:[%s12 + $0xe0] sm:$0xf]
        %v2979 = vld [vmem:[%s12 + $0xe4] sm:$0xf]
        %v2980 = vld [vmem:[%s12 + $0xe8] sm:$0xf]
        %v2981 = vld [vmem:[%s12 + $0xec] sm:$0xf]
        %v2982 = vld [vmem:[%s12 + $0xf0] sm:$0xf]
        %v2983 = vld [vmem:[%s12 + $0xf4] sm:$0xf]
        %v2984 = vld [vmem:[%s12 + $0xf8] sm:$0xf]
        %v2985 = vld [vmem:[%s12 + $0xfc] sm:$0xf]
        %v2986 = vld [vmem:[%s16] sm:$0x1]
        %v2987 = vld [vmem:[%s16 + $0x1] sm:$0x1]
        %v2988 = vld [vmem:[%s16 + $0x2] sm:$0x1]
        %v2989 = vld [vmem:[%s16 + $0x3] sm:$0x1]
        %v2994 = vlaneseq
        %v2995 = vshrl.u32 %v2994, 7
        %v2996 = vsub.s32 0, %v2995
        %v2997 = vrot.slane %v2986, %v2996
        %v2998 = vlaneseq
        %v2999 = vshrl.u32 %v2998, 7
        %v3000 = vsub.s32 0, %v2999
        %v3001 = vrot.slane %v2987, %v3000
        %v3002 = vlaneseq
        %v3003 = vshrl.u32 %v3002, 7
        %v3004 = vsub.s32 0, %v3003
        %v3005 = vrot.slane %v2988, %v3004
        %v3006 = vlaneseq
        %v3007 = vshrl.u32 %v3006, 7
        %v3008 = vsub.s32 0, %v3007
        %v3009 = vrot.slane %v2989, %v3008
        %v3030 = vunpack.c.l.b16 %v2922
        %v3031 = vunpack.c.l.b16 %v2923
        %v3032 = vunpack.c.l.b16 %v2924
        %v3033 = vunpack.c.l.b16 %v2925
        %v3034 = vunpack.c.l.b16 %v2926
        %v3035 = vunpack.c.l.b16 %v2927
        %v3036 = vunpack.c.l.b16 %v2928
        %v3037 = vunpack.c.l.b16 %v2929
        %v3038 = vunpack.c.l.b16 %v2930
        %v3039 = vunpack.c.l.b16 %v2931
        %v3040 = vunpack.c.l.b16 %v2932
        %v3041 = vunpack.c.l.b16 %v2933
        %v3042 = vunpack.c.l.b16 %v2934
        %v3043 = vunpack.c.l.b16 %v2935
        %v3044 = vunpack.c.l.b16 %v2936
        %v3045 = vunpack.c.l.b16 %v2937
        %v3046 = vpack.c.b16 %v3031, %v3030
        %v3047 = vpack.c.b16 %v3033, %v3032
        %v3048 = vpack.c.b16 %v3035, %v3034
        %v3049 = vpack.c.b16 %v3037, %v3036
        %v3050 = vpack.c.b16 %v3039, %v3038
        %v3051 = vpack.c.b16 %v3041, %v3040
        %v3052 = vpack.c.b16 %v3043, %v3042
        %v3053 = vpack.c.b16 %v3045, %v3044
        %3062 = vmatprep.subr.bf16.mxu0 0
        %3063 = vmatpush1.bf16.msra.mxu0 %v3053
        %3064 = vmatprep.subr.bf16.mxu0 0
        %3065 = vmatpush1.bf16.msra.mxu0 %v3052
        %3066 = vmatprep.subr.bf16.mxu0 0
        %3067 = vmatpush1.bf16.msra.mxu0 %v3051
        %3068 = vmatprep.subr.bf16.mxu0 0
        %3069 = vmatpush1.bf16.msra.mxu0 %v3050
        %3070 = vmatprep.subr.bf16.mxu0 0
        %3071 = vmatpush1.bf16.msra.mxu0 %v3049
        %3072 = vmatprep.subr.bf16.mxu0 0
        %3073 = vmatpush1.bf16.msra.mxu0 %v3048
        %3074 = vmatprep.subr.bf16.mxu0 0
        %3075 = vmatpush1.bf16.msra.mxu0 %v3047
        %3076 = vmatprep.subr.bf16.mxu0 0
        %3077 = vmatpush1.bf16.msra.mxu0 %v3046
        %3078 = vmatprep.subr.bf16.mxu0 0
        %3079 = vmatpush2.bf16.msra.mxu0 0
        %3080 = vmatprep.subr.bf16.mxu0 0
        %3081 = vmatpush2.bf16.msra.mxu0 0
        %3082 = vmatprep.subr.bf16.mxu0 0
        %3083 = vmatpush2.bf16.msra.mxu0 0
        %3084 = vmatprep.subr.bf16.mxu0 0
        %3085 = vmatpush2.bf16.msra.mxu0 0
        %3086 = vmatprep.subr.bf16.mxu0 0
        %3087 = vmatpush2.bf16.msra.mxu0 0
        %3088 = vmatprep.subr.bf16.mxu0 0
        %3089 = vmatpush2.bf16.msra.mxu0 0
        %3090 = vmatprep.subr.bf16.mxu0 0
        %3091 = vmatpush2.bf16.msra.mxu0 0
        %3092 = vmatprep.subr.bf16.mxu0 0
        %3093 = vmatpush2.bf16.msra.mxu0 0
        %3094 = vmatprep.mubr.bf16.mxu0 0
        %3095 = vmatmul.mubr.bf16.gmra.mxu0 %v2920
        %v3096 = vpop.f32.mrf.mxu0
        %v3097 = vadd.f32 %v2997, %v3096
        %v3098 = vpop.f32.mrf.mxu0
        %v3099 = vpop.f32.mrf.mxu0
        %v3100 = vpop.f32.mrf.mxu0
        %3101 = vdwg.mxu0
        %v3118 = vunpack.c.l.b16 %v2938
        %v3119 = vunpack.c.l.b16 %v2939
        %v3120 = vunpack.c.l.b16 %v2940
        %v3121 = vunpack.c.l.b16 %v2941
        %v3122 = vunpack.c.l.b16 %v2942
        %v3123 = vunpack.c.l.b16 %v2943
        %v3124 = vunpack.c.l.b16 %v2944
        %v3125 = vunpack.c.l.b16 %v2945
        %v3126 = vunpack.c.l.b16 %v2946
        %v3127 = vunpack.c.l.b16 %v2947
        %v3128 = vunpack.c.l.b16 %v2948
        %v3129 = vunpack.c.l.b16 %v2949
        %v3130 = vunpack.c.l.b16 %v2950
        %v3131 = vunpack.c.l.b16 %v2951
        %v3132 = vunpack.c.l.b16 %v2952
        %v3133 = vunpack.c.l.b16 %v2953
        %v3134 = vpack.c.b16 %v3119, %v3118
        %v3135 = vpack.c.b16 %v3121, %v3120
        %v3136 = vpack.c.b16 %v3123, %v3122
        %v3137 = vpack.c.b16 %v3125, %v3124
        %v3138 = vpack.c.b16 %v3127, %v3126
        %v3139 = vpack.c.b16 %v3129, %v3128
        %v3140 = vpack.c.b16 %v3131, %v3130
        %v3141 = vpack.c.b16 %v3133, %v3132
        %3150 = vmatprep.subr.bf16.mxu0 0
        %3151 = vmatpush1.bf16.msra.mxu0 %v3141
        %3152 = vmatprep.subr.bf16.mxu0 0
        %3153 = vmatpush1.bf16.msra.mxu0 %v3140
        %3154 = vmatprep.subr.bf16.mxu0 0
        %3155 = vmatpush1.bf16.msra.mxu0 %v3139
        %3156 = vmatprep.subr.bf16.mxu0 0
        %3157 = vmatpush1.bf16.msra.mxu0 %v3138
        %3158 = vmatprep.subr.bf16.mxu0 0
        %3159 = vmatpush1.bf16.msra.mxu0 %v3137
        %3160 = vmatprep.subr.bf16.mxu0 0
        %3161 = vmatpush1.bf16.msra.mxu0 %v3136
        %3162 = vmatprep.subr.bf16.mxu0 0
        %3163 = vmatpush1.bf16.msra.mxu0 %v3135
        %3164 = vmatprep.subr.bf16.mxu0 0
        %3165 = vmatpush1.bf16.msra.mxu0 %v3134
        %3166 = vmatprep.subr.bf16.mxu0 0
        %3167 = vmatpush2.bf16.msra.mxu0 0
        %3168 = vmatprep.subr.bf16.mxu0 0
        %3169 = vmatpush2.bf16.msra.mxu0 0
        %3170 = vmatprep.subr.bf16.mxu0 0
        %3171 = vmatpush2.bf16.msra.mxu0 0
        %3172 = vmatprep.subr.bf16.mxu0 0
        %3173 = vmatpush2.bf16.msra.mxu0 0
        %3174 = vmatprep.subr.bf16.mxu0 0
        %3175 = vmatpush2.bf16.msra.mxu0 0
        %3176 = vmatprep.subr.bf16.mxu0 0
        %3177 = vmatpush2.bf16.msra.mxu0 0
        %3178 = vmatprep.subr.bf16.mxu0 0
        %3179 = vmatpush2.bf16.msra.mxu0 0
        %3180 = vmatprep.subr.bf16.mxu0 0
        %3181 = vmatpush2.bf16.msra.mxu0 0
        %3182 = vmatprep.mubr.bf16.mxu0 0
        %3183 = vmatmul.mubr.bf16.gmra.mxu0 %v2920
        %v3184 = vpop.f32.mrf.mxu0
        %v3185 = vadd.f32 %v3001, %v3184
        %v3186 = vpop.f32.mrf.mxu0
        %v3187 = vpop.f32.mrf.mxu0
        %v3188 = vpop.f32.mrf.mxu0
        %3189 = vdwg.mxu0
        %v3206 = vunpack.c.l.b16 %v2954
        %v3207 = vunpack.c.l.b16 %v2955
        %v3208 = vunpack.c.l.b16 %v2956
        %v3209 = vunpack.c.l.b16 %v2957
        %v3210 = vunpack.c.l.b16 %v2958
        %v3211 = vunpack.c.l.b16 %v2959
        %v3212 = vunpack.c.l.b16 %v2960
        %v3213 = vunpack.c.l.b16 %v2961
        %v3214 = vunpack.c.l.b16 %v2962
        %v3215 = vunpack.c.l.b16 %v2963
        %v3216 = vunpack.c.l.b16 %v2964
        %v3217 = vunpack.c.l.b16 %v2965
        %v3218 = vunpack.c.l.b16 %v2966
        %v3219 = vunpack.c.l.b16 %v2967
        %v3220 = vunpack.c.l.b16 %v2968
        %v3221 = vunpack.c.l.b16 %v2969
        %v3222 = vpack.c.b16 %v3207, %v3206
        %v3223 = vpack.c.b16 %v3209, %v3208
        %v3224 = vpack.c.b16 %v3211, %v3210
        %v3225 = vpack.c.b16 %v3213, %v3212
        %v3226 = vpack.c.b16 %v3215, %v3214
        %v3227 = vpack.c.b16 %v3217, %v3216
        %v3228 = vpack.c.b16 %v3219, %v3218
        %v3229 = vpack.c.b16 %v3221, %v3220
        %3238 = vmatprep.subr.bf16.mxu0 0
        %3239 = vmatpush1.bf16.msra.mxu0 %v3229
        %3240 = vmatprep.subr.bf16.mxu0 0
        %3241 = vmatpush1.bf16.msra.mxu0 %v3228
        %3242 = vmatprep.subr.bf16.mxu0 0
        %3243 = vmatpush1.bf16.msra.mxu0 %v3227
        %3244 = vmatprep.subr.bf16.mxu0 0
        %3245 = vmatpush1.bf16.msra.mxu0 %v3226
        %3246 = vmatprep.subr.bf16.mxu0 0
        %3247 = vmatpush1.bf16.msra.mxu0 %v3225
        %3248 = vmatprep.subr.bf16.mxu0 0
        %3249 = vmatpush1.bf16.msra.mxu0 %v3224
        %3250 = vmatprep.subr.bf16.mxu0 0
        %3251 = vmatpush1.bf16.msra.mxu0 %v3223
        %3252 = vmatprep.subr.bf16.mxu0 0
        %3253 = vmatpush1.bf16.msra.mxu0 %v3222
        %3254 = vmatprep.subr.bf16.mxu0 0
        %3255 = vmatpush2.bf16.msra.mxu0 0
        %3256 = vmatprep.subr.bf16.mxu0 0
        %3257 = vmatpush2.bf16.msra.mxu0 0
        %3258 = vmatprep.subr.bf16.mxu0 0
        %3259 = vmatpush2.bf16.msra.mxu0 0
        %3260 = vmatprep.subr.bf16.mxu0 0
        %3261 = vmatpush2.bf16.msra.mxu0 0
        %3262 = vmatprep.subr.bf16.mxu0 0
        %3263 = vmatpush2.bf16.msra.mxu0 0
        %3264 = vmatprep.subr.bf16.mxu0 0
        %3265 = vmatpush2.bf16.msra.mxu0 0
        %3266 = vmatprep.subr.bf16.mxu0 0
        %3267 = vmatpush2.bf16.msra.mxu0 0
        %3268 = vmatprep.subr.bf16.mxu0 0
        %3269 = vmatpush2.bf16.msra.mxu0 0
        %3270 = vmatprep.mubr.bf16.mxu0 0
        %3271 = vmatmul.mubr.bf16.gmra.mxu0 %v2920
        %v3272 = vpop.f32.mrf.mxu0
        %v3273 = vadd.f32 %v3005, %v3272
        %v3274 = vpop.f32.mrf.mxu0
        %v3275 = vpop.f32.mrf.mxu0
        %v3276 = vpop.f32.mrf.mxu0
        %3277 = vdwg.mxu0
        %v3294 = vunpack.c.l.b16 %v2970
        %v3295 = vunpack.c.l.b16 %v2971
        %v3296 = vunpack.c.l.b16 %v2972
        %v3297 = vunpack.c.l.b16 %v2973
        %v3298 = vunpack.c.l.b16 %v2974
        %v3299 = vunpack.c.l.b16 %v2975
        %v3300 = vunpack.c.l.b16 %v2976
        %v3301 = vunpack.c.l.b16 %v2977
        %v3302 = vunpack.c.l.b16 %v2978
        %v3303 = vunpack.c.l.b16 %v2979
        %v3304 = vunpack.c.l.b16 %v2980
        %v3305 = vunpack.c.l.b16 %v2981
        %v3306 = vunpack.c.l.b16 %v2982
        %v3307 = vunpack.c.l.b16 %v2983
        %v3308 = vunpack.c.l.b16 %v2984
        %v3309 = vunpack.c.l.b16 %v2985
        %v3310 = vpack.c.b16 %v3295, %v3294
        %v3311 = vpack.c.b16 %v3297, %v3296
        %v3312 = vpack.c.b16 %v3299, %v3298
        %v3313 = vpack.c.b16 %v3301, %v3300
        %v3314 = vpack.c.b16 %v3303, %v3302
        %v3315 = vpack.c.b16 %v3305, %v3304
        %v3316 = vpack.c.b16 %v3307, %v3306
        %v3317 = vpack.c.b16 %v3309, %v3308
        %3326 = vmatprep.subr.bf16.mxu0 0
        %3327 = vmatpush1.bf16.msra.mxu0 %v3317
        %3328 = vmatprep.subr.bf16.mxu0 0
        %3329 = vmatpush1.bf16.msra.mxu0 %v3316
        %3330 = vmatprep.subr.bf16.mxu0 0
        %3331 = vmatpush1.bf16.msra.mxu0 %v3315
        %3332 = vmatprep.subr.bf16.mxu0 0
        %3333 = vmatpush1.bf16.msra.mxu0 %v3314
        %3334 = vmatprep.subr.bf16.mxu0 0
        %3335 = vmatpush1.bf16.msra.mxu0 %v3313
        %3336 = vmatprep.subr.bf16.mxu0 0
        %3337 = vmatpush1.bf16.msra.mxu0 %v3312
        %3338 = vmatprep.subr.bf16.mxu0 0
        %3339 = vmatpush1.bf16.msra.mxu0 %v3311
        %3340 = vmatprep.subr.bf16.mxu0 0
        %3341 = vmatpush1.bf16.msra.mxu0 %v3310
        %3342 = vmatprep.subr.bf16.mxu0 0
        %3343 = vmatpush2.bf16.msra.mxu0 0
        %3344 = vmatprep.subr.bf16.mxu0 0
        %3345 = vmatpush2.bf16.msra.mxu0 0
        %3346 = vmatprep.subr.bf16.mxu0 0
        %3347 = vmatpush2.bf16.msra.mxu0 0
        %3348 = vmatprep.subr.bf16.mxu0 0
        %3349 = vmatpush2.bf16.msra.mxu0 0
        %3350 = vmatprep.subr.bf16.mxu0 0
        %3351 = vmatpush2.bf16.msra.mxu0 0
        %3352 = vmatprep.subr.bf16.mxu0 0
        %3353 = vmatpush2.bf16.msra.mxu0 0
        %3354 = vmatprep.subr.bf16.mxu0 0
        %3355 = vmatpush2.bf16.msra.mxu0 0
        %3356 = vmatprep.subr.bf16.mxu0 0
        %3357 = vmatpush2.bf16.msra.mxu0 0
        %3358 = vmatprep.mubr.bf16.mxu0 0
        %3359 = vmatmul.mubr.bf16.gmra.mxu0 %v2920
        %v3360 = vpop.f32.mrf.mxu0
        %v3361 = vadd.f32 %v3009, %v3360
        %v3362 = vpop.f32.mrf.mxu0
        %v3363 = vpop.f32.mrf.mxu0
        %v3364 = vpop.f32.mrf.mxu0
        %3365 = vdwg.mxu0
        %v3366 = vld [vmem:[%s13] sm:$0xf]
        %v3367 = vld [vmem:[%s13 + $0x4] sm:$0xf]
        %v3368 = vld [vmem:[%s13 + $0x8] sm:$0xf]
        %v3369 = vld [vmem:[%s13 + $0xc] sm:$0xf]
        %v3370 = vld [vmem:[%s13 + $0x10] sm:$0xf]
        %v3371 = vld [vmem:[%s13 + $0x14] sm:$0xf]
        %v3372 = vld [vmem:[%s13 + $0x18] sm:$0xf]
        %v3373 = vld [vmem:[%s13 + $0x1c] sm:$0xf]
        %v3374 = vld [vmem:[%s13 + $0x20] sm:$0xf]
        %v3375 = vld [vmem:[%s13 + $0x24] sm:$0xf]
        %v3376 = vld [vmem:[%s13 + $0x28] sm:$0xf]
        %v3377 = vld [vmem:[%s13 + $0x2c] sm:$0xf]
        %v3378 = vld [vmem:[%s13 + $0x30] sm:$0xf]
        %v3379 = vld [vmem:[%s13 + $0x34] sm:$0xf]
        %v3380 = vld [vmem:[%s13 + $0x38] sm:$0xf]
        %v3381 = vld [vmem:[%s13 + $0x3c] sm:$0xf]
        %v3382 = vld [vmem:[%s13 + $0x40] sm:$0xf]
        %v3383 = vld [vmem:[%s13 + $0x44] sm:$0xf]
        %v3384 = vld [vmem:[%s13 + $0x48] sm:$0xf]
        %v3385 = vld [vmem:[%s13 + $0x4c] sm:$0xf]
        %v3386 = vld [vmem:[%s13 + $0x50] sm:$0xf]
        %v3387 = vld [vmem:[%s13 + $0x54] sm:$0xf]
        %v3388 = vld [vmem:[%s13 + $0x58] sm:$0xf]
        %v3389 = vld [vmem:[%s13 + $0x5c] sm:$0xf]
        %v3390 = vld [vmem:[%s13 + $0x60] sm:$0xf]
        %v3391 = vld [vmem:[%s13 + $0x64] sm:$0xf]
        %v3392 = vld [vmem:[%s13 + $0x68] sm:$0xf]
        %v3393 = vld [vmem:[%s13 + $0x6c] sm:$0xf]
        %v3394 = vld [vmem:[%s13 + $0x70] sm:$0xf]
        %v3395 = vld [vmem:[%s13 + $0x74] sm:$0xf]
        %v3396 = vld [vmem:[%s13 + $0x78] sm:$0xf]
        %v3397 = vld [vmem:[%s13 + $0x7c] sm:$0xf]
        %v3398 = vld [vmem:[%s13 + $0x80] sm:$0xf]
        %v3399 = vld [vmem:[%s13 + $0x84] sm:$0xf]
        %v3400 = vld [vmem:[%s13 + $0x88] sm:$0xf]
        %v3401 = vld [vmem:[%s13 + $0x8c] sm:$0xf]
        %v3402 = vld [vmem:[%s13 + $0x90] sm:$0xf]
        %v3403 = vld [vmem:[%s13 + $0x94] sm:$0xf]
        %v3404 = vld [vmem:[%s13 + $0x98] sm:$0xf]
        %v3405 = vld [vmem:[%s13 + $0x9c] sm:$0xf]
        %v3406 = vld [vmem:[%s13 + $0xa0] sm:$0xf]
        %v3407 = vld [vmem:[%s13 + $0xa4] sm:$0xf]
        %v3408 = vld [vmem:[%s13 + $0xa8] sm:$0xf]
        %v3409 = vld [vmem:[%s13 + $0xac] sm:$0xf]
        %v3410 = vld [vmem:[%s13 + $0xb0] sm:$0xf]
        %v3411 = vld [vmem:[%s13 + $0xb4] sm:$0xf]
        %v3412 = vld [vmem:[%s13 + $0xb8] sm:$0xf]
        %v3413 = vld [vmem:[%s13 + $0xbc] sm:$0xf]
        %v3414 = vld [vmem:[%s13 + $0xc0] sm:$0xf]
        %v3415 = vld [vmem:[%s13 + $0xc4] sm:$0xf]
        %v3416 = vld [vmem:[%s13 + $0xc8] sm:$0xf]
        %v3417 = vld [vmem:[%s13 + $0xcc] sm:$0xf]
        %v3418 = vld [vmem:[%s13 + $0xd0] sm:$0xf]
        %v3419 = vld [vmem:[%s13 + $0xd4] sm:$0xf]
        %v3420 = vld [vmem:[%s13 + $0xd8] sm:$0xf]
        %v3421 = vld [vmem:[%s13 + $0xdc] sm:$0xf]
        %v3422 = vld [vmem:[%s13 + $0xe0] sm:$0xf]
        %v3423 = vld [vmem:[%s13 + $0xe4] sm:$0xf]
        %v3424 = vld [vmem:[%s13 + $0xe8] sm:$0xf]
        %v3425 = vld [vmem:[%s13 + $0xec] sm:$0xf]
        %v3426 = vld [vmem:[%s13 + $0xf0] sm:$0xf]
        %v3427 = vld [vmem:[%s13 + $0xf4] sm:$0xf]
        %v3428 = vld [vmem:[%s13 + $0xf8] sm:$0xf]
        %v3429 = vld [vmem:[%s13 + $0xfc] sm:$0xf]
        %v3430 = vld [vmem:[%s17] sm:$0x1]
        %v3431 = vld [vmem:[%s17 + $0x1] sm:$0x1]
        %v3432 = vld [vmem:[%s17 + $0x2] sm:$0x1]
        %v3433 = vld [vmem:[%s17 + $0x3] sm:$0x1]
        %v3438 = vlaneseq
        %v3439 = vshrl.u32 %v3438, 7
        %v3440 = vsub.s32 0, %v3439
        %v3441 = vrot.slane %v3430, %v3440
        %v3442 = vlaneseq
        %v3443 = vshrl.u32 %v3442, 7
        %v3444 = vsub.s32 0, %v3443
        %v3445 = vrot.slane %v3431, %v3444
        %v3446 = vlaneseq
        %v3447 = vshrl.u32 %v3446, 7
        %v3448 = vsub.s32 0, %v3447
        %v3449 = vrot.slane %v3432, %v3448
        %v3450 = vlaneseq
        %v3451 = vshrl.u32 %v3450, 7
        %v3452 = vsub.s32 0, %v3451
        %v3453 = vrot.slane %v3433, %v3452
        %v3474 = vunpack.c.l.b16 %v3366
        %v3475 = vunpack.c.l.b16 %v3367
        %v3476 = vunpack.c.l.b16 %v3368
        %v3477 = vunpack.c.l.b16 %v3369
        %v3478 = vunpack.c.l.b16 %v3370
        %v3479 = vunpack.c.l.b16 %v3371
        %v3480 = vunpack.c.l.b16 %v3372
        %v3481 = vunpack.c.l.b16 %v3373
        %v3482 = vunpack.c.l.b16 %v3374
        %v3483 = vunpack.c.l.b16 %v3375
        %v3484 = vunpack.c.l.b16 %v3376
        %v3485 = vunpack.c.l.b16 %v3377
        %v3486 = vunpack.c.l.b16 %v3378
        %v3487 = vunpack.c.l.b16 %v3379
        %v3488 = vunpack.c.l.b16 %v3380
        %v3489 = vunpack.c.l.b16 %v3381
        %v3490 = vpack.c.b16 %v3475, %v3474
        %v3491 = vpack.c.b16 %v3477, %v3476
        %v3492 = vpack.c.b16 %v3479, %v3478
        %v3493 = vpack.c.b16 %v3481, %v3480
        %v3494 = vpack.c.b16 %v3483, %v3482
        %v3495 = vpack.c.b16 %v3485, %v3484
        %v3496 = vpack.c.b16 %v3487, %v3486
        %v3497 = vpack.c.b16 %v3489, %v3488
        %3506 = vmatprep.subr.bf16.mxu0 0
        %3507 = vmatpush1.bf16.msra.mxu0 %v3497
        %3508 = vmatprep.subr.bf16.mxu0 0
        %3509 = vmatpush1.bf16.msra.mxu0 %v3496
        %3510 = vmatprep.subr.bf16.mxu0 0
        %3511 = vmatpush1.bf16.msra.mxu0 %v3495
        %3512 = vmatprep.subr.bf16.mxu0 0
        %3513 = vmatpush1.bf16.msra.mxu0 %v3494
        %3514 = vmatprep.subr.bf16.mxu0 0
        %3515 = vmatpush1.bf16.msra.mxu0 %v3493
        %3516 = vmatprep.subr.bf16.mxu0 0
        %3517 = vmatpush1.bf16.msra.mxu0 %v3492
        %3518 = vmatprep.subr.bf16.mxu0 0
        %3519 = vmatpush1.bf16.msra.mxu0 %v3491
        %3520 = vmatprep.subr.bf16.mxu0 0
        %3521 = vmatpush1.bf16.msra.mxu0 %v3490
        %3522 = vmatprep.subr.bf16.mxu0 0
        %3523 = vmatpush2.bf16.msra.mxu0 0
        %3524 = vmatprep.subr.bf16.mxu0 0
        %3525 = vmatpush2.bf16.msra.mxu0 0
        %3526 = vmatprep.subr.bf16.mxu0 0
        %3527 = vmatpush2.bf16.msra.mxu0 0
        %3528 = vmatprep.subr.bf16.mxu0 0
        %3529 = vmatpush2.bf16.msra.mxu0 0
        %3530 = vmatprep.subr.bf16.mxu0 0
        %3531 = vmatpush2.bf16.msra.mxu0 0
        %3532 = vmatprep.subr.bf16.mxu0 0
        %3533 = vmatpush2.bf16.msra.mxu0 0
        %3534 = vmatprep.subr.bf16.mxu0 0
        %3535 = vmatpush2.bf16.msra.mxu0 0
        %3536 = vmatprep.subr.bf16.mxu0 0
        %3537 = vmatpush2.bf16.msra.mxu0 0
        %3538 = vmatprep.mubr.bf16.mxu0 0
        %3539 = vmatmul.mubr.bf16.gmra.mxu0 %v2921
        %v3540 = vpop.f32.mrf.mxu0
        %v3541 = vadd.f32 %v3441, %v3540
        %v3542 = vpop.f32.mrf.mxu0
        %v3543 = vpop.f32.mrf.mxu0
        %v3544 = vpop.f32.mrf.mxu0
        %3545 = vdwg.mxu0
        %v3562 = vunpack.c.l.b16 %v3382
        %v3563 = vunpack.c.l.b16 %v3383
        %v3564 = vunpack.c.l.b16 %v3384
        %v3565 = vunpack.c.l.b16 %v3385
        %v3566 = vunpack.c.l.b16 %v3386
        %v3567 = vunpack.c.l.b16 %v3387
        %v3568 = vunpack.c.l.b16 %v3388
        %v3569 = vunpack.c.l.b16 %v3389
        %v3570 = vunpack.c.l.b16 %v3390
        %v3571 = vunpack.c.l.b16 %v3391
        %v3572 = vunpack.c.l.b16 %v3392
        %v3573 = vunpack.c.l.b16 %v3393
        %v3574 = vunpack.c.l.b16 %v3394
        %v3575 = vunpack.c.l.b16 %v3395
        %v3576 = vunpack.c.l.b16 %v3396
        %v3577 = vunpack.c.l.b16 %v3397
        %v3578 = vpack.c.b16 %v3563, %v3562
        %v3579 = vpack.c.b16 %v3565, %v3564
        %v3580 = vpack.c.b16 %v3567, %v3566
        %v3581 = vpack.c.b16 %v3569, %v3568
        %v3582 = vpack.c.b16 %v3571, %v3570
        %v3583 = vpack.c.b16 %v3573, %v3572
        %v3584 = vpack.c.b16 %v3575, %v3574
        %v3585 = vpack.c.b16 %v3577, %v3576
        %3594 = vmatprep.subr.bf16.mxu0 0
        %3595 = vmatpush1.bf16.msra.mxu0 %v3585
        %3596 = vmatprep.subr.bf16.mxu0 0
        %3597 = vmatpush1.bf16.msra.mxu0 %v3584
        %3598 = vmatprep.subr.bf16.mxu0 0
        %3599 = vmatpush1.bf16.msra.mxu0 %v3583
        %3600 = vmatprep.subr.bf16.mxu0 0
        %3601 = vmatpush1.bf16.msra.mxu0 %v3582
        %3602 = vmatprep.subr.bf16.mxu0 0
        %3603 = vmatpush1.bf16.msra.mxu0 %v3581
        %3604 = vmatprep.subr.bf16.mxu0 0
        %3605 = vmatpush1.bf16.msra.mxu0 %v3580
        %3606 = vmatprep.subr.bf16.mxu0 0
        %3607 = vmatpush1.bf16.msra.mxu0 %v3579
        %3608 = vmatprep.subr.bf16.mxu0 0
        %3609 = vmatpush1.bf16.msra.mxu0 %v3578
        %3610 = vmatprep.subr.bf16.mxu0 0
        %3611 = vmatpush2.bf16.msra.mxu0 0
        %3612 = vmatprep.subr.bf16.mxu0 0
        %3613 = vmatpush2.bf16.msra.mxu0 0
        %3614 = vmatprep.subr.bf16.mxu0 0
        %3615 = vmatpush2.bf16.msra.mxu0 0
        %3616 = vmatprep.subr.bf16.mxu0 0
        %3617 = vmatpush2.bf16.msra.mxu0 0
        %3618 = vmatprep.subr.bf16.mxu0 0
        %3619 = vmatpush2.bf16.msra.mxu0 0
        %3620 = vmatprep.subr.bf16.mxu0 0
        %3621 = vmatpush2.bf16.msra.mxu0 0
        %3622 = vmatprep.subr.bf16.mxu0 0
        %3623 = vmatpush2.bf16.msra.mxu0 0
        %3624 = vmatprep.subr.bf16.mxu0 0
        %3625 = vmatpush2.bf16.msra.mxu0 0
        %3626 = vmatprep.mubr.bf16.mxu0 0
        %3627 = vmatmul.mubr.bf16.gmra.mxu0 %v2921
        %v3628 = vpop.f32.mrf.mxu0
        %v3629 = vadd.f32 %v3445, %v3628
        %v3630 = vpop.f32.mrf.mxu0
        %v3631 = vpop.f32.mrf.mxu0
        %v3632 = vpop.f32.mrf.mxu0
        %3633 = vdwg.mxu0
        %v3650 = vunpack.c.l.b16 %v3398
        %v3651 = vunpack.c.l.b16 %v3399
        %v3652 = vunpack.c.l.b16 %v3400
        %v3653 = vunpack.c.l.b16 %v3401
        %v3654 = vunpack.c.l.b16 %v3402
        %v3655 = vunpack.c.l.b16 %v3403
        %v3656 = vunpack.c.l.b16 %v3404
        %v3657 = vunpack.c.l.b16 %v3405
        %v3658 = vunpack.c.l.b16 %v3406
        %v3659 = vunpack.c.l.b16 %v3407
        %v3660 = vunpack.c.l.b16 %v3408
        %v3661 = vunpack.c.l.b16 %v3409
        %v3662 = vunpack.c.l.b16 %v3410
        %v3663 = vunpack.c.l.b16 %v3411
        %v3664 = vunpack.c.l.b16 %v3412
        %v3665 = vunpack.c.l.b16 %v3413
        %v3666 = vpack.c.b16 %v3651, %v3650
        %v3667 = vpack.c.b16 %v3653, %v3652
        %v3668 = vpack.c.b16 %v3655, %v3654
        %v3669 = vpack.c.b16 %v3657, %v3656
        %v3670 = vpack.c.b16 %v3659, %v3658
        %v3671 = vpack.c.b16 %v3661, %v3660
        %v3672 = vpack.c.b16 %v3663, %v3662
        %v3673 = vpack.c.b16 %v3665, %v3664
        %3682 = vmatprep.subr.bf16.mxu0 0
        %3683 = vmatpush1.bf16.msra.mxu0 %v3673
        %3684 = vmatprep.subr.bf16.mxu0 0
        %3685 = vmatpush1.bf16.msra.mxu0 %v3672
        %3686 = vmatprep.subr.bf16.mxu0 0
        %3687 = vmatpush1.bf16.msra.mxu0 %v3671
        %3688 = vmatprep.subr.bf16.mxu0 0
        %3689 = vmatpush1.bf16.msra.mxu0 %v3670
        %3690 = vmatprep.subr.bf16.mxu0 0
        %3691 = vmatpush1.bf16.msra.mxu0 %v3669
        %3692 = vmatprep.subr.bf16.mxu0 0
        %3693 = vmatpush1.bf16.msra.mxu0 %v3668
        %3694 = vmatprep.subr.bf16.mxu0 0
        %3695 = vmatpush1.bf16.msra.mxu0 %v3667
        %3696 = vmatprep.subr.bf16.mxu0 0
        %3697 = vmatpush1.bf16.msra.mxu0 %v3666
        %3698 = vmatprep.subr.bf16.mxu0 0
        %3699 = vmatpush2.bf16.msra.mxu0 0
        %3700 = vmatprep.subr.bf16.mxu0 0
        %3701 = vmatpush2.bf16.msra.mxu0 0
        %3702 = vmatprep.subr.bf16.mxu0 0
        %3703 = vmatpush2.bf16.msra.mxu0 0
        %3704 = vmatprep.subr.bf16.mxu0 0
        %3705 = vmatpush2.bf16.msra.mxu0 0
        %3706 = vmatprep.subr.bf16.mxu0 0
        %3707 = vmatpush2.bf16.msra.mxu0 0
        %3708 = vmatprep.subr.bf16.mxu0 0
        %3709 = vmatpush2.bf16.msra.mxu0 0
        %3710 = vmatprep.subr.bf16.mxu0 0
        %3711 = vmatpush2.bf16.msra.mxu0 0
        %3712 = vmatprep.subr.bf16.mxu0 0
        %3713 = vmatpush2.bf16.msra.mxu0 0
        %3714 = vmatprep.mubr.bf16.mxu0 0
        %3715 = vmatmul.mubr.bf16.gmra.mxu0 %v2921
        %v3716 = vpop.f32.mrf.mxu0
        %v3717 = vadd.f32 %v3449, %v3716
        %v3718 = vpop.f32.mrf.mxu0
        %v3719 = vpop.f32.mrf.mxu0
        %v3720 = vpop.f32.mrf.mxu0
        %3721 = vdwg.mxu0
        %v3738 = vunpack.c.l.b16 %v3414
        %v3739 = vunpack.c.l.b16 %v3415
        %v3740 = vunpack.c.l.b16 %v3416
        %v3741 = vunpack.c.l.b16 %v3417
        %v3742 = vunpack.c.l.b16 %v3418
        %v3743 = vunpack.c.l.b16 %v3419
        %v3744 = vunpack.c.l.b16 %v3420
        %v3745 = vunpack.c.l.b16 %v3421
        %v3746 = vunpack.c.l.b16 %v3422
        %v3747 = vunpack.c.l.b16 %v3423
        %v3748 = vunpack.c.l.b16 %v3424
        %v3749 = vunpack.c.l.b16 %v3425
        %v3750 = vunpack.c.l.b16 %v3426
        %v3751 = vunpack.c.l.b16 %v3427
        %v3752 = vunpack.c.l.b16 %v3428
        %v3753 = vunpack.c.l.b16 %v3429
        %v3754 = vpack.c.b16 %v3739, %v3738
        %v3755 = vpack.c.b16 %v3741, %v3740
        %v3756 = vpack.c.b16 %v3743, %v3742
        %v3757 = vpack.c.b16 %v3745, %v3744
        %v3758 = vpack.c.b16 %v3747, %v3746
        %v3759 = vpack.c.b16 %v3749, %v3748
        %v3760 = vpack.c.b16 %v3751, %v3750
        %v3761 = vpack.c.b16 %v3753, %v3752
        %3770 = vmatprep.subr.bf16.mxu0 0
        %3771 = vmatpush1.bf16.msra.mxu0 %v3761
        %3772 = vmatprep.subr.bf16.mxu0 0
        %3773 = vmatpush1.bf16.msra.mxu0 %v3760
        %3774 = vmatprep.subr.bf16.mxu0 0
        %3775 = vmatpush1.bf16.msra.mxu0 %v3759
        %3776 = vmatprep.subr.bf16.mxu0 0
        %3777 = vmatpush1.bf16.msra.mxu0 %v3758
        %3778 = vmatprep.subr.bf16.mxu0 0
        %3779 = vmatpush1.bf16.msra.mxu0 %v3757
        %3780 = vmatprep.subr.bf16.mxu0 0
        %3781 = vmatpush1.bf16.msra.mxu0 %v3756
        %3782 = vmatprep.subr.bf16.mxu0 0
        %3783 = vmatpush1.bf16.msra.mxu0 %v3755
        %3784 = vmatprep.subr.bf16.mxu0 0
        %3785 = vmatpush1.bf16.msra.mxu0 %v3754
        %3786 = vmatprep.subr.bf16.mxu0 0
        %3787 = vmatpush2.bf16.msra.mxu0 0
        %3788 = vmatprep.subr.bf16.mxu0 0
        %3789 = vmatpush2.bf16.msra.mxu0 0
        %3790 = vmatprep.subr.bf16.mxu0 0
        %3791 = vmatpush2.bf16.msra.mxu0 0
        %3792 = vmatprep.subr.bf16.mxu0 0
        %3793 = vmatpush2.bf16.msra.mxu0 0
        %3794 = vmatprep.subr.bf16.mxu0 0
        %3795 = vmatpush2.bf16.msra.mxu0 0
        %3796 = vmatprep.subr.bf16.mxu0 0
        %3797 = vmatpush2.bf16.msra.mxu0 0
        %3798 = vmatprep.subr.bf16.mxu0 0
        %3799 = vmatpush2.bf16.msra.mxu0 0
        %3800 = vmatprep.subr.bf16.mxu0 0
        %3801 = vmatpush2.bf16.msra.mxu0 0
        %3802 = vmatprep.mubr.bf16.mxu0 0
        %3803 = vmatmul.mubr.bf16.gmra.mxu0 %v2921
        %v3804 = vpop.f32.mrf.mxu0
        %v3805 = vadd.f32 %v3453, %v3804
        %v3806 = vpop.f32.mrf.mxu0
        %v3807 = vpop.f32.mrf.mxu0
        %v3808 = vpop.f32.mrf.mxu0
        %3809 = vdwg.mxu0
        %v3810 = vld [vmem:[%s14] sm:$0xf]
        %v3811 = vld [vmem:[%s14 + $0x4] sm:$0xf]
        %v3812 = vld [vmem:[%s14 + $0x8] sm:$0xf]
        %v3813 = vld [vmem:[%s14 + $0xc] sm:$0xf]
        %v3814 = vld [vmem:[%s14 + $0x10] sm:$0xf]
        %v3815 = vld [vmem:[%s14 + $0x14] sm:$0xf]
        %v3816 = vld [vmem:[%s14 + $0x18] sm:$0xf]
        %v3817 = vld [vmem:[%s14 + $0x1c] sm:$0xf]
        %v3818 = vld [vmem:[%s14 + $0x20] sm:$0xf]
        %v3819 = vld [vmem:[%s14 + $0x24] sm:$0xf]
        %v3820 = vld [vmem:[%s14 + $0x28] sm:$0xf]
        %v3821 = vld [vmem:[%s14 + $0x2c] sm:$0xf]
        %v3822 = vld [vmem:[%s14 + $0x30] sm:$0xf]
        %v3823 = vld [vmem:[%s14 + $0x34] sm:$0xf]
        %v3824 = vld [vmem:[%s14 + $0x38] sm:$0xf]
        %v3825 = vld [vmem:[%s14 + $0x3c] sm:$0xf]
        %v3826 = vld [vmem:[%s14 + $0x40] sm:$0xf]
        %v3827 = vld [vmem:[%s14 + $0x44] sm:$0xf]
        %v3828 = vld [vmem:[%s14 + $0x48] sm:$0xf]
        %v3829 = vld [vmem:[%s14 + $0x4c] sm:$0xf]
        %v3830 = vld [vmem:[%s14 + $0x50] sm:$0xf]
        %v3831 = vld [vmem:[%s14 + $0x54] sm:$0xf]
        %v3832 = vld [vmem:[%s14 + $0x58] sm:$0xf]
        %v3833 = vld [vmem:[%s14 + $0x5c] sm:$0xf]
        %v3834 = vld [vmem:[%s14 + $0x60] sm:$0xf]
        %v3835 = vld [vmem:[%s14 + $0x64] sm:$0xf]
        %v3836 = vld [vmem:[%s14 + $0x68] sm:$0xf]
        %v3837 = vld [vmem:[%s14 + $0x6c] sm:$0xf]
        %v3838 = vld [vmem:[%s14 + $0x70] sm:$0xf]
        %v3839 = vld [vmem:[%s14 + $0x74] sm:$0xf]
        %v3840 = vld [vmem:[%s14 + $0x78] sm:$0xf]
        %v3841 = vld [vmem:[%s14 + $0x7c] sm:$0xf]
        %v3842 = vld [vmem:[%s14 + $0x80] sm:$0xf]
        %v3843 = vld [vmem:[%s14 + $0x84] sm:$0xf]
        %v3844 = vld [vmem:[%s14 + $0x88] sm:$0xf]
        %v3845 = vld [vmem:[%s14 + $0x8c] sm:$0xf]
        %v3846 = vld [vmem:[%s14 + $0x90] sm:$0xf]
        %v3847 = vld [vmem:[%s14 + $0x94] sm:$0xf]
        %v3848 = vld [vmem:[%s14 + $0x98] sm:$0xf]
        %v3849 = vld [vmem:[%s14 + $0x9c] sm:$0xf]
        %v3850 = vld [vmem:[%s14 + $0xa0] sm:$0xf]
        %v3851 = vld [vmem:[%s14 + $0xa4] sm:$0xf]
        %v3852 = vld [vmem:[%s14 + $0xa8] sm:$0xf]
        %v3853 = vld [vmem:[%s14 + $0xac] sm:$0xf]
        %v3854 = vld [vmem:[%s14 + $0xb0] sm:$0xf]
        %v3855 = vld [vmem:[%s14 + $0xb4] sm:$0xf]
        %v3856 = vld [vmem:[%s14 + $0xb8] sm:$0xf]
        %v3857 = vld [vmem:[%s14 + $0xbc] sm:$0xf]
        %v3858 = vld [vmem:[%s14 + $0xc0] sm:$0xf]
        %v3859 = vld [vmem:[%s14 + $0xc4] sm:$0xf]
        %v3860 = vld [vmem:[%s14 + $0xc8] sm:$0xf]
        %v3861 = vld [vmem:[%s14 + $0xcc] sm:$0xf]
        %v3862 = vld [vmem:[%s14 + $0xd0] sm:$0xf]
        %v3863 = vld [vmem:[%s14 + $0xd4] sm:$0xf]
        %v3864 = vld [vmem:[%s14 + $0xd8] sm:$0xf]
        %v3865 = vld [vmem:[%s14 + $0xdc] sm:$0xf]
        %v3866 = vld [vmem:[%s14 + $0xe0] sm:$0xf]
        %v3867 = vld [vmem:[%s14 + $0xe4] sm:$0xf]
        %v3868 = vld [vmem:[%s14 + $0xe8] sm:$0xf]
        %v3869 = vld [vmem:[%s14 + $0xec] sm:$0xf]
        %v3870 = vld [vmem:[%s14 + $0xf0] sm:$0xf]
        %v3871 = vld [vmem:[%s14 + $0xf4] sm:$0xf]
        %v3872 = vld [vmem:[%s14 + $0xf8] sm:$0xf]
        %v3873 = vld [vmem:[%s14 + $0xfc] sm:$0xf]
        %v3874 = vld [vmem:[%s18] sm:$0x1]
        %v3875 = vld [vmem:[%s18 + $0x1] sm:$0x1]
        %v3876 = vld [vmem:[%s18 + $0x2] sm:$0x1]
        %v3877 = vld [vmem:[%s18 + $0x3] sm:$0x1]
        %v3882 = vlaneseq
        %v3883 = vshrl.u32 %v3882, 7
        %v3884 = vsub.s32 0, %v3883
        %v3885 = vrot.slane %v3874, %v3884
        %v3886 = vlaneseq
        %v3887 = vshrl.u32 %v3886, 7
        %v3888 = vsub.s32 0, %v3887
        %v3889 = vrot.slane %v3875, %v3888
        %v3890 = vlaneseq
        %v3891 = vshrl.u32 %v3890, 7
        %v3892 = vsub.s32 0, %v3891
        %v3893 = vrot.slane %v3876, %v3892
        %v3894 = vlaneseq
        %v3895 = vshrl.u32 %v3894, 7
        %v3896 = vsub.s32 0, %v3895
        %v3897 = vrot.slane %v3877, %v3896
        %v3918 = vunpack.c.l.b16 %v3810
        %v3919 = vunpack.c.l.b16 %v3811
        %v3920 = vunpack.c.l.b16 %v3812
        %v3921 = vunpack.c.l.b16 %v3813
        %v3922 = vunpack.c.l.b16 %v3814
        %v3923 = vunpack.c.l.b16 %v3815
        %v3924 = vunpack.c.l.b16 %v3816
        %v3925 = vunpack.c.l.b16 %v3817
        %v3926 = vunpack.c.l.b16 %v3818
        %v3927 = vunpack.c.l.b16 %v3819
        %v3928 = vunpack.c.l.b16 %v3820
        %v3929 = vunpack.c.l.b16 %v3821
        %v3930 = vunpack.c.l.b16 %v3822
        %v3931 = vunpack.c.l.b16 %v3823
        %v3932 = vunpack.c.l.b16 %v3824
        %v3933 = vunpack.c.l.b16 %v3825
        %v3934 = vpack.c.b16 %v3919, %v3918
        %v3935 = vpack.c.b16 %v3921, %v3920
        %v3936 = vpack.c.b16 %v3923, %v3922
        %v3937 = vpack.c.b16 %v3925, %v3924
        %v3938 = vpack.c.b16 %v3927, %v3926
        %v3939 = vpack.c.b16 %v3929, %v3928
        %v3940 = vpack.c.b16 %v3931, %v3930
        %v3941 = vpack.c.b16 %v3933, %v3932
        %3950 = vmatprep.subr.bf16.mxu0 0
        %3951 = vmatpush1.bf16.msra.mxu0 %v3941
        %3952 = vmatprep.subr.bf16.mxu0 0
        %3953 = vmatpush1.bf16.msra.mxu0 %v3940
        %3954 = vmatprep.subr.bf16.mxu0 0
        %3955 = vmatpush1.bf16.msra.mxu0 %v3939
        %3956 = vmatprep.subr.bf16.mxu0 0
        %3957 = vmatpush1.bf16.msra.mxu0 %v3938
        %3958 = vmatprep.subr.bf16.mxu0 0
        %3959 = vmatpush1.bf16.msra.mxu0 %v3937
        %3960 = vmatprep.subr.bf16.mxu0 0
        %3961 = vmatpush1.bf16.msra.mxu0 %v3936
        %3962 = vmatprep.subr.bf16.mxu0 0
        %3963 = vmatpush1.bf16.msra.mxu0 %v3935
        %3964 = vmatprep.subr.bf16.mxu0 0
        %3965 = vmatpush1.bf16.msra.mxu0 %v3934
        %3966 = vmatprep.subr.bf16.mxu0 0
        %3967 = vmatpush2.bf16.msra.mxu0 0
        %3968 = vmatprep.subr.bf16.mxu0 0
        %3969 = vmatpush2.bf16.msra.mxu0 0
        %3970 = vmatprep.subr.bf16.mxu0 0
        %3971 = vmatpush2.bf16.msra.mxu0 0
        %3972 = vmatprep.subr.bf16.mxu0 0
        %3973 = vmatpush2.bf16.msra.mxu0 0
        %3974 = vmatprep.subr.bf16.mxu0 0
        %3975 = vmatpush2.bf16.msra.mxu0 0
        %3976 = vmatprep.subr.bf16.mxu0 0
        %3977 = vmatpush2.bf16.msra.mxu0 0
        %3978 = vmatprep.subr.bf16.mxu0 0
        %3979 = vmatpush2.bf16.msra.mxu0 0
        %3980 = vmatprep.subr.bf16.mxu0 0
        %3981 = vmatpush2.bf16.msra.mxu0 0
        %3982 = vmatprep.mubr.bf16.mxu0 0
        %3983 = vmatmul.mubr.bf16.gmra.mxu0 %v2921
        %v3984 = vpop.f32.mrf.mxu0
        %v3985 = vadd.f32 %v3885, %v3984
        %v3986 = vpop.f32.mrf.mxu0
        %v3987 = vpop.f32.mrf.mxu0
        %v3988 = vpop.f32.mrf.mxu0
        %3989 = vdwg.mxu0
        %v4006 = vunpack.c.l.b16 %v3826
        %v4007 = vunpack.c.l.b16 %v3827
        %v4008 = vunpack.c.l.b16 %v3828
        %v4009 = vunpack.c.l.b16 %v3829
        %v4010 = vunpack.c.l.b16 %v3830
        %v4011 = vunpack.c.l.b16 %v3831
        %v4012 = vunpack.c.l.b16 %v3832
        %v4013 = vunpack.c.l.b16 %v3833
        %v4014 = vunpack.c.l.b16 %v3834
        %v4015 = vunpack.c.l.b16 %v3835
        %v4016 = vunpack.c.l.b16 %v3836
        %v4017 = vunpack.c.l.b16 %v3837
        %v4018 = vunpack.c.l.b16 %v3838
        %v4019 = vunpack.c.l.b16 %v3839
        %v4020 = vunpack.c.l.b16 %v3840
        %v4021 = vunpack.c.l.b16 %v3841
        %v4022 = vpack.c.b16 %v4007, %v4006
        %v4023 = vpack.c.b16 %v4009, %v4008
        %v4024 = vpack.c.b16 %v4011, %v4010
        %v4025 = vpack.c.b16 %v4013, %v4012
        %v4026 = vpack.c.b16 %v4015, %v4014
        %v4027 = vpack.c.b16 %v4017, %v4016
        %v4028 = vpack.c.b16 %v4019, %v4018
        %v4029 = vpack.c.b16 %v4021, %v4020
        %4038 = vmatprep.subr.bf16.mxu0 0
        %4039 = vmatpush1.bf16.msra.mxu0 %v4029
        %4040 = vmatprep.subr.bf16.mxu0 0
        %4041 = vmatpush1.bf16.msra.mxu0 %v4028
        %4042 = vmatprep.subr.bf16.mxu0 0
        %4043 = vmatpush1.bf16.msra.mxu0 %v4027
        %4044 = vmatprep.subr.bf16.mxu0 0
        %4045 = vmatpush1.bf16.msra.mxu0 %v4026
        %4046 = vmatprep.subr.bf16.mxu0 0
        %4047 = vmatpush1.bf16.msra.mxu0 %v4025
        %4048 = vmatprep.subr.bf16.mxu0 0
        %4049 = vmatpush1.bf16.msra.mxu0 %v4024
        %4050 = vmatprep.subr.bf16.mxu0 0
        %4051 = vmatpush1.bf16.msra.mxu0 %v4023
        %4052 = vmatprep.subr.bf16.mxu0 0
        %4053 = vmatpush1.bf16.msra.mxu0 %v4022
        %4054 = vmatprep.subr.bf16.mxu0 0
        %4055 = vmatpush2.bf16.msra.mxu0 0
        %4056 = vmatprep.subr.bf16.mxu0 0
        %4057 = vmatpush2.bf16.msra.mxu0 0
        %4058 = vmatprep.subr.bf16.mxu0 0
        %4059 = vmatpush2.bf16.msra.mxu0 0
        %4060 = vmatprep.subr.bf16.mxu0 0
        %4061 = vmatpush2.bf16.msra.mxu0 0
        %4062 = vmatprep.subr.bf16.mxu0 0
        %4063 = vmatpush2.bf16.msra.mxu0 0
        %4064 = vmatprep.subr.bf16.mxu0 0
        %4065 = vmatpush2.bf16.msra.mxu0 0
        %4066 = vmatprep.subr.bf16.mxu0 0
        %4067 = vmatpush2.bf16.msra.mxu0 0
        %4068 = vmatprep.subr.bf16.mxu0 0
        %4069 = vmatpush2.bf16.msra.mxu0 0
        %4070 = vmatprep.mubr.bf16.mxu0 0
        %4071 = vmatmul.mubr.bf16.gmra.mxu0 %v2921
        %v4072 = vpop.f32.mrf.mxu0
        %v4073 = vadd.f32 %v3889, %v4072
        %v4074 = vpop.f32.mrf.mxu0
        %v4075 = vpop.f32.mrf.mxu0
        %v4076 = vpop.f32.mrf.mxu0
        %4077 = vdwg.mxu0
        %v4094 = vunpack.c.l.b16 %v3842
        %v4095 = vunpack.c.l.b16 %v3843
        %v4096 = vunpack.c.l.b16 %v3844
        %v4097 = vunpack.c.l.b16 %v3845
        %v4098 = vunpack.c.l.b16 %v3846
        %v4099 = vunpack.c.l.b16 %v3847
        %v4100 = vunpack.c.l.b16 %v3848
        %v4101 = vunpack.c.l.b16 %v3849
        %v4102 = vunpack.c.l.b16 %v3850
        %v4103 = vunpack.c.l.b16 %v3851
        %v4104 = vunpack.c.l.b16 %v3852
        %v4105 = vunpack.c.l.b16 %v3853
        %v4106 = vunpack.c.l.b16 %v3854
        %v4107 = vunpack.c.l.b16 %v3855
        %v4108 = vunpack.c.l.b16 %v3856
        %v4109 = vunpack.c.l.b16 %v3857
        %v4110 = vpack.c.b16 %v4095, %v4094
        %v4111 = vpack.c.b16 %v4097, %v4096
        %v4112 = vpack.c.b16 %v4099, %v4098
        %v4113 = vpack.c.b16 %v4101, %v4100
        %v4114 = vpack.c.b16 %v4103, %v4102
        %v4115 = vpack.c.b16 %v4105, %v4104
        %v4116 = vpack.c.b16 %v4107, %v4106
        %v4117 = vpack.c.b16 %v4109, %v4108
        %4126 = vmatprep.subr.bf16.mxu0 0
        %4127 = vmatpush1.bf16.msra.mxu0 %v4117
        %4128 = vmatprep.subr.bf16.mxu0 0
        %4129 = vmatpush1.bf16.msra.mxu0 %v4116
        %4130 = vmatprep.subr.bf16.mxu0 0
        %4131 = vmatpush1.bf16.msra.mxu0 %v4115
        %4132 = vmatprep.subr.bf16.mxu0 0
        %4133 = vmatpush1.bf16.msra.mxu0 %v4114
        %4134 = vmatprep.subr.bf16.mxu0 0
        %4135 = vmatpush1.bf16.msra.mxu0 %v4113
        %4136 = vmatprep.subr.bf16.mxu0 0
        %4137 = vmatpush1.bf16.msra.mxu0 %v4112
        %4138 = vmatprep.subr.bf16.mxu0 0
        %4139 = vmatpush1.bf16.msra.mxu0 %v4111
        %4140 = vmatprep.subr.bf16.mxu0 0
        %4141 = vmatpush1.bf16.msra.mxu0 %v4110
        %4142 = vmatprep.subr.bf16.mxu0 0
        %4143 = vmatpush2.bf16.msra.mxu0 0
        %4144 = vmatprep.subr.bf16.mxu0 0
        %4145 = vmatpush2.bf16.msra.mxu0 0
        %4146 = vmatprep.subr.bf16.mxu0 0
        %4147 = vmatpush2.bf16.msra.mxu0 0
        %4148 = vmatprep.subr.bf16.mxu0 0
        %4149 = vmatpush2.bf16.msra.mxu0 0
        %4150 = vmatprep.subr.bf16.mxu0 0
        %4151 = vmatpush2.bf16.msra.mxu0 0
        %4152 = vmatprep.subr.bf16.mxu0 0
        %4153 = vmatpush2.bf16.msra.mxu0 0
        %4154 = vmatprep.subr.bf16.mxu0 0
        %4155 = vmatpush2.bf16.msra.mxu0 0
        %4156 = vmatprep.subr.bf16.mxu0 0
        %4157 = vmatpush2.bf16.msra.mxu0 0
        %4158 = vmatprep.mubr.bf16.mxu0 0
        %4159 = vmatmul.mubr.bf16.gmra.mxu0 %v2921
        %v4160 = vpop.f32.mrf.mxu0
        %v4161 = vadd.f32 %v3893, %v4160
        %v4162 = vpop.f32.mrf.mxu0
        %v4163 = vpop.f32.mrf.mxu0
        %v4164 = vpop.f32.mrf.mxu0
        %4165 = vdwg.mxu0
        %v4182 = vunpack.c.l.b16 %v3858
        %v4183 = vunpack.c.l.b16 %v3859
        %v4184 = vunpack.c.l.b16 %v3860
        %v4185 = vunpack.c.l.b16 %v3861
        %v4186 = vunpack.c.l.b16 %v3862
        %v4187 = vunpack.c.l.b16 %v3863
        %v4188 = vunpack.c.l.b16 %v3864
        %v4189 = vunpack.c.l.b16 %v3865
        %v4190 = vunpack.c.l.b16 %v3866
        %v4191 = vunpack.c.l.b16 %v3867
        %v4192 = vunpack.c.l.b16 %v3868
        %v4193 = vunpack.c.l.b16 %v3869
        %v4194 = vunpack.c.l.b16 %v3870
        %v4195 = vunpack.c.l.b16 %v3871
        %v4196 = vunpack.c.l.b16 %v3872
        %v4197 = vunpack.c.l.b16 %v3873
        %v4198 = vpack.c.b16 %v4183, %v4182
        %v4199 = vpack.c.b16 %v4185, %v4184
        %v4200 = vpack.c.b16 %v4187, %v4186
        %v4201 = vpack.c.b16 %v4189, %v4188
        %v4202 = vpack.c.b16 %v4191, %v4190
        %v4203 = vpack.c.b16 %v4193, %v4192
        %v4204 = vpack.c.b16 %v4195, %v4194
        %v4205 = vpack.c.b16 %v4197, %v4196
        %4214 = vmatprep.subr.bf16.mxu0 0
        %4215 = vmatpush1.bf16.msra.mxu0 %v4205
        %4216 = vmatprep.subr.bf16.mxu0 0
        %4217 = vmatpush1.bf16.msra.mxu0 %v4204
        %4218 = vmatprep.subr.bf16.mxu0 0
        %4219 = vmatpush1.bf16.msra.mxu0 %v4203
        %4220 = vmatprep.subr.bf16.mxu0 0
        %4221 = vmatpush1.bf16.msra.mxu0 %v4202
        %4222 = vmatprep.subr.bf16.mxu0 0
        %4223 = vmatpush1.bf16.msra.mxu0 %v4201
        %4224 = vmatprep.subr.bf16.mxu0 0
        %4225 = vmatpush1.bf16.msra.mxu0 %v4200
        %4226 = vmatprep.subr.bf16.mxu0 0
        %4227 = vmatpush1.bf16.msra.mxu0 %v4199
        %4228 = vmatprep.subr.bf16.mxu0 0
        %4229 = vmatpush1.bf16.msra.mxu0 %v4198
        %4230 = vmatprep.subr.bf16.mxu0 0
        %4231 = vmatpush2.bf16.msra.mxu0 0
        %4232 = vmatprep.subr.bf16.mxu0 0
        %4233 = vmatpush2.bf16.msra.mxu0 0
        %4234 = vmatprep.subr.bf16.mxu0 0
        %4235 = vmatpush2.bf16.msra.mxu0 0
        %4236 = vmatprep.subr.bf16.mxu0 0
        %4237 = vmatpush2.bf16.msra.mxu0 0
        %4238 = vmatprep.subr.bf16.mxu0 0
        %4239 = vmatpush2.bf16.msra.mxu0 0
        %4240 = vmatprep.subr.bf16.mxu0 0
        %4241 = vmatpush2.bf16.msra.mxu0 0
        %4242 = vmatprep.subr.bf16.mxu0 0
        %4243 = vmatpush2.bf16.msra.mxu0 0
        %4244 = vmatprep.subr.bf16.mxu0 0
        %4245 = vmatpush2.bf16.msra.mxu0 0
        %4246 = vmatprep.mubr.bf16.mxu0 0
        %4247 = vmatmul.mubr.bf16.gmra.mxu0 %v2921
        %v4248 = vpop.f32.mrf.mxu0
        %v4249 = vadd.f32 %v3897, %v4248
        %v4250 = vpop.f32.mrf.mxu0
        %v4251 = vpop.f32.mrf.mxu0
        %v4252 = vpop.f32.mrf.mxu0
        %4253 = vdwg.mxu0
        %v4254 = vpack.c.bf16 %v3097, %v3097
        %v4255 = vpack.c.bf16 %v3185, %v3185
        %v4256 = vpack.c.bf16 %v3273, %v3273
        %v4257 = vpack.c.bf16 %v3361, %v3361
        %v4258 = vpack.c.bf16 %v3541, %v3541
        %v4259 = vpack.c.bf16 %v3629, %v3629
        %v4260 = vpack.c.bf16 %v3717, %v3717
        %v4261 = vpack.c.bf16 %v3805, %v3805
        %v4262 = vpack.c.bf16 %v3985, %v3985
        %v4263 = vpack.c.bf16 %v4073, %v4073
        %v4264 = vpack.c.bf16 %v4161, %v4161
        %v4265 = vpack.c.bf16 %v4249, %v4249
        %v4267 = vsel %vm2211, %v4254, 0
        %v4270 = vsel %vm2211, %v4258, 0
        %4272 = vmatprep.subr.bf16.mxu0 0
        %4273 = vmatpush1.bf16.xpose.msra.mxu0 0
        %4274 = vmatprep.subr.bf16.mxu0 0
        %4275 = vmatpush1.bf16.xpose.msra.mxu0 0
        %4276 = vmatprep.subr.bf16.mxu0 0
        %4277 = vmatpush1.bf16.xpose.msra.mxu0 0
        %4278 = vmatprep.subr.bf16.mxu0 0
        %4279 = vmatpush1.bf16.xpose.msra.mxu0 0
        %4280 = vmatprep.subr.bf16.mxu0 0
        %4281 = vmatpush1.bf16.xpose.msra.mxu0 0
        %4282 = vmatprep.subr.bf16.mxu0 0
        %4283 = vmatpush1.bf16.xpose.msra.mxu0 0
        %4284 = vmatprep.subr.bf16.mxu0 0
        %4285 = vmatpush1.bf16.xpose.msra.mxu0 0
        %4286 = vmatprep.subr.bf16.mxu0 0
        %4287 = vmatpush1.bf16.xpose.msra.mxu0 %v4270
        %4288 = vmatprep.subr.bf16.mxu0 0
        %4289 = vmatpush2.bf16.xpose.msra.mxu0 0
        %4290 = vmatprep.subr.bf16.mxu0 0
        %4291 = vmatpush2.bf16.xpose.msra.mxu0 0
        %4292 = vmatprep.subr.bf16.mxu0 0
        %4293 = vmatpush2.bf16.xpose.msra.mxu0 0
        %4294 = vmatprep.subr.bf16.mxu0 0
        %4295 = vmatpush2.bf16.xpose.msra.mxu0 0
        %4296 = vmatprep.subr.bf16.mxu0 0
        %4297 = vmatpush2.bf16.xpose.msra.mxu0 0
        %4298 = vmatprep.subr.bf16.mxu0 0
        %4299 = vmatpush2.bf16.xpose.msra.mxu0 0
        %4300 = vmatprep.subr.bf16.mxu0 0
        %4301 = vmatpush2.bf16.xpose.msra.mxu0 0
        %4302 = vmatprep.subr.bf16.mxu0 0
        %4303 = vmatpush2.bf16.xpose.msra.mxu0 0
        %4304 = vmatprep.mubr.bf16.mxu0 0
        %4305 = vmatmul.mubr.bf16.gmra.mxu0 %v4267
        %v4306 = vpop.f32.mrf.mxu0
        %v4307 = vadd.f32 0.0, %v4306
        %v4308 = vpop.f32.mrf.mxu0
        %v4309 = vpop.f32.mrf.mxu0
        %v4310 = vpop.f32.mrf.mxu0
        %4311 = vdwg.mxu0
        %v4313 = vsel %vm2211, %v4255, 0
        %v4316 = vsel %vm2211, %v4259, 0
        %4318 = vmatprep.subr.bf16.mxu0 0
        %4319 = vmatpush1.bf16.xpose.msra.mxu0 0
        %4320 = vmatprep.subr.bf16.mxu0 0
        %4321 = vmatpush1.bf16.xpose.msra.mxu0 0
        %4322 = vmatprep.subr.bf16.mxu0 0
        %4323 = vmatpush1.bf16.xpose.msra.mxu0 0
        %4324 = vmatprep.subr.bf16.mxu0 0
        %4325 = vmatpush1.bf16.xpose.msra.mxu0 0
        %4326 = vmatprep.subr.bf16.mxu0 0
        %4327 = vmatpush1.bf16.xpose.msra.mxu0 0
        %4328 = vmatprep.subr.bf16.mxu0 0
        %4329 = vmatpush1.bf16.xpose.msra.mxu0 0
        %4330 = vmatprep.subr.bf16.mxu0 0
        %4331 = vmatpush1.bf16.xpose.msra.mxu0 0
        %4332 = vmatprep.subr.bf16.mxu0 0
        %4333 = vmatpush1.bf16.xpose.msra.mxu0 %v4316
        %4334 = vmatprep.subr.bf16.mxu0 0
        %4335 = vmatpush2.bf16.xpose.msra.mxu0 0
        %4336 = vmatprep.subr.bf16.mxu0 0
        %4337 = vmatpush2.bf16.xpose.msra.mxu0 0
        %4338 = vmatprep.subr.bf16.mxu0 0
        %4339 = vmatpush2.bf16.xpose.msra.mxu0 0
        %4340 = vmatprep.subr.bf16.mxu0 0
        %4341 = vmatpush2.bf16.xpose.msra.mxu0 0
        %4342 = vmatprep.subr.bf16.mxu0 0
        %4343 = vmatpush2.bf16.xpose.msra.mxu0 0
        %4344 = vmatprep.subr.bf16.mxu0 0
        %4345 = vmatpush2.bf16.xpose.msra.mxu0 0
        %4346 = vmatprep.subr.bf16.mxu0 0
        %4347 = vmatpush2.bf16.xpose.msra.mxu0 0
        %4348 = vmatprep.subr.bf16.mxu0 0
        %4349 = vmatpush2.bf16.xpose.msra.mxu0 0
        %4350 = vmatprep.mubr.bf16.mxu0 0
        %4351 = vmatmul.mubr.bf16.gmra.mxu0 %v4313
        %v4352 = vpop.f32.mrf.mxu0
        %v4353 = vadd.f32 0.0, %v4352
        %v4354 = vpop.f32.mrf.mxu0
        %v4355 = vpop.f32.mrf.mxu0
        %v4356 = vpop.f32.mrf.mxu0
        %4357 = vdwg.mxu0
        %v4359 = vsel %vm2211, %v4256, 0
        %v4362 = vsel %vm2211, %v4260, 0
        %4364 = vmatprep.subr.bf16.mxu0 0
        %4365 = vmatpush1.bf16.xpose.msra.mxu0 0
        %4366 = vmatprep.subr.bf16.mxu0 0
        %4367 = vmatpush1.bf16.xpose.msra.mxu0 0
        %4368 = vmatprep.subr.bf16.mxu0 0
        %4369 = vmatpush1.bf16.xpose.msra.mxu0 0
        %4370 = vmatprep.subr.bf16.mxu0 0
        %4371 = vmatpush1.bf16.xpose.msra.mxu0 0
        %4372 = vmatprep.subr.bf16.mxu0 0
        %4373 = vmatpush1.bf16.xpose.msra.mxu0 0
        %4374 = vmatprep.subr.bf16.mxu0 0
        %4375 = vmatpush1.bf16.xpose.msra.mxu0 0
        %4376 = vmatprep.subr.bf16.mxu0 0
        %4377 = vmatpush1.bf16.xpose.msra.mxu0 0
        %4378 = vmatprep.subr.bf16.mxu0 0
        %4379 = vmatpush1.bf16.xpose.msra.mxu0 %v4362
        %4380 = vmatprep.subr.bf16.mxu0 0
        %4381 = vmatpush2.bf16.xpose.msra.mxu0 0
        %4382 = vmatprep.subr.bf16.mxu0 0
        %4383 = vmatpush2.bf16.xpose.msra.mxu0 0
        %4384 = vmatprep.subr.bf16.mxu0 0
        %4385 = vmatpush2.bf16.xpose.msra.mxu0 0
        %4386 = vmatprep.subr.bf16.mxu0 0
        %4387 = vmatpush2.bf16.xpose.msra.mxu0 0
        %4388 = vmatprep.subr.bf16.mxu0 0
        %4389 = vmatpush2.bf16.xpose.msra.mxu0 0
        %4390 = vmatprep.subr.bf16.mxu0 0
        %4391 = vmatpush2.bf16.xpose.msra.mxu0 0
        %4392 = vmatprep.subr.bf16.mxu0 0
        %4393 = vmatpush2.bf16.xpose.msra.mxu0 0
        %4394 = vmatprep.subr.bf16.mxu0 0
        %4395 = vmatpush2.bf16.xpose.msra.mxu0 0
        %4396 = vmatprep.mubr.bf16.mxu0 0
        %4397 = vmatmul.mubr.bf16.gmra.mxu0 %v4359
        %v4398 = vpop.f32.mrf.mxu0
        %v4399 = vadd.f32 0.0, %v4398
        %v4400 = vpop.f32.mrf.mxu0
        %v4401 = vpop.f32.mrf.mxu0
        %v4402 = vpop.f32.mrf.mxu0
        %4403 = vdwg.mxu0
        %v4405 = vsel %vm2211, %v4257, 0
        %v4408 = vsel %vm2211, %v4261, 0
        %4410 = vmatprep.subr.bf16.mxu0 0
        %4411 = vmatpush1.bf16.xpose.msra.mxu0 0
        %4412 = vmatprep.subr.bf16.mxu0 0
        %4413 = vmatpush1.bf16.xpose.msra.mxu0 0
        %4414 = vmatprep.subr.bf16.mxu0 0
        %4415 = vmatpush1.bf16.xpose.msra.mxu0 0
        %4416 = vmatprep.subr.bf16.mxu0 0
        %4417 = vmatpush1.bf16.xpose.msra.mxu0 0
        %4418 = vmatprep.subr.bf16.mxu0 0
        %4419 = vmatpush1.bf16.xpose.msra.mxu0 0
        %4420 = vmatprep.subr.bf16.mxu0 0
        %4421 = vmatpush1.bf16.xpose.msra.mxu0 0
        %4422 = vmatprep.subr.bf16.mxu0 0
        %4423 = vmatpush1.bf16.xpose.msra.mxu0 0
        %4424 = vmatprep.subr.bf16.mxu0 0
        %4425 = vmatpush1.bf16.xpose.msra.mxu0 %v4408
        %4426 = vmatprep.subr.bf16.mxu0 0
        %4427 = vmatpush2.bf16.xpose.msra.mxu0 0
        %4428 = vmatprep.subr.bf16.mxu0 0
        %4429 = vmatpush2.bf16.xpose.msra.mxu0 0
        %4430 = vmatprep.subr.bf16.mxu0 0
        %4431 = vmatpush2.bf16.xpose.msra.mxu0 0
        %4432 = vmatprep.subr.bf16.mxu0 0
        %4433 = vmatpush2.bf16.xpose.msra.mxu0 0
        %4434 = vmatprep.subr.bf16.mxu0 0
        %4435 = vmatpush2.bf16.xpose.msra.mxu0 0
        %4436 = vmatprep.subr.bf16.mxu0 0
        %4437 = vmatpush2.bf16.xpose.msra.mxu0 0
        %4438 = vmatprep.subr.bf16.mxu0 0
        %4439 = vmatpush2.bf16.xpose.msra.mxu0 0
        %4440 = vmatprep.subr.bf16.mxu0 0
        %4441 = vmatpush2.bf16.xpose.msra.mxu0 0
        %4442 = vmatprep.mubr.bf16.mxu0 0
        %4443 = vmatmul.mubr.bf16.gmra.mxu0 %v4405
        %v4444 = vpop.f32.mrf.mxu0
        %v4445 = vadd.f32 0.0, %v4444
        %v4446 = vpop.f32.mrf.mxu0
        %v4447 = vpop.f32.mrf.mxu0
        %v4448 = vpop.f32.mrf.mxu0
        %4449 = vdwg.mxu0
        %v4450 = vmul.f32 %v4307, 0.17677669
        %v4451 = vmul.f32 %v4353, 0.17677669
        %v4452 = vmul.f32 %v4399, 0.17677669
        %v4453 = vmul.f32 %v4445, 0.17677669
        %v4454 = vsel %vm2406, %v4450, -inf
        %4455 = vmax.xlane.f32.xlu0 %v4454
        %v4456 = vpop.xlane.xlu0 %4455
        %v4457 = vsel %vm2406, %v4451, -inf
        %4458 = vmax.xlane.f32.xlu0 %v4457
        %v4459 = vpop.xlane.xlu0 %4458
        %v4460 = vsel %vm2406, %v4452, -inf
        %4461 = vmax.xlane.f32.xlu0 %v4460
        %v4462 = vpop.xlane.xlu0 %4461
        %v4463 = vsel %vm2406, %v4453, -inf
        %4464 = vmax.xlane.f32.xlu0 %v4463
        %v4465 = vpop.xlane.xlu0 %4464
        %v4466 = vsub.f32 %v4450, %v4456
        %v4467 = vsub.f32 %v4451, %v4459
        %v4468 = vsub.f32 %v4452, %v4462
        %v4469 = vsub.f32 %v4453, %v4465
        %v4470 = vmul.f32 %v4466, 1.442695
        %v4471 = vpow.pop %v4470
        %v4472 = vmul.f32 %v4467, 1.442695
        %v4473 = vpow.pop %v4472
        %v4474 = vmul.f32 %v4468, 1.442695
        %v4475 = vpow.pop %v4474
        %v4476 = vmul.f32 %v4469, 1.442695
        %v4477 = vpow.pop %v4476
        %v4478 = vsel %vm2406, %v4471, 0.0
        %4479 = vadd.xlane.f32.xlu0 %v4478
        %v4480 = vpop.xlane.xlu0 %4479
        %v4481 = vsel %vm2406, %v4473, 0.0
        %4482 = vadd.xlane.f32.xlu0 %v4481
        %v4483 = vpop.xlane.xlu0 %4482
        %v4484 = vsel %vm2406, %v4475, 0.0
        %4485 = vadd.xlane.f32.xlu0 %v4484
        %v4486 = vpop.xlane.xlu0 %4485
        %v4487 = vsel %vm2406, %v4477, 0.0
        %4488 = vadd.xlane.f32.xlu0 %v4487
        %v4489 = vpop.xlane.xlu0 %4488
        %v4490 = vrcp.pop %v4480
        %v4491 = vrcp.pop %v4483
        %v4492 = vrcp.pop %v4486
        %v4493 = vrcp.pop %v4489
        %v4494 = vmul.f32 %v4471, %v4490
        %v4495 = vmul.f32 %v4473, %v4491
        %v4496 = vmul.f32 %v4475, %v4492
        %v4497 = vmul.f32 %v4477, %v4493
        %v4498 = vpack.c.bf16 %v4494, %v4494
        %v4499 = vpack.c.bf16 %v4495, %v4495
        %v4500 = vpack.c.bf16 %v4496, %v4496
        %v4501 = vpack.c.bf16 %v4497, %v4497
        %v4503 = vsel %vm2406, %v4498, 0
        %v4506 = vsel %vm2458, %v4262, 0
        %4508 = vmatprep.subr.bf16.mxu0 0
        %4509 = vmatpush1.bf16.msra.mxu0 0
        %4510 = vmatprep.subr.bf16.mxu0 0
        %4511 = vmatpush1.bf16.msra.mxu0 0
        %4512 = vmatprep.subr.bf16.mxu0 0
        %4513 = vmatpush1.bf16.msra.mxu0 0
        %4514 = vmatprep.subr.bf16.mxu0 0
        %4515 = vmatpush1.bf16.msra.mxu0 0
        %4516 = vmatprep.subr.bf16.mxu0 0
        %4517 = vmatpush1.bf16.msra.mxu0 0
        %4518 = vmatprep.subr.bf16.mxu0 0
        %4519 = vmatpush1.bf16.msra.mxu0 0
        %4520 = vmatprep.subr.bf16.mxu0 0
        %4521 = vmatpush1.bf16.msra.mxu0 0
        %4522 = vmatprep.subr.bf16.mxu0 0
        %4523 = vmatpush1.bf16.msra.mxu0 %v4506
        %4524 = vmatprep.subr.bf16.mxu0 0
        %4525 = vmatpush2.bf16.msra.mxu0 0
        %4526 = vmatprep.subr.bf16.mxu0 0
        %4527 = vmatpush2.bf16.msra.mxu0 0
        %4528 = vmatprep.subr.bf16.mxu0 0
        %4529 = vmatpush2.bf16.msra.mxu0 0
        %4530 = vmatprep.subr.bf16.mxu0 0
        %4531 = vmatpush2.bf16.msra.mxu0 0
        %4532 = vmatprep.subr.bf16.mxu0 0
        %4533 = vmatpush2.bf16.msra.mxu0 0
        %4534 = vmatprep.subr.bf16.mxu0 0
        %4535 = vmatpush2.bf16.msra.mxu0 0
        %4536 = vmatprep.subr.bf16.mxu0 0
        %4537 = vmatpush2.bf16.msra.mxu0 0
        %4538 = vmatprep.subr.bf16.mxu0 0
        %4539 = vmatpush2.bf16.msra.mxu0 0
        %4540 = vmatprep.mubr.bf16.mxu0 0
        %4541 = vmatmul.mubr.bf16.gmra.mxu0 %v4503
        %v4542 = vpop.f32.mrf.mxu0
        %v4543 = vadd.f32 0.0, %v4542
        %v4544 = vpop.f32.mrf.mxu0
        %v4545 = vpop.f32.mrf.mxu0
        %v4546 = vpop.f32.mrf.mxu0
        %4547 = vdwg.mxu0
        %v4549 = vsel %vm2406, %v4499, 0
        %v4552 = vsel %vm2458, %v4263, 0
        %4554 = vmatprep.subr.bf16.mxu0 0
        %4555 = vmatpush1.bf16.msra.mxu0 0
        %4556 = vmatprep.subr.bf16.mxu0 0
        %4557 = vmatpush1.bf16.msra.mxu0 0
        %4558 = vmatprep.subr.bf16.mxu0 0
        %4559 = vmatpush1.bf16.msra.mxu0 0
        %4560 = vmatprep.subr.bf16.mxu0 0
        %4561 = vmatpush1.bf16.msra.mxu0 0
        %4562 = vmatprep.subr.bf16.mxu0 0
        %4563 = vmatpush1.bf16.msra.mxu0 0
        %4564 = vmatprep.subr.bf16.mxu0 0
        %4565 = vmatpush1.bf16.msra.mxu0 0
        %4566 = vmatprep.subr.bf16.mxu0 0
        %4567 = vmatpush1.bf16.msra.mxu0 0
        %4568 = vmatprep.subr.bf16.mxu0 0
        %4569 = vmatpush1.bf16.msra.mxu0 %v4552
        %4570 = vmatprep.subr.bf16.mxu0 0
        %4571 = vmatpush2.bf16.msra.mxu0 0
        %4572 = vmatprep.subr.bf16.mxu0 0
        %4573 = vmatpush2.bf16.msra.mxu0 0
        %4574 = vmatprep.subr.bf16.mxu0 0
        %4575 = vmatpush2.bf16.msra.mxu0 0
        %4576 = vmatprep.subr.bf16.mxu0 0
        %4577 = vmatpush2.bf16.msra.mxu0 0
        %4578 = vmatprep.subr.bf16.mxu0 0
        %4579 = vmatpush2.bf16.msra.mxu0 0
        %4580 = vmatprep.subr.bf16.mxu0 0
        %4581 = vmatpush2.bf16.msra.mxu0 0
        %4582 = vmatprep.subr.bf16.mxu0 0
        %4583 = vmatpush2.bf16.msra.mxu0 0
        %4584 = vmatprep.subr.bf16.mxu0 0
        %4585 = vmatpush2.bf16.msra.mxu0 0
        %4586 = vmatprep.mubr.bf16.mxu0 0
        %4587 = vmatmul.mubr.bf16.gmra.mxu0 %v4549
        %v4588 = vpop.f32.mrf.mxu0
        %v4589 = vadd.f32 0.0, %v4588
        %v4590 = vpop.f32.mrf.mxu0
        %v4591 = vpop.f32.mrf.mxu0
        %v4592 = vpop.f32.mrf.mxu0
        %4593 = vdwg.mxu0
        %v4595 = vsel %vm2406, %v4500, 0
        %v4598 = vsel %vm2458, %v4264, 0
        %4600 = vmatprep.subr.bf16.mxu0 0
        %4601 = vmatpush1.bf16.msra.mxu0 0
        %4602 = vmatprep.subr.bf16.mxu0 0
        %4603 = vmatpush1.bf16.msra.mxu0 0
        %4604 = vmatprep.subr.bf16.mxu0 0
        %4605 = vmatpush1.bf16.msra.mxu0 0
        %4606 = vmatprep.subr.bf16.mxu0 0
        %4607 = vmatpush1.bf16.msra.mxu0 0
        %4608 = vmatprep.subr.bf16.mxu0 0
        %4609 = vmatpush1.bf16.msra.mxu0 0
        %4610 = vmatprep.subr.bf16.mxu0 0
        %4611 = vmatpush1.bf16.msra.mxu0 0
        %4612 = vmatprep.subr.bf16.mxu0 0
        %4613 = vmatpush1.bf16.msra.mxu0 0
        %4614 = vmatprep.subr.bf16.mxu0 0
        %4615 = vmatpush1.bf16.msra.mxu0 %v4598
        %4616 = vmatprep.subr.bf16.mxu0 0
        %4617 = vmatpush2.bf16.msra.mxu0 0
        %4618 = vmatprep.subr.bf16.mxu0 0
        %4619 = vmatpush2.bf16.msra.mxu0 0
        %4620 = vmatprep.subr.bf16.mxu0 0
        %4621 = vmatpush2.bf16.msra.mxu0 0
        %4622 = vmatprep.subr.bf16.mxu0 0
        %4623 = vmatpush2.bf16.msra.mxu0 0
        %4624 = vmatprep.subr.bf16.mxu0 0
        %4625 = vmatpush2.bf16.msra.mxu0 0
        %4626 = vmatprep.subr.bf16.mxu0 0
        %4627 = vmatpush2.bf16.msra.mxu0 0
        %4628 = vmatprep.subr.bf16.mxu0 0
        %4629 = vmatpush2.bf16.msra.mxu0 0
        %4630 = vmatprep.subr.bf16.mxu0 0
        %4631 = vmatpush2.bf16.msra.mxu0 0
        %4632 = vmatprep.mubr.bf16.mxu0 0
        %4633 = vmatmul.mubr.bf16.gmra.mxu0 %v4595
        %v4634 = vpop.f32.mrf.mxu0
        %v4635 = vadd.f32 0.0, %v4634
        %v4636 = vpop.f32.mrf.mxu0
        %v4637 = vpop.f32.mrf.mxu0
        %v4638 = vpop.f32.mrf.mxu0
        %4639 = vdwg.mxu0
        %v4641 = vsel %vm2406, %v4501, 0
        %v4644 = vsel %vm2458, %v4265, 0
        %4646 = vmatprep.subr.bf16.mxu0 0
        %4647 = vmatpush1.bf16.msra.mxu0 0
        %4648 = vmatprep.subr.bf16.mxu0 0
        %4649 = vmatpush1.bf16.msra.mxu0 0
        %4650 = vmatprep.subr.bf16.mxu0 0
        %4651 = vmatpush1.bf16.msra.mxu0 0
        %4652 = vmatprep.subr.bf16.mxu0 0
        %4653 = vmatpush1.bf16.msra.mxu0 0
        %4654 = vmatprep.subr.bf16.mxu0 0
        %4655 = vmatpush1.bf16.msra.mxu0 0
        %4656 = vmatprep.subr.bf16.mxu0 0
        %4657 = vmatpush1.bf16.msra.mxu0 0
        %4658 = vmatprep.subr.bf16.mxu0 0
        %4659 = vmatpush1.bf16.msra.mxu0 0
        %4660 = vmatprep.subr.bf16.mxu0 0
        %4661 = vmatpush1.bf16.msra.mxu0 %v4644
        %4662 = vmatprep.subr.bf16.mxu0 0
        %4663 = vmatpush2.bf16.msra.mxu0 0
        %4664 = vmatprep.subr.bf16.mxu0 0
        %4665 = vmatpush2.bf16.msra.mxu0 0
        %4666 = vmatprep.subr.bf16.mxu0 0
        %4667 = vmatpush2.bf16.msra.mxu0 0
        %4668 = vmatprep.subr.bf16.mxu0 0
        %4669 = vmatpush2.bf16.msra.mxu0 0
        %4670 = vmatprep.subr.bf16.mxu0 0
        %4671 = vmatpush2.bf16.msra.mxu0 0
        %4672 = vmatprep.subr.bf16.mxu0 0
        %4673 = vmatpush2.bf16.msra.mxu0 0
        %4674 = vmatprep.subr.bf16.mxu0 0
        %4675 = vmatpush2.bf16.msra.mxu0 0
        %4676 = vmatprep.subr.bf16.mxu0 0
        %4677 = vmatpush2.bf16.msra.mxu0 0
        %4678 = vmatprep.mubr.bf16.mxu0 0
        %4679 = vmatmul.mubr.bf16.gmra.mxu0 %v4641
        %v4680 = vpop.f32.mrf.mxu0
        %v4681 = vadd.f32 0.0, %v4680
        %v4682 = vpop.f32.mrf.mxu0
        %v4683 = vpop.f32.mrf.mxu0
        %v4684 = vpop.f32.mrf.mxu0
        %4685 = vdwg.mxu0
        %v4686 = vpack.c.bf16 %v4543, %v4543
        %v4687 = vpack.c.bf16 %v4589, %v4589
        %v4688 = vpack.c.bf16 %v4635, %v4635
        %v4689 = vpack.c.bf16 %v4681, %v4681
        %v4690 = vld [vmem:[%s15] sm:$0xf]
        %v4691 = vld [vmem:[%s15 + $0x4] sm:$0xf]
        %v4692 = vld [vmem:[%s15 + $0x8] sm:$0xf]
        %v4693 = vld [vmem:[%s15 + $0xc] sm:$0xf]
        %v4694 = vld [vmem:[%s15 + $0x10] sm:$0xf]
        %v4695 = vld [vmem:[%s15 + $0x14] sm:$0xf]
        %v4696 = vld [vmem:[%s15 + $0x18] sm:$0xf]
        %v4697 = vld [vmem:[%s15 + $0x1c] sm:$0xf]
        %v4698 = vld [vmem:[%s15 + $0x20] sm:$0xf]
        %v4699 = vld [vmem:[%s15 + $0x24] sm:$0xf]
        %v4700 = vld [vmem:[%s15 + $0x28] sm:$0xf]
        %v4701 = vld [vmem:[%s15 + $0x2c] sm:$0xf]
        %v4702 = vld [vmem:[%s15 + $0x30] sm:$0xf]
        %v4703 = vld [vmem:[%s15 + $0x34] sm:$0xf]
        %v4704 = vld [vmem:[%s15 + $0x38] sm:$0xf]
        %v4705 = vld [vmem:[%s15 + $0x3c] sm:$0xf]
        %v4710 = vunpack.c.l.b16 %v4690
        %v4711 = vunpack.c.l.b16 %v4691
        %v4712 = vunpack.c.l.b16 %v4692
        %v4713 = vunpack.c.l.b16 %v4693
        %v4714 = vpack.c.b16 %v4711, %v4710
        %v4715 = vpack.c.b16 %v4713, %v4712
        %v4719 = vsel %vm2211, %v4686, 0
        %4721 = vmatprep.subr.bf16.mxu0 0
        %4722 = vmatpush1.bf16.msra.mxu0 0
        %4723 = vmatprep.subr.bf16.mxu0 0
        %4724 = vmatpush1.bf16.msra.mxu0 0
        %4725 = vmatprep.subr.bf16.mxu0 0
        %4726 = vmatpush1.bf16.msra.mxu0 0
        %4727 = vmatprep.subr.bf16.mxu0 0
        %4728 = vmatpush1.bf16.msra.mxu0 0
        %4729 = vmatprep.subr.bf16.mxu0 0
        %4730 = vmatpush1.bf16.msra.mxu0 0
        %4731 = vmatprep.subr.bf16.mxu0 0
        %4732 = vmatpush1.bf16.msra.mxu0 0
        %4733 = vmatprep.subr.bf16.mxu0 0
        %4734 = vmatpush1.bf16.msra.mxu0 %v4715
        %4735 = vmatprep.subr.bf16.mxu0 0
        %4736 = vmatpush1.bf16.msra.mxu0 %v4714
        %4737 = vmatprep.subr.bf16.mxu0 0
        %4738 = vmatpush2.bf16.msra.mxu0 0
        %4739 = vmatprep.subr.bf16.mxu0 0
        %4740 = vmatpush2.bf16.msra.mxu0 0
        %4741 = vmatprep.subr.bf16.mxu0 0
        %4742 = vmatpush2.bf16.msra.mxu0 0
        %4743 = vmatprep.subr.bf16.mxu0 0
        %4744 = vmatpush2.bf16.msra.mxu0 0
        %4745 = vmatprep.subr.bf16.mxu0 0
        %4746 = vmatpush2.bf16.msra.mxu0 0
        %4747 = vmatprep.subr.bf16.mxu0 0
        %4748 = vmatpush2.bf16.msra.mxu0 0
        %4749 = vmatprep.subr.bf16.mxu0 0
        %4750 = vmatpush2.bf16.msra.mxu0 0
        %4751 = vmatprep.subr.bf16.mxu0 0
        %4752 = vmatpush2.bf16.msra.mxu0 0
        %4753 = vmatprep.mubr.bf16.mxu0 0
        %4754 = vmatmul.mubr.bf16.gmra.mxu0 %v4719
        %v4755 = vpop.f32.mrf.mxu0
        %v4756 = vadd.f32 0.0, %v4755
        %v4757 = vpop.f32.mrf.mxu0
        %v4758 = vpop.f32.mrf.mxu0
        %v4759 = vpop.f32.mrf.mxu0
        %4760 = vdwg.mxu0
        %v4765 = vunpack.c.l.b16 %v4694
        %v4766 = vunpack.c.l.b16 %v4695
        %v4767 = vunpack.c.l.b16 %v4696
        %v4768 = vunpack.c.l.b16 %v4697
        %v4769 = vpack.c.b16 %v4766, %v4765
        %v4770 = vpack.c.b16 %v4768, %v4767
        %v4774 = vsel %vm2211, %v4687, 0
        %4776 = vmatprep.subr.bf16.mxu0 0
        %4777 = vmatpush1.bf16.msra.mxu0 0
        %4778 = vmatprep.subr.bf16.mxu0 0
        %4779 = vmatpush1.bf16.msra.mxu0 0
        %4780 = vmatprep.subr.bf16.mxu0 0
        %4781 = vmatpush1.bf16.msra.mxu0 0
        %4782 = vmatprep.subr.bf16.mxu0 0
        %4783 = vmatpush1.bf16.msra.mxu0 0
        %4784 = vmatprep.subr.bf16.mxu0 0
        %4785 = vmatpush1.bf16.msra.mxu0 0
        %4786 = vmatprep.subr.bf16.mxu0 0
        %4787 = vmatpush1.bf16.msra.mxu0 0
        %4788 = vmatprep.subr.bf16.mxu0 0
        %4789 = vmatpush1.bf16.msra.mxu0 %v4770
        %4790 = vmatprep.subr.bf16.mxu0 0
        %4791 = vmatpush1.bf16.msra.mxu0 %v4769
        %4792 = vmatprep.subr.bf16.mxu0 0
        %4793 = vmatpush2.bf16.msra.mxu0 0
        %4794 = vmatprep.subr.bf16.mxu0 0
        %4795 = vmatpush2.bf16.msra.mxu0 0
        %4796 = vmatprep.subr.bf16.mxu0 0
        %4797 = vmatpush2.bf16.msra.mxu0 0
        %4798 = vmatprep.subr.bf16.mxu0 0
        %4799 = vmatpush2.bf16.msra.mxu0 0
        %4800 = vmatprep.subr.bf16.mxu0 0
        %4801 = vmatpush2.bf16.msra.mxu0 0
        %4802 = vmatprep.subr.bf16.mxu0 0
        %4803 = vmatpush2.bf16.msra.mxu0 0
        %4804 = vmatprep.subr.bf16.mxu0 0
        %4805 = vmatpush2.bf16.msra.mxu0 0
        %4806 = vmatprep.subr.bf16.mxu0 0
        %4807 = vmatpush2.bf16.msra.mxu0 0
        %4808 = vmatprep.mubr.bf16.mxu0 0
        %4809 = vmatmul.mubr.bf16.gmra.mxu0 %v4774
        %v4810 = vpop.f32.mrf.mxu0
        %v4811 = vadd.f32 0.0, %v4810
        %v4812 = vpop.f32.mrf.mxu0
        %v4813 = vpop.f32.mrf.mxu0
        %v4814 = vpop.f32.mrf.mxu0
        %4815 = vdwg.mxu0
        %v4820 = vunpack.c.l.b16 %v4698
        %v4821 = vunpack.c.l.b16 %v4699
        %v4822 = vunpack.c.l.b16 %v4700
        %v4823 = vunpack.c.l.b16 %v4701
        %v4824 = vpack.c.b16 %v4821, %v4820
        %v4825 = vpack.c.b16 %v4823, %v4822
        %v4829 = vsel %vm2211, %v4688, 0
        %4831 = vmatprep.subr.bf16.mxu0 0
        %4832 = vmatpush1.bf16.msra.mxu0 0
        %4833 = vmatprep.subr.bf16.mxu0 0
        %4834 = vmatpush1.bf16.msra.mxu0 0
        %4835 = vmatprep.subr.bf16.mxu0 0
        %4836 = vmatpush1.bf16.msra.mxu0 0
        %4837 = vmatprep.subr.bf16.mxu0 0
        %4838 = vmatpush1.bf16.msra.mxu0 0
        %4839 = vmatprep.subr.bf16.mxu0 0
        %4840 = vmatpush1.bf16.msra.mxu0 0
        %4841 = vmatprep.subr.bf16.mxu0 0
        %4842 = vmatpush1.bf16.msra.mxu0 0
        %4843 = vmatprep.subr.bf16.mxu0 0
        %4844 = vmatpush1.bf16.msra.mxu0 %v4825
        %4845 = vmatprep.subr.bf16.mxu0 0
        %4846 = vmatpush1.bf16.msra.mxu0 %v4824
        %4847 = vmatprep.subr.bf16.mxu0 0
        %4848 = vmatpush2.bf16.msra.mxu0 0
        %4849 = vmatprep.subr.bf16.mxu0 0
        %4850 = vmatpush2.bf16.msra.mxu0 0
        %4851 = vmatprep.subr.bf16.mxu0 0
        %4852 = vmatpush2.bf16.msra.mxu0 0
        %4853 = vmatprep.subr.bf16.mxu0 0
        %4854 = vmatpush2.bf16.msra.mxu0 0
        %4855 = vmatprep.subr.bf16.mxu0 0
        %4856 = vmatpush2.bf16.msra.mxu0 0
        %4857 = vmatprep.subr.bf16.mxu0 0
        %4858 = vmatpush2.bf16.msra.mxu0 0
        %4859 = vmatprep.subr.bf16.mxu0 0
        %4860 = vmatpush2.bf16.msra.mxu0 0
        %4861 = vmatprep.subr.bf16.mxu0 0
        %4862 = vmatpush2.bf16.msra.mxu0 0
        %4863 = vmatprep.mubr.bf16.mxu0 0
        %4864 = vmatmul.mubr.bf16.gmra.mxu0 %v4829
        %v4865 = vpop.f32.mrf.mxu0
        %v4866 = vadd.f32 0.0, %v4865
        %v4867 = vpop.f32.mrf.mxu0
        %v4868 = vpop.f32.mrf.mxu0
        %v4869 = vpop.f32.mrf.mxu0
        %4870 = vdwg.mxu0
        %v4875 = vunpack.c.l.b16 %v4702
        %v4876 = vunpack.c.l.b16 %v4703
        %v4877 = vunpack.c.l.b16 %v4704
        %v4878 = vunpack.c.l.b16 %v4705
        %v4879 = vpack.c.b16 %v4876, %v4875
        %v4880 = vpack.c.b16 %v4878, %v4877
        %v4884 = vsel %vm2211, %v4689, 0
        %4886 = vmatprep.subr.bf16.mxu0 0
        %4887 = vmatpush1.bf16.msra.mxu0 0
        %4888 = vmatprep.subr.bf16.mxu0 0
        %4889 = vmatpush1.bf16.msra.mxu0 0
        %4890 = vmatprep.subr.bf16.mxu0 0
        %4891 = vmatpush1.bf16.msra.mxu0 0
        %4892 = vmatprep.subr.bf16.mxu0 0
        %4893 = vmatpush1.bf16.msra.mxu0 0
        %4894 = vmatprep.subr.bf16.mxu0 0
        %4895 = vmatpush1.bf16.msra.mxu0 0
        %4896 = vmatprep.subr.bf16.mxu0 0
        %4897 = vmatpush1.bf16.msra.mxu0 0
        %4898 = vmatprep.subr.bf16.mxu0 0
        %4899 = vmatpush1.bf16.msra.mxu0 %v4880
        %4900 = vmatprep.subr.bf16.mxu0 0
        %4901 = vmatpush1.bf16.msra.mxu0 %v4879
        %4902 = vmatprep.subr.bf16.mxu0 0
        %4903 = vmatpush2.bf16.msra.mxu0 0
        %4904 = vmatprep.subr.bf16.mxu0 0
        %4905 = vmatpush2.bf16.msra.mxu0 0
        %4906 = vmatprep.subr.bf16.mxu0 0
        %4907 = vmatpush2.bf16.msra.mxu0 0
        %4908 = vmatprep.subr.bf16.mxu0 0
        %4909 = vmatpush2.bf16.msra.mxu0 0
        %4910 = vmatprep.subr.bf16.mxu0 0
        %4911 = vmatpush2.bf16.msra.mxu0 0
        %4912 = vmatprep.subr.bf16.mxu0 0
        %4913 = vmatpush2.bf16.msra.mxu0 0
        %4914 = vmatprep.subr.bf16.mxu0 0
        %4915 = vmatpush2.bf16.msra.mxu0 0
        %4916 = vmatprep.subr.bf16.mxu0 0
        %4917 = vmatpush2.bf16.msra.mxu0 0
        %4918 = vmatprep.mubr.bf16.mxu0 0
        %4919 = vmatmul.mubr.bf16.gmra.mxu0 %v4884
        %v4920 = vpop.f32.mrf.mxu0
        %v4921 = vadd.f32 0.0, %v4920
        %v4922 = vpop.f32.mrf.mxu0
        %v4923 = vpop.f32.mrf.mxu0
        %v4924 = vpop.f32.mrf.mxu0
        %4925 = vdwg.mxu0
        %v4926 = vadd.f32 %v4756, %v4811
        %v4927 = vadd.f32 %v4926, %v4866
        %v4928 = vadd.f32 %v4927, %v4921
        %v4929 = vld [vmem:[%s19] sm:$0x1]
        %v4931 = vlaneseq
        %v4932 = vshrl.u32 %v4931, 7
        %v4933 = vsub.s32 0, %v4932
        %v4934 = vrot.slane %v4929, %v4933
        %v4936 = vadd.f32 %v4928, %v4934
        %v4937 = vadd.f32 %v2919, %v4936
        %v4938 = vld [vmem:[%s20] sm:$0x1]
        %v4939 = vld [vmem:[%s21] sm:$0x1]
        %4940 = vadd.xlane.f32.xlu0 %v4937
        %v4941 = vpop.xlane.xlu0 %4940
        %v4942 = vmul.f32 %v4941, %v2896
        %v4943 = vsub.f32 %v4937, %v4942
        %v4944 = vmul.f32 %v4943, %v4943
        %4945 = vadd.xlane.f32.xlu0 %v4944
        %v4946 = vpop.xlane.xlu0 %4945
        %v4947 = vmul.f32 %v4946, %v2896
        %v4948 = vadd.f32 %v4947, 1e-05
        %v4949 = vrsqrt.pop %v4948
        %v4950 = vmul.f32 %v4943, %v4949
        %v4952 = vlaneseq
        %v4953 = vshrl.u32 %v4952, 7
        %v4954 = vsub.s32 0, %v4953
        %v4955 = vrot.slane %v4938, %v4954
        %v4957 = vmul.f32 %v4950, %v4955
        %v4959 = vlaneseq
        %v4960 = vshrl.u32 %v4959, 7
        %v4961 = vsub.s32 0, %v4960
        %v4962 = vrot.slane %v4939, %v4961
        %v4964 = vadd.f32 %v4957, %v4962
        %v4965 = vpack.c.bf16 %v4964, %v4964
        %v4966 = vld [vmem:[%s22] sm:$0xff]
        %v4967 = vld [vmem:[%s22 + $0x8] sm:$0xff]
        %v4968 = vld [vmem:[%s22 + $0x10] sm:$0xff]
        %v4969 = vld [vmem:[%s22 + $0x18] sm:$0xff]
        %v4970 = vld [vmem:[%s22 + $0x20] sm:$0xff]
        %v4971 = vld [vmem:[%s22 + $0x28] sm:$0xff]
        %v4972 = vld [vmem:[%s22 + $0x30] sm:$0xff]
        %v4973 = vld [vmem:[%s22 + $0x38] sm:$0xff]
        %v4974 = vld [vmem:[%s22 + $0x40] sm:$0xff]
        %v4975 = vld [vmem:[%s22 + $0x48] sm:$0xff]
        %v4976 = vld [vmem:[%s22 + $0x50] sm:$0xff]
        %v4977 = vld [vmem:[%s22 + $0x58] sm:$0xff]
        %v4978 = vld [vmem:[%s22 + $0x60] sm:$0xff]
        %v4979 = vld [vmem:[%s22 + $0x68] sm:$0xff]
        %v4980 = vld [vmem:[%s22 + $0x70] sm:$0xff]
        %v4981 = vld [vmem:[%s22 + $0x78] sm:$0xff]
        %v4982 = vld [vmem:[%s22 + $0x80] sm:$0xff]
        %v4983 = vld [vmem:[%s22 + $0x88] sm:$0xff]
        %v4984 = vld [vmem:[%s22 + $0x90] sm:$0xff]
        %v4985 = vld [vmem:[%s22 + $0x98] sm:$0xff]
        %v4986 = vld [vmem:[%s22 + $0xa0] sm:$0xff]
        %v4987 = vld [vmem:[%s22 + $0xa8] sm:$0xff]
        %v4988 = vld [vmem:[%s22 + $0xb0] sm:$0xff]
        %v4989 = vld [vmem:[%s22 + $0xb8] sm:$0xff]
        %v4990 = vld [vmem:[%s22 + $0xc0] sm:$0xff]
        %v4991 = vld [vmem:[%s22 + $0xc8] sm:$0xff]
        %v4992 = vld [vmem:[%s22 + $0xd0] sm:$0xff]
        %v4993 = vld [vmem:[%s22 + $0xd8] sm:$0xff]
        %v4994 = vld [vmem:[%s22 + $0xe0] sm:$0xff]
        %v4995 = vld [vmem:[%s22 + $0xe8] sm:$0xff]
        %v4996 = vld [vmem:[%s22 + $0xf0] sm:$0xff]
        %v4997 = vld [vmem:[%s22 + $0xf8] sm:$0xff]
        %v4998 = vld [vmem:[%s23] sm:$0xf]
        %v5000 = vlaneseq
        %v5001 = vshrl.u32 %v5000, 7
        %v5002 = vsub.s32 0, %v5001
        %v5003 = vrot.slane %v4998, %v5002
        %v5004 = vlaneseq
        %v5005 = vshrl.u32 %v5004, 7
        %v5006 = vsub.s32 1, %v5005
        %v5007 = vrot.slane %v4998, %v5006
        %v5008 = vlaneseq
        %v5009 = vshrl.u32 %v5008, 7
        %v5010 = vsub.s32 2, %v5009
        %v5011 = vrot.slane %v4998, %v5010
        %v5012 = vlaneseq
        %v5013 = vshrl.u32 %v5012, 7
        %v5014 = vsub.s32 3, %v5013
        %v5015 = vrot.slane %v4998, %v5014
        %v5052 = vunpack.c.l.b16 %v4966
        %v5053 = vunpack.c.h.b16 %v4966
        %v5054 = vunpack.c.l.b16 %v4967
        %v5055 = vunpack.c.h.b16 %v4967
        %v5056 = vunpack.c.l.b16 %v4968
        %v5057 = vunpack.c.h.b16 %v4968
        %v5058 = vunpack.c.l.b16 %v4969
        %v5059 = vunpack.c.h.b16 %v4969
        %v5060 = vunpack.c.l.b16 %v4970
        %v5061 = vunpack.c.h.b16 %v4970
        %v5062 = vunpack.c.l.b16 %v4971
        %v5063 = vunpack.c.h.b16 %v4971
        %v5064 = vunpack.c.l.b16 %v4972
        %v5065 = vunpack.c.h.b16 %v4972
        %v5066 = vunpack.c.l.b16 %v4973
        %v5067 = vunpack.c.h.b16 %v4973
        %v5068 = vunpack.c.l.b16 %v4974
        %v5069 = vunpack.c.h.b16 %v4974
        %v5070 = vunpack.c.l.b16 %v4975
        %v5071 = vunpack.c.h.b16 %v4975
        %v5072 = vunpack.c.l.b16 %v4976
        %v5073 = vunpack.c.h.b16 %v4976
        %v5074 = vunpack.c.l.b16 %v4977
        %v5075 = vunpack.c.h.b16 %v4977
        %v5076 = vunpack.c.l.b16 %v4978
        %v5077 = vunpack.c.h.b16 %v4978
        %v5078 = vunpack.c.l.b16 %v4979
        %v5079 = vunpack.c.h.b16 %v4979
        %v5080 = vunpack.c.l.b16 %v4980
        %v5081 = vunpack.c.h.b16 %v4980
        %v5082 = vunpack.c.l.b16 %v4981
        %v5083 = vunpack.c.h.b16 %v4981
        %v5084 = vunpack.c.l.b16 %v4982
        %v5085 = vunpack.c.h.b16 %v4982
        %v5086 = vunpack.c.l.b16 %v4983
        %v5087 = vunpack.c.h.b16 %v4983
        %v5088 = vunpack.c.l.b16 %v4984
        %v5089 = vunpack.c.h.b16 %v4984
        %v5090 = vunpack.c.l.b16 %v4985
        %v5091 = vunpack.c.h.b16 %v4985
        %v5092 = vunpack.c.l.b16 %v4986
        %v5093 = vunpack.c.h.b16 %v4986
        %v5094 = vunpack.c.l.b16 %v4987
        %v5095 = vunpack.c.h.b16 %v4987
        %v5096 = vunpack.c.l.b16 %v4988
        %v5097 = vunpack.c.h.b16 %v4988
        %v5098 = vunpack.c.l.b16 %v4989
        %v5099 = vunpack.c.h.b16 %v4989
        %v5100 = vunpack.c.l.b16 %v4990
        %v5101 = vunpack.c.h.b16 %v4990
        %v5102 = vunpack.c.l.b16 %v4991
        %v5103 = vunpack.c.h.b16 %v4991
        %v5104 = vunpack.c.l.b16 %v4992
        %v5105 = vunpack.c.h.b16 %v4992
        %v5106 = vunpack.c.l.b16 %v4993
        %v5107 = vunpack.c.h.b16 %v4993
        %v5108 = vunpack.c.l.b16 %v4994
        %v5109 = vunpack.c.h.b16 %v4994
        %v5110 = vunpack.c.l.b16 %v4995
        %v5111 = vunpack.c.h.b16 %v4995
        %v5112 = vunpack.c.l.b16 %v4996
        %v5113 = vunpack.c.h.b16 %v4996
        %v5114 = vunpack.c.l.b16 %v4997
        %v5115 = vunpack.c.h.b16 %v4997
        %v5116 = vpack.c.b16 %v5056, %v5052
        %v5117 = vpack.c.b16 %v5057, %v5053
        %v5118 = vpack.c.b16 %v5058, %v5054
        %v5119 = vpack.c.b16 %v5059, %v5055
        %v5120 = vpack.c.b16 %v5064, %v5060
        %v5121 = vpack.c.b16 %v5065, %v5061
        %v5122 = vpack.c.b16 %v5066, %v5062
        %v5123 = vpack.c.b16 %v5067, %v5063
        %v5124 = vpack.c.b16 %v5072, %v5068
        %v5125 = vpack.c.b16 %v5073, %v5069
        %v5126 = vpack.c.b16 %v5074, %v5070
        %v5127 = vpack.c.b16 %v5075, %v5071
        %v5128 = vpack.c.b16 %v5080, %v5076
        %v5129 = vpack.c.b16 %v5081, %v5077
        %v5130 = vpack.c.b16 %v5082, %v5078
        %v5131 = vpack.c.b16 %v5083, %v5079
        %v5132 = vpack.c.b16 %v5088, %v5084
        %v5133 = vpack.c.b16 %v5089, %v5085
        %v5134 = vpack.c.b16 %v5090, %v5086
        %v5135 = vpack.c.b16 %v5091, %v5087
        %v5136 = vpack.c.b16 %v5096, %v5092
        %v5137 = vpack.c.b16 %v5097, %v5093
        %v5138 = vpack.c.b16 %v5098, %v5094
        %v5139 = vpack.c.b16 %v5099, %v5095
        %v5140 = vpack.c.b16 %v5104, %v5100
        %v5141 = vpack.c.b16 %v5105, %v5101
        %v5142 = vpack.c.b16 %v5106, %v5102
        %v5143 = vpack.c.b16 %v5107, %v5103
        %v5144 = vpack.c.b16 %v5112, %v5108
        %v5145 = vpack.c.b16 %v5113, %v5109
        %v5146 = vpack.c.b16 %v5114, %v5110
        %v5147 = vpack.c.b16 %v5115, %v5111
        %5180 = vmatprep.subr.bf16.mxu0 %v5145
        %5181 = vmatpush1.bf16.msra.mxu0 %v5144
        %5182 = vmatprep.subr.bf16.mxu0 %v5141
        %5183 = vmatpush1.bf16.msra.mxu0 %v5140
        %5184 = vmatprep.subr.bf16.mxu0 %v5137
        %5185 = vmatpush1.bf16.msra.mxu0 %v5136
        %5186 = vmatprep.subr.bf16.mxu0 %v5133
        %5187 = vmatpush1.bf16.msra.mxu0 %v5132
        %5188 = vmatprep.subr.bf16.mxu0 %v5129
        %5189 = vmatpush1.bf16.msra.mxu0 %v5128
        %5190 = vmatprep.subr.bf16.mxu0 %v5125
        %5191 = vmatpush1.bf16.msra.mxu0 %v5124
        %5192 = vmatprep.subr.bf16.mxu0 %v5121
        %5193 = vmatpush1.bf16.msra.mxu0 %v5120
        %5194 = vmatprep.subr.bf16.mxu0 %v5117
        %5195 = vmatpush1.bf16.msra.mxu0 %v5116
        %5196 = vmatprep.subr.bf16.mxu0 0
        %5197 = vmatpush2.bf16.msra.mxu0 0
        %5198 = vmatprep.subr.bf16.mxu0 0
        %5199 = vmatpush2.bf16.msra.mxu0 0
        %5200 = vmatprep.subr.bf16.mxu0 0
        %5201 = vmatpush2.bf16.msra.mxu0 0
        %5202 = vmatprep.subr.bf16.mxu0 0
        %5203 = vmatpush2.bf16.msra.mxu0 0
        %5204 = vmatprep.subr.bf16.mxu0 0
        %5205 = vmatpush2.bf16.msra.mxu0 0
        %5206 = vmatprep.subr.bf16.mxu0 0
        %5207 = vmatpush2.bf16.msra.mxu0 0
        %5208 = vmatprep.subr.bf16.mxu0 0
        %5209 = vmatpush2.bf16.msra.mxu0 0
        %5210 = vmatprep.subr.bf16.mxu0 0
        %5211 = vmatpush2.bf16.msra.mxu0 0
        %5212 = vmatprep.mubr.bf16.mxu0 0
        %5213 = vmatmul.mubr.bf16.gmra.mxu0 %v4965
        %v5214 = vpop.f32.mrf.mxu0
        %v5215 = vadd.f32 %v5003, %v5214
        %v5216 = vpop.f32.mrf.mxu0
        %v5217 = vadd.f32 %v5007, %v5216
        %v5218 = vpop.f32.mrf.mxu0
        %v5219 = vpop.f32.mrf.mxu0
        %5220 = vdwg.mxu0
        %5221 = vmatprep.subr.bf16.mxu0 %v5147
        %5222 = vmatpush1.bf16.msra.mxu0 %v5146
        %5223 = vmatprep.subr.bf16.mxu0 %v5143
        %5224 = vmatpush1.bf16.msra.mxu0 %v5142
        %5225 = vmatprep.subr.bf16.mxu0 %v5139
        %5226 = vmatpush1.bf16.msra.mxu0 %v5138
        %5227 = vmatprep.subr.bf16.mxu0 %v5135
        %5228 = vmatpush1.bf16.msra.mxu0 %v5134
        %5229 = vmatprep.subr.bf16.mxu0 %v5131
        %5230 = vmatpush1.bf16.msra.mxu0 %v5130
        %5231 = vmatprep.subr.bf16.mxu0 %v5127
        %5232 = vmatpush1.bf16.msra.mxu0 %v5126
        %5233 = vmatprep.subr.bf16.mxu0 %v5123
        %5234 = vmatpush1.bf16.msra.mxu0 %v5122
        %5235 = vmatprep.subr.bf16.mxu0 %v5119
        %5236 = vmatpush1.bf16.msra.mxu0 %v5118
        %5237 = vmatprep.subr.bf16.mxu0 0
        %5238 = vmatpush2.bf16.msra.mxu0 0
        %5239 = vmatprep.subr.bf16.mxu0 0
        %5240 = vmatpush2.bf16.msra.mxu0 0
        %5241 = vmatprep.subr.bf16.mxu0 0
        %5242 = vmatpush2.bf16.msra.mxu0 0
        %5243 = vmatprep.subr.bf16.mxu0 0
        %5244 = vmatpush2.bf16.msra.mxu0 0
        %5245 = vmatprep.subr.bf16.mxu0 0
        %5246 = vmatpush2.bf16.msra.mxu0 0
        %5247 = vmatprep.subr.bf16.mxu0 0
        %5248 = vmatpush2.bf16.msra.mxu0 0
        %5249 = vmatprep.subr.bf16.mxu0 0
        %5250 = vmatpush2.bf16.msra.mxu0 0
        %5251 = vmatprep.subr.bf16.mxu0 0
        %5252 = vmatpush2.bf16.msra.mxu0 0
        %5253 = vmatprep.mubr.bf16.mxu0 0
        %5254 = vmatmul.mubr.bf16.gmra.mxu0 %v4965
        %v5255 = vpop.f32.mrf.mxu0
        %v5256 = vadd.f32 %v5011, %v5255
        %v5257 = vpop.f32.mrf.mxu0
        %v5258 = vadd.f32 %v5015, %v5257
        %v5259 = vpop.f32.mrf.mxu0
        %v5260 = vpop.f32.mrf.mxu0
        %5261 = vdwg.mxu0
        %v5262 = vmax.f32 %v5215, 0.0
        %v5263 = vmax.f32 %v5217, 0.0
        %v5264 = vmax.f32 %v5256, 0.0
        %v5265 = vmax.f32 %v5258, 0.0
        %v5266 = vpack.c.bf16 %v5262, %v5262
        %v5267 = vpack.c.bf16 %v5263, %v5263
        %v5268 = vpack.c.bf16 %v5264, %v5264
        %v5269 = vpack.c.bf16 %v5265, %v5265
        %v5270 = vld [vmem:[%s24] sm:$0xf]
        %v5271 = vld [vmem:[%s24 + $0x4] sm:$0xf]
        %v5272 = vld [vmem:[%s24 + $0x8] sm:$0xf]
        %v5273 = vld [vmem:[%s24 + $0xc] sm:$0xf]
        %v5274 = vld [vmem:[%s24 + $0x10] sm:$0xf]
        %v5275 = vld [vmem:[%s24 + $0x14] sm:$0xf]
        %v5276 = vld [vmem:[%s24 + $0x18] sm:$0xf]
        %v5277 = vld [vmem:[%s24 + $0x1c] sm:$0xf]
        %v5278 = vld [vmem:[%s24 + $0x20] sm:$0xf]
        %v5279 = vld [vmem:[%s24 + $0x24] sm:$0xf]
        %v5280 = vld [vmem:[%s24 + $0x28] sm:$0xf]
        %v5281 = vld [vmem:[%s24 + $0x2c] sm:$0xf]
        %v5282 = vld [vmem:[%s24 + $0x30] sm:$0xf]
        %v5283 = vld [vmem:[%s24 + $0x34] sm:$0xf]
        %v5284 = vld [vmem:[%s24 + $0x38] sm:$0xf]
        %v5285 = vld [vmem:[%s24 + $0x3c] sm:$0xf]
        %v5286 = vld [vmem:[%s24 + $0x40] sm:$0xf]
        %v5287 = vld [vmem:[%s24 + $0x44] sm:$0xf]
        %v5288 = vld [vmem:[%s24 + $0x48] sm:$0xf]
        %v5289 = vld [vmem:[%s24 + $0x4c] sm:$0xf]
        %v5290 = vld [vmem:[%s24 + $0x50] sm:$0xf]
        %v5291 = vld [vmem:[%s24 + $0x54] sm:$0xf]
        %v5292 = vld [vmem:[%s24 + $0x58] sm:$0xf]
        %v5293 = vld [vmem:[%s24 + $0x5c] sm:$0xf]
        %v5294 = vld [vmem:[%s24 + $0x60] sm:$0xf]
        %v5295 = vld [vmem:[%s24 + $0x64] sm:$0xf]
        %v5296 = vld [vmem:[%s24 + $0x68] sm:$0xf]
        %v5297 = vld [vmem:[%s24 + $0x6c] sm:$0xf]
        %v5298 = vld [vmem:[%s24 + $0x70] sm:$0xf]
        %v5299 = vld [vmem:[%s24 + $0x74] sm:$0xf]
        %v5300 = vld [vmem:[%s24 + $0x78] sm:$0xf]
        %v5301 = vld [vmem:[%s24 + $0x7c] sm:$0xf]
        %v5302 = vld [vmem:[%s24 + $0x80] sm:$0xf]
        %v5303 = vld [vmem:[%s24 + $0x84] sm:$0xf]
        %v5304 = vld [vmem:[%s24 + $0x88] sm:$0xf]
        %v5305 = vld [vmem:[%s24 + $0x8c] sm:$0xf]
        %v5306 = vld [vmem:[%s24 + $0x90] sm:$0xf]
        %v5307 = vld [vmem:[%s24 + $0x94] sm:$0xf]
        %v5308 = vld [vmem:[%s24 + $0x98] sm:$0xf]
        %v5309 = vld [vmem:[%s24 + $0x9c] sm:$0xf]
        %v5310 = vld [vmem:[%s24 + $0xa0] sm:$0xf]
        %v5311 = vld [vmem:[%s24 + $0xa4] sm:$0xf]
        %v5312 = vld [vmem:[%s24 + $0xa8] sm:$0xf]
        %v5313 = vld [vmem:[%s24 + $0xac] sm:$0xf]
        %v5314 = vld [vmem:[%s24 + $0xb0] sm:$0xf]
        %v5315 = vld [vmem:[%s24 + $0xb4] sm:$0xf]
        %v5316 = vld [vmem:[%s24 + $0xb8] sm:$0xf]
        %v5317 = vld [vmem:[%s24 + $0xbc] sm:$0xf]
        %v5318 = vld [vmem:[%s24 + $0xc0] sm:$0xf]
        %v5319 = vld [vmem:[%s24 + $0xc4] sm:$0xf]
        %v5320 = vld [vmem:[%s24 + $0xc8] sm:$0xf]
        %v5321 = vld [vmem:[%s24 + $0xcc] sm:$0xf]
        %v5322 = vld [vmem:[%s24 + $0xd0] sm:$0xf]
        %v5323 = vld [vmem:[%s24 + $0xd4] sm:$0xf]
        %v5324 = vld [vmem:[%s24 + $0xd8] sm:$0xf]
        %v5325 = vld [vmem:[%s24 + $0xdc] sm:$0xf]
        %v5326 = vld [vmem:[%s24 + $0xe0] sm:$0xf]
        %v5327 = vld [vmem:[%s24 + $0xe4] sm:$0xf]
        %v5328 = vld [vmem:[%s24 + $0xe8] sm:$0xf]
        %v5329 = vld [vmem:[%s24 + $0xec] sm:$0xf]
        %v5330 = vld [vmem:[%s24 + $0xf0] sm:$0xf]
        %v5331 = vld [vmem:[%s24 + $0xf4] sm:$0xf]
        %v5332 = vld [vmem:[%s24 + $0xf8] sm:$0xf]
        %v5333 = vld [vmem:[%s24 + $0xfc] sm:$0xf]
        %v5334 = vld [vmem:[%s25] sm:$0x1]
        %v5336 = vlaneseq
        %v5337 = vshrl.u32 %v5336, 7
        %v5338 = vsub.s32 0, %v5337
        %v5339 = vrot.slane %v5334, %v5338
        %v5405 = vunpack.c.l.b16 %v5270
        %v5406 = vunpack.c.l.b16 %v5271
        %v5407 = vunpack.c.l.b16 %v5272
        %v5408 = vunpack.c.l.b16 %v5273
        %v5409 = vunpack.c.l.b16 %v5274
        %v5410 = vunpack.c.l.b16 %v5275
        %v5411 = vunpack.c.l.b16 %v5276
        %v5412 = vunpack.c.l.b16 %v5277
        %v5413 = vunpack.c.l.b16 %v5278
        %v5414 = vunpack.c.l.b16 %v5279
        %v5415 = vunpack.c.l.b16 %v5280
        %v5416 = vunpack.c.l.b16 %v5281
        %v5417 = vunpack.c.l.b16 %v5282
        %v5418 = vunpack.c.l.b16 %v5283
        %v5419 = vunpack.c.l.b16 %v5284
        %v5420 = vunpack.c.l.b16 %v5285
        %v5421 = vunpack.c.l.b16 %v5286
        %v5422 = vunpack.c.l.b16 %v5287
        %v5423 = vunpack.c.l.b16 %v5288
        %v5424 = vunpack.c.l.b16 %v5289
        %v5425 = vunpack.c.l.b16 %v5290
        %v5426 = vunpack.c.l.b16 %v5291
        %v5427 = vunpack.c.l.b16 %v5292
        %v5428 = vunpack.c.l.b16 %v5293
        %v5429 = vunpack.c.l.b16 %v5294
        %v5430 = vunpack.c.l.b16 %v5295
        %v5431 = vunpack.c.l.b16 %v5296
        %v5432 = vunpack.c.l.b16 %v5297
        %v5433 = vunpack.c.l.b16 %v5298
        %v5434 = vunpack.c.l.b16 %v5299
        %v5435 = vunpack.c.l.b16 %v5300
        %v5436 = vunpack.c.l.b16 %v5301
        %v5437 = vunpack.c.l.b16 %v5302
        %v5438 = vunpack.c.l.b16 %v5303
        %v5439 = vunpack.c.l.b16 %v5304
        %v5440 = vunpack.c.l.b16 %v5305
        %v5441 = vunpack.c.l.b16 %v5306
        %v5442 = vunpack.c.l.b16 %v5307
        %v5443 = vunpack.c.l.b16 %v5308
        %v5444 = vunpack.c.l.b16 %v5309
        %v5445 = vunpack.c.l.b16 %v5310
        %v5446 = vunpack.c.l.b16 %v5311
        %v5447 = vunpack.c.l.b16 %v5312
        %v5448 = vunpack.c.l.b16 %v5313
        %v5449 = vunpack.c.l.b16 %v5314
        %v5450 = vunpack.c.l.b16 %v5315
        %v5451 = vunpack.c.l.b16 %v5316
        %v5452 = vunpack.c.l.b16 %v5317
        %v5453 = vunpack.c.l.b16 %v5318
        %v5454 = vunpack.c.l.b16 %v5319
        %v5455 = vunpack.c.l.b16 %v5320
        %v5456 = vunpack.c.l.b16 %v5321
        %v5457 = vunpack.c.l.b16 %v5322
        %v5458 = vunpack.c.l.b16 %v5323
        %v5459 = vunpack.c.l.b16 %v5324
        %v5460 = vunpack.c.l.b16 %v5325
        %v5461 = vunpack.c.l.b16 %v5326
        %v5462 = vunpack.c.l.b16 %v5327
        %v5463 = vunpack.c.l.b16 %v5328
        %v5464 = vunpack.c.l.b16 %v5329
        %v5465 = vunpack.c.l.b16 %v5330
        %v5466 = vunpack.c.l.b16 %v5331
        %v5467 = vunpack.c.l.b16 %v5332
        %v5468 = vunpack.c.l.b16 %v5333
        %v5469 = vpack.c.b16 %v5406, %v5405
        %v5470 = vpack.c.b16 %v5408, %v5407
        %v5471 = vpack.c.b16 %v5410, %v5409
        %v5472 = vpack.c.b16 %v5412, %v5411
        %v5473 = vpack.c.b16 %v5414, %v5413
        %v5474 = vpack.c.b16 %v5416, %v5415
        %v5475 = vpack.c.b16 %v5418, %v5417
        %v5476 = vpack.c.b16 %v5420, %v5419
        %v5477 = vpack.c.b16 %v5422, %v5421
        %v5478 = vpack.c.b16 %v5424, %v5423
        %v5479 = vpack.c.b16 %v5426, %v5425
        %v5480 = vpack.c.b16 %v5428, %v5427
        %v5481 = vpack.c.b16 %v5430, %v5429
        %v5482 = vpack.c.b16 %v5432, %v5431
        %v5483 = vpack.c.b16 %v5434, %v5433
        %v5484 = vpack.c.b16 %v5436, %v5435
        %v5485 = vpack.c.b16 %v5438, %v5437
        %v5486 = vpack.c.b16 %v5440, %v5439
        %v5487 = vpack.c.b16 %v5442, %v5441
        %v5488 = vpack.c.b16 %v5444, %v5443
        %v5489 = vpack.c.b16 %v5446, %v5445
        %v5490 = vpack.c.b16 %v5448, %v5447
        %v5491 = vpack.c.b16 %v5450, %v5449
        %v5492 = vpack.c.b16 %v5452, %v5451
        %v5493 = vpack.c.b16 %v5454, %v5453
        %v5494 = vpack.c.b16 %v5456, %v5455
        %v5495 = vpack.c.b16 %v5458, %v5457
        %v5496 = vpack.c.b16 %v5460, %v5459
        %v5497 = vpack.c.b16 %v5462, %v5461
        %v5498 = vpack.c.b16 %v5464, %v5463
        %v5499 = vpack.c.b16 %v5466, %v5465
        %v5500 = vpack.c.b16 %v5468, %v5467
        %5533 = vmatprep.subr.bf16.mxu0 0
        %5534 = vmatpush1.bf16.msra.mxu0 %v5476
        %5535 = vmatprep.subr.bf16.mxu0 0
        %5536 = vmatpush1.bf16.msra.mxu0 %v5475
        %5537 = vmatprep.subr.bf16.mxu0 0
        %5538 = vmatpush1.bf16.msra.mxu0 %v5474
        %5539 = vmatprep.subr.bf16.mxu0 0
        %5540 = vmatpush1.bf16.msra.mxu0 %v5473
        %5541 = vmatprep.subr.bf16.mxu0 0
        %5542 = vmatpush1.bf16.msra.mxu0 %v5472
        %5543 = vmatprep.subr.bf16.mxu0 0
        %5544 = vmatpush1.bf16.msra.mxu0 %v5471
        %5545 = vmatprep.subr.bf16.mxu0 0
        %5546 = vmatpush1.bf16.msra.mxu0 %v5470
        %5547 = vmatprep.subr.bf16.mxu0 0
        %5548 = vmatpush1.bf16.msra.mxu0 %v5469
        %5549 = vmatprep.subr.bf16.mxu0 0
        %5550 = vmatpush2.bf16.msra.mxu0 %v5484
        %5551 = vmatprep.subr.bf16.mxu0 0
        %5552 = vmatpush2.bf16.msra.mxu0 %v5483
        %5553 = vmatprep.subr.bf16.mxu0 0
        %5554 = vmatpush2.bf16.msra.mxu0 %v5482
        %5555 = vmatprep.subr.bf16.mxu0 0
        %5556 = vmatpush2.bf16.msra.mxu0 %v5481
        %5557 = vmatprep.subr.bf16.mxu0 0
        %5558 = vmatpush2.bf16.msra.mxu0 %v5480
        %5559 = vmatprep.subr.bf16.mxu0 0
        %5560 = vmatpush2.bf16.msra.mxu0 %v5479
        %5561 = vmatprep.subr.bf16.mxu0 0
        %5562 = vmatpush2.bf16.msra.mxu0 %v5478
        %5563 = vmatprep.subr.bf16.mxu0 0
        %5564 = vmatpush2.bf16.msra.mxu0 %v5477
        %5565 = vmatprep.mubr.bf16.mxu0 %v5267
        %5566 = vmatmul.mubr.bf16.gmra.mxu0 %v5266
        %v5567 = vpop.f32.mrf.mxu0
        %v5568 = vadd.f32 %v5339, %v5567
        %v5569 = vpop.f32.mrf.mxu0
        %v5570 = vpop.f32.mrf.mxu0
        %v5571 = vpop.f32.mrf.mxu0
        %5572 = vdwg.mxu0
        %5573 = vmatprep.subr.bf16.mxu0 0
        %5574 = vmatpush1.bf16.msra.mxu0 %v5492
        %5575 = vmatprep.subr.bf16.mxu0 0
        %5576 = vmatpush1.bf16.msra.mxu0 %v5491
        %5577 = vmatprep.subr.bf16.mxu0 0
        %5578 = vmatpush1.bf16.msra.mxu0 %v5490
        %5579 = vmatprep.subr.bf16.mxu0 0
        %5580 = vmatpush1.bf16.msra.mxu0 %v5489
        %5581 = vmatprep.subr.bf16.mxu0 0
        %5582 = vmatpush1.bf16.msra.mxu0 %v5488
        %5583 = vmatprep.subr.bf16.mxu0 0
        %5584 = vmatpush1.bf16.msra.mxu0 %v5487
        %5585 = vmatprep.subr.bf16.mxu0 0
        %5586 = vmatpush1.bf16.msra.mxu0 %v5486
        %5587 = vmatprep.subr.bf16.mxu0 0
        %5588 = vmatpush1.bf16.msra.mxu0 %v5485
        %5589 = vmatprep.subr.bf16.mxu0 0
        %5590 = vmatpush2.bf16.msra.mxu0 %v5500
        %5591 = vmatprep.subr.bf16.mxu0 0
        %5592 = vmatpush2.bf16.msra.mxu0 %v5499
        %5593 = vmatprep.subr.bf16.mxu0 0
        %5594 = vmatpush2.bf16.msra.mxu0 %v5498
        %5595 = vmatprep.subr.bf16.mxu0 0
        %5596 = vmatpush2.bf16.msra.mxu0 %v5497
        %5597 = vmatprep.subr.bf16.mxu0 0
        %5598 = vmatpush2.bf16.msra.mxu0 %v5496
        %5599 = vmatprep.subr.bf16.mxu0 0
        %5600 = vmatpush2.bf16.msra.mxu0 %v5495
        %5601 = vmatprep.subr.bf16.mxu0 0
        %5602 = vmatpush2.bf16.msra.mxu0 %v5494
        %5603 = vmatprep.subr.bf16.mxu0 0
        %5604 = vmatpush2.bf16.msra.mxu0 %v5493
        %5605 = vmatprep.mubr.bf16.mxu0 %v5269
        %5606 = vmatmul.mubr.bf16.gmra.mxu0 %v5268
        %v5607 = vpop.f32.mrf.mxu0
        %v5608 = vadd.f32 %v5568, %v5607
        %v5609 = vpop.f32.mrf.mxu0
        %v5610 = vpop.f32.mrf.mxu0
        %v5611 = vpop.f32.mrf.mxu0
        %5612 = vdwg.mxu0
        %v5613 = vadd.f32 %v4964, %v5608
        %v5614 = vld [vmem:[%s26] sm:$0x1]
        %v5615 = vld [vmem:[%s27] sm:$0x1]
        %5616 = vadd.xlane.f32.xlu0 %v5613
        %v5617 = vpop.xlane.xlu0 %5616
        %v5618 = vmul.f32 %v5617, %v2896
        %v5619 = vsub.f32 %v5613, %v5618
        %v5620 = vmul.f32 %v5619, %v5619
        %5621 = vadd.xlane.f32.xlu0 %v5620
        %v5622 = vpop.xlane.xlu0 %5621
        %v5623 = vmul.f32 %v5622, %v2896
        %v5624 = vadd.f32 %v5623, 1e-05
        %v5625 = vrsqrt.pop %v5624
        %v5626 = vmul.f32 %v5619, %v5625
        %v5628 = vlaneseq
        %v5629 = vshrl.u32 %v5628, 7
        %v5630 = vsub.s32 0, %v5629
        %v5631 = vrot.slane %v5614, %v5630
        %v5633 = vmul.f32 %v5626, %v5631
        %v5635 = vlaneseq
        %v5636 = vshrl.u32 %v5635, 7
        %v5637 = vsub.s32 0, %v5636
        %v5638 = vrot.slane %v5615, %v5637
        %v5640 = vadd.f32 %v5633, %v5638
        %5641 = vst [vmem:[%s849] sm:$0xff] %v5640
        %s5642 = sand.u32 %s648, 1
        %s5643 = scalar_lea.sflag [#allocation3], %s5642
        %s5644 = sand.u32 %s648, 1
        %s5645 = smul.addr %s5644, 8
        %s5646 = scalar_lea.vmem [#allocation2], %s5645
        // Predicated region
        $region133: #{tpu_custom_call.1} parent=131 // pred_check
          %p5647 = pneg %p658
        $region134: #{tpu_custom_call.1} parent=131 // pred_check_branch
          %5649 = sbr.rel (%p5647) target = $region136
        $region135: #{tpu_custom_call.1} parent=131 // pred_region
          %s5651 = ssub.s32 128, 128
          %5652 = vsyncadd %s5643, %s5651
          %s5653 = smul.addr %s42, 128
          %s5654 = scalar_lea.hbm %s28, %s5653
          %s5656 = sshll.u32 %s5646, 4
          %s5657 = int_to_ptr.vmem [resolvable:$true] %s5656
          %5659 = dma.vmem_to_hbm [thread:$0]  %s5657, 128, %s5654, %s5643
        $region136: #{tpu_custom_call.1} parent=131 // pred_fallthru
          _
      $region132: #{tpu_custom_call.1} parent=5 // pred_fallthru
        _
      %p5660 = scmp.le.s32.totalorder 2, %s37
      // Predicated region
      $region137: #{tpu_custom_call.1} parent=5 // pred_check
        %p5661 = pneg %p5660
      $region138: #{tpu_custom_call.1} parent=5 // pred_check_branch
        %5663 = sbr.rel (%p5661) target = $region140
      $region139: #{tpu_custom_call.1} parent=5 // pred_region
        %s5664 = ssub.s32 %s37, 2
        // Predicated region
        $region141: #{tpu_custom_call.1} parent=139 // pred_check
          %p5665 = pneg %p664
        $region142: #{tpu_custom_call.1} parent=139 // pred_check_branch
          %5667 = sbr.rel (%p5665) target = $region144
        $region143: #{tpu_custom_call.1} parent=139 // pred_region
          %s5668 = sand.u32 %s649, 1
          %s5669 = scalar_lea.sflag [#allocation3], %s5668
          %s5670 = sand.u32 %s649, 1
          %s5671 = smul.addr %s5670, 8
          %s5672 = scalar_lea.vmem [#allocation2], %s5671
          %5673 = dma.done %s5669, 128
        $region144: #{tpu_custom_call.1} parent=139 // pred_fallthru
          _
      $region140: #{tpu_custom_call.1} parent=5 // pred_fallthru
        _
    $region6: #{tpu_custom_call.1} parent=1 // loop_footer
      %s41 = sadd.s32 1, %s37
    $region7: #{tpu_custom_call.1} parent=1 // loop_footer_branch
      %36 = sbr.rel target = $region3
    $region8: #{tpu_custom_call.1} parent=1 // loop_exit
      _
    %5674 = vsyncpa [#allocation3], 1
    %s5675 = scalar_lea.sflag [#allocation3], 1
    %5676 = vsyncpa %s5675, 1

</llo_original>
